<compile_context>
chip_gen: v7x
topology: tpu7x:2x2x1
jax: 0.10.0
libtpu: 0.0.40
codegen_flags: <defaults>
</compile_context>

<pallas_src>
import jax
import jax.numpy as jnp
import numpy as np
from jax import lax
from jax.experimental import pallas as pl
from jax.experimental.pallas import tpu as pltpu


def _round_up(x, m):
    return ((x + m - 1) // m) * m


def _sigmoid(x):
    # Single EUP op per gate (tanh); exact identity with the logistic.
    return 0.5 * jnp.tanh(0.5 * x) + 0.5


@jax.jit
def _encoder_lstm(tags_idx, chars_idx, h0, c0, g_tags, g_chars, w_hh_gm):
    """Fused embedding lookup + single-layer LSTM (PyTorch nn.LSTM semantics).

    tags_idx, chars_idx : (S, B) int32 token indices
    h0, c0              : (1, B, H) float32 initial hidden / cell state
    g_tags              : (Tp, 4*Hp)  E_tags @ W_ih[:, :d_tag]^T + (b_ih+b_hh), gate-major padded
    g_chars             : (Ap, 4*Hp)  E_chars @ W_ih[:, d_tag:]^T, gate-major padded
    w_hh_gm             : (Hp, 4*Hp)  gate-major padded W_hh^T
    """
    S, B = tags_idx.shape
    H = h0.shape[-1]
    Hp = w_hh_gm.shape[0]
    G4 = w_hh_gm.shape[1]            # == 4 * Hp
    Bp = _round_up(B, 8)             # sublane alignment for the recurrence
    Tp = g_tags.shape[0]
    Ap = g_chars.shape[0]

    # Only tiny host-side preps remain (int index pads + (B,H)->(Bp,Hp) pads).
    tags_p = jnp.pad(tags_idx.astype(jnp.int32), ((0, 0), (0, Bp - B)))[..., None]
    chars_p = jnp.pad(chars_idx.astype(jnp.int32), ((0, 0), (0, Bp - B)))[..., None]
    h0_p = jnp.pad(h0[0].astype(jnp.float32), ((0, Bp - B), (0, Hp - H)))
    c0_p = jnp.pad(c0[0].astype(jnp.float32), ((0, Bp - B), (0, Hp - H)))

    def kernel(tags_ref, chars_ref, h0_ref, c0_ref, gt_ref, gc_ref, whh_ref,
               enc_ref, hn_ref, cn_ref, gx_ref):
        # ---- Fused embedding lookup + input projection for ALL timesteps:
        #      one-hot (S*Bp, Tp/Ap) @ per-index gate tables (Tp/Ap, 4*Hp) on the MXU.
        tags = tags_ref[...].reshape(S * Bp, 1)       # leading-dim collapse only
        chars = chars_ref[...].reshape(S * Bp, 1)
        oh_t = (lax.broadcasted_iota(jnp.int32, (S * Bp, Tp), 1) == tags
                ).astype(jnp.float32)
        oh_c = (lax.broadcasted_iota(jnp.int32, (S * Bp, Ap), 1) == chars
                ).astype(jnp.float32)
        gx = (jnp.dot(oh_t, gt_ref[...], preferred_element_type=jnp.float32) +
              jnp.dot(oh_c, gc_ref[...], preferred_element_type=jnp.float32))
        gx_ref[...] = gx.reshape(S, Bp, G4)

        # ---- Serial recurrence: one dependent (Bp,Hp)x(Hp,4*Hp) matmul per step.
        def step(t, carry):
            h_prev, c_prev = carry
            gates = gx_ref[t] + jnp.dot(h_prev, whh_ref[...],
                                        preferred_element_type=jnp.float32)
            # Gate slices are lane-aligned (Hp is a multiple of 128, gate-major).
            i_g = _sigmoid(gates[:, 0 * Hp:1 * Hp])
            f_g = _sigmoid(gates[:, 1 * Hp:2 * Hp])
            g_g = jnp.tanh(gates[:, 2 * Hp:3 * Hp])
            o_g = _sigmoid(gates[:, 3 * Hp:4 * Hp])
            c_new = f_g * c_prev + i_g * g_g
            h_new = o_g * jnp.tanh(c_new)
            # Write the un-padded (B, H) slice straight into the output block
            # (no host-side un-pad slice / extra HBM copy afterwards).
            enc_ref[t] = h_new[:B, :H].astype(enc_ref.dtype)
            return h_new, c_new

        h_fin, c_fin = lax.fori_loop(0, S, step, (h0_ref[...], c0_ref[...]),
                                     unroll=(S <= 32))
        hn_ref[...] = h_fin[:B, :H].astype(hn_ref.dtype)
        cn_ref[...] = c_fin[:B, :H].astype(cn_ref.dtype)

    out_shapes = (
        jax.ShapeDtypeStruct((S, B, H), jnp.float32),   # encoded (un-padded)
        jax.ShapeDtypeStruct((B, H), jnp.float32),      # h_n
        jax.ShapeDtypeStruct((B, H), jnp.float32),      # c_n
    )
    grid_spec = pltpu.PrefetchScalarGridSpec(
        num_scalar_prefetch=0,
        grid=(1,),   # single invocation; the recurrence runs inside the kernel
        in_specs=[
            pl.BlockSpec((S, Bp, 1), lambda i: (0, 0, 0)),   # tag indices
            pl.BlockSpec((S, Bp, 1), lambda i: (0, 0, 0)),   # char indices
            pl.BlockSpec((Bp, Hp), lambda i: (0, 0)),        # h0 (padded)
            pl.BlockSpec((Bp, Hp), lambda i: (0, 0)),        # c0 (padded)
            pl.BlockSpec((Tp, G4), lambda i: (0, 0)),        # fused tag gate table
            pl.BlockSpec((Ap, G4), lambda i: (0, 0)),        # fused char gate table
            pl.BlockSpec((Hp, G4), lambda i: (0, 0)),        # W_hh^T (gate-major)
        ],
        out_specs=[
            pl.BlockSpec((S, B, H), lambda i: (0, 0, 0)),    # encoded
            pl.BlockSpec((B, H), lambda i: (0, 0)),          # h_n
            pl.BlockSpec((B, H), lambda i: (0, 0)),          # c_n
        ],
        scratch_shapes=[
            pltpu.VMEM((S, Bp, G4), jnp.float32),            # per-step gate preacts
        ],
    )
    enc, hn, cn = pl.pallas_call(
        kernel,
        out_shape=out_shapes,
        grid_spec=grid_spec,
        compiler_params=pltpu.CompilerParams(
            dimension_semantics=("arbitrary",)),   # strictly serial recurrence
    )(tags_p, chars_p, h0_p, c0_p, g_tags, g_chars, w_hh_gm)
    return enc, hn[None], cn[None]


class Encoder:
    def __init__(self, tagset_size, alphabet_size,
                 in_abet_emb_dim=30, in_tags_emb_dim=20, key=None):
        self.tagset_size = tagset_size
        self.alphabet_size = alphabet_size
        self.in_abet_emb_dim = in_abet_emb_dim
        self.in_tags_emb_dim = in_tags_emb_dim
        self.hidden_size = in_abet_emb_dim + in_tags_emb_dim

        key = jax.random.PRNGKey(42) if key is None else key
        k1, k2, k3, k4, k5, k6 = jax.random.split(key, 6)
        H = self.hidden_size
        # Embedding tables (torch default: N(0, 1))
        self.lem_embedding = jax.random.normal(
            k1, (alphabet_size, in_abet_emb_dim), jnp.float32)
        self.tags_embedding = jax.random.normal(
            k2, (tagset_size, in_tags_emb_dim), jnp.float32)
        # LSTM params (torch default: U(-1/sqrt(H), 1/sqrt(H))), gate order i,f,g,o
        s = 1.0 / jnp.sqrt(jnp.float32(H))
        self.w_ih = jax.random.uniform(k3, (4 * H, H), jnp.float32, -s, s)
        self.w_hh = jax.random.uniform(k4, (4 * H, H), jnp.float32, -s, s)
        self.b_ih = jax.random.uniform(k5, (4 * H,), jnp.float32, -s, s)
        self.b_hh = jax.random.uniform(k6, (4 * H,), jnp.float32, -s, s)

        # ---- One-time canonical repack (hoisted out of forward). ------------
        Hp = _round_up(H, 128)
        self.Hp = Hp
        # Gate-major W_ih^T: (H_in, 4*Hp); gate g occupies lanes [g*Hp, g*Hp+H).
        w_ih_gm = jnp.transpose(
            jnp.pad(self.w_ih.reshape(4, H, H), ((0, 0), (0, Hp - H), (0, 0))),
            (2, 0, 1)).reshape(H, 4 * Hp)
        bias_gm = jnp.pad((self.b_ih + self.b_hh).reshape(4, H),
                          ((0, 0), (0, Hp - H))).reshape(4 * Hp)
        hi = jax.lax.Precision.HIGHEST
        # Fused per-index gate tables: gx[t,b] = g_tags[tags[t,b]] + g_chars[chars[t,b]]
        # (torch.cat order: tags embedding first, then chars embedding).
        g_tags = jnp.dot(self.tags_embedding, w_ih_gm[:in_tags_emb_dim],
                         precision=hi) + bias_gm
        g_chars = jnp.dot(self.lem_embedding,
                          w_ih_gm[in_tags_emb_dim:in_tags_emb_dim + in_abet_emb_dim],
                          precision=hi)
        Tp = _round_up(tagset_size, 8)
        Ap = _round_up(alphabet_size, 8)
        self.g_tags = jnp.pad(g_tags, ((0, Tp - tagset_size), (0, 0)))
        self.g_chars = jnp.pad(g_chars, ((0, Ap - alphabet_size), (0, 0)))
        # Gate-major W_hh^T: (Hp, 4*Hp), zero-padded so padded lanes stay exactly 0.
        self.w_hh_gm = jnp.transpose(
            jnp.pad(self.w_hh.reshape(4, H, H), ((0, 0), (0, Hp - H), (0, Hp - H))),
            (2, 0, 1)).reshape(Hp, 4 * Hp)

    def init_hidden(self, batch_size, device=None):
        H = self.hidden_size
        return (jnp.zeros((1, batch_size, H), jnp.float32),
                jnp.zeros((1, batch_size, H), jnp.float32))

    def forward(self, tags_sequence, lem_chars_sequence, hidden,
                batch_size, sequence_length):
        assert tags_sequence.shape[0] == lem_chars_sequence.shape[0] == sequence_length
        assert tags_sequence.shape[1] == lem_chars_sequence.shape[1] == batch_size
        h0, c0 = hidden
        encoded, h_n, c_n = _encoder_lstm(
            tags_sequence, lem_chars_sequence, h0, c0,
            self.g_tags, self.g_chars, self.w_hh_gm)
        assert encoded.shape[0] == sequence_length and encoded.shape[1] == batch_size
        return encoded, (h_n, c_n)


def _reference_forward(enc, tags, chars, hidden):
    """Pure numpy float64 reference (PyTorch LSTM semantics)."""
    E_t = np.asarray(enc.tags_embedding, np.float64)
    E_c = np.asarray(enc.lem_embedding, np.float64)
    W_ih = np.asarray(enc.w_ih, np.float64)
    W_hh = np.asarray(enc.w_hh, np.float64)
    b = np.asarray(enc.b_ih, np.float64) + np.asarray(enc.b_hh, np.float64)
    tags = np.asarray(tags)
    chars = np.asarray(chars)
    S, B = tags.shape
    H = enc.hidden_size
    x = np.concatenate([E_t[tags], E_c[chars]], axis=2)          # (S, B, H_in)
    h = np.asarray(hidden[0][0], np.float64)
    c = np.asarray(hidden[1][0], np.float64)

    def sig(z):
        return 1.0 / (1.0 + np.exp(-z))

    outs = []
    for t in range(S):
        g = x[t] @ W_ih.T + b + h @ W_hh.T
        i = sig(g[:, 0 * H:1 * H])
        f = sig(g[:, 1 * H:2 * H])
        gg = np.tanh(g[:, 2 * H:3 * H])
        o = sig(g[:, 3 * H:4 * H])
        c = f * c + i * gg
        h = o * np.tanh(c)
        outs.append(h)
    return np.stack(outs), h, c


if __name__ == "__main__":
    tagset_size = 10
    alphabet_size = 12
    batch_size = 2
    sequence_length = 8

    enc = Encoder(tagset_size, alphabet_size, key=jax.random.PRNGKey(1))

    key = jax.random.PRNGKey(0)
    k_tags, k_chars = jax.random.split(key)
    tags_sequence = jax.random.randint(
        k_tags, (sequence_length, batch_size), 0, tagset_size, jnp.int32)
    lem_chars_sequence = jax.random.randint(
        k_chars, (sequence_length, batch_size), 0, alphabet_size, jnp.int32)

    hidden = enc.init_hidden(batch_size)
    encoded, (h_n, c_n) = enc.forward(
        tags_sequence, lem_chars_sequence, hidden, batch_size, sequence_length)

    jax.block_until_ready((encoded, h_n, c_n))
    assert encoded.shape == (sequence_length, batch_size, enc.hidden_size)
    assert h_n.shape == (1, batch_size, enc.hidden_size)
    assert c_n.shape == (1, batch_size, enc.hidden_size)
    assert bool(jnp.all(jnp.isfinite(encoded)))

    # Structural correctness check against a float64 numpy reference.
    ref_enc, ref_h, ref_c = _reference_forward(
        enc, tags_sequence, lem_chars_sequence, hidden)
    assert np.allclose(np.asarray(encoded), ref_enc, atol=2e-2, rtol=2e-2)
    assert np.allclose(np.asarray(h_n[0]), ref_h, atol=2e-2, rtol=2e-2)
    assert np.allclose(np.asarray(c_n[0]), ref_c, atol=2e-2, rtol=2e-2)

    print("KERNEL_OK")
</pallas_src>

<mosaic_0001>
module attributes {stable_mosaic.version = 11 : i64} {
  func.func @kernel(%arg0: i32, %arg1: memref<8x8x1xi32, #tpu.memory_space<vmem>>, %arg2: memref<8x8x1xi32, #tpu.memory_space<vmem>>, %arg3: memref<8x128xf32, #tpu.memory_space<vmem>>, %arg4: memref<8x128xf32, #tpu.memory_space<vmem>>, %arg5: memref<16x512xf32, #tpu.memory_space<vmem>>, %arg6: memref<16x512xf32, #tpu.memory_space<vmem>>, %arg7: memref<128x512xf32, #tpu.memory_space<vmem>>, %arg8: memref<8x2x50xf32, #tpu.memory_space<vmem>>, %arg9: memref<2x50xf32, #tpu.memory_space<vmem>>, %arg10: memref<2x50xf32, #tpu.memory_space<vmem>>, %arg11: memref<8x8x512xf32, #tpu.memory_space<vmem>>) attributes {dimension_semantics = [#tpu.dimension_semantics<arbitrary>], iteration_bounds = array<i64: 1>, scalar_prefetch = 0 : i64, scratch_operands = 1 : i64, tpu.core_type = #tpu.core_type<tc>, window_params = [{pipeline_mode = #tpu.pipeline_mode<synchronous>, transform_indices = @transform_0, window_bounds = array<i64: 8, 8, 1>}, {pipeline_mode = #tpu.pipeline_mode<synchronous>, transform_indices = @transform_1, window_bounds = array<i64: 8, 8, 1>}, {pipeline_mode = #tpu.pipeline_mode<synchronous>, transform_indices = @transform_2, window_bounds = array<i64: 8, 128>}, {pipeline_mode = #tpu.pipeline_mode<synchronous>, transform_indices = @transform_3, window_bounds = array<i64: 8, 128>}, {pipeline_mode = #tpu.pipeline_mode<synchronous>, transform_indices = @transform_4, window_bounds = array<i64: 16, 512>}, {pipeline_mode = #tpu.pipeline_mode<synchronous>, transform_indices = @transform_5, window_bounds = array<i64: 16, 512>}, {pipeline_mode = #tpu.pipeline_mode<synchronous>, transform_indices = @transform_6, window_bounds = array<i64: 128, 512>}, {pipeline_mode = #tpu.pipeline_mode<synchronous>, transform_indices = @transform_7, window_bounds = array<i64: 8, 2, 50>}, {pipeline_mode = #tpu.pipeline_mode<synchronous>, transform_indices = @transform_8, window_bounds = array<i64: 2, 50>}, {pipeline_mode = #tpu.pipeline_mode<synchronous>, transform_indices = @transform_9, window_bounds = array<i64: 2, 50>}]} {
    %c0 = arith.constant 0 : index
    %c0_0 = arith.constant 0 : index
    %c0_1 = arith.constant 0 : index
    %0 = vector.load %arg1[%c0, %c0_0, %c0_1] : memref<8x8x1xi32, #tpu.memory_space<vmem>>, vector<8x8x1xi32>
    %1 = vector.shape_cast %0 : vector<8x8x1xi32> to vector<64x1xi32>
    %c0_2 = arith.constant 0 : index
    %c0_3 = arith.constant 0 : index
    %c0_4 = arith.constant 0 : index
    %2 = vector.load %arg2[%c0_2, %c0_3, %c0_4] : memref<8x8x1xi32, #tpu.memory_space<vmem>>, vector<8x8x1xi32>
    %3 = vector.shape_cast %2 : vector<8x8x1xi32> to vector<64x1xi32>
    %4 = tpu.iota {dimensions = array<i32: 1>} : vector<64x16xi32>
    %5 = vector.broadcast %1 : vector<64x1xi32> to vector<64x16xi32>
    %6 = arith.cmpi eq, %4, %5 : vector<64x16xi32>
    %7 = arith.extui %6 : vector<64x16xi1> to vector<64x16xi32>
    %8 = arith.sitofp %7 : vector<64x16xi32> to vector<64x16xf32>
    %9 = tpu.iota {dimensions = array<i32: 1>} : vector<64x16xi32>
    %10 = vector.broadcast %3 : vector<64x1xi32> to vector<64x16xi32>
    %11 = arith.cmpi eq, %9, %10 : vector<64x16xi32>
    %12 = arith.extui %11 : vector<64x16xi1> to vector<64x16xi32>
    %13 = arith.sitofp %12 : vector<64x16xi32> to vector<64x16xf32>
    %c0_5 = arith.constant 0 : index
    %c0_6 = arith.constant 0 : index
    %14 = vector.load %arg5[%c0_5, %c0_6] : memref<16x512xf32, #tpu.memory_space<vmem>>, vector<16x512xf32>
    %cst = arith.constant dense<0.000000e+00> : vector<64x512xf32>
    %15 = tpu.matmul %8, %14, %cst {dimension_numbers = #tpu.dot_dimension_numbers<[1], [0], [0], [1], [0, 0, 1, 1], [], []>} : vector<64x16xf32>, vector<16x512xf32>, vector<64x512xf32> -> vector<64x512xf32>
    %c0_7 = arith.constant 0 : index
    %c0_8 = arith.constant 0 : index
    %16 = vector.load %arg6[%c0_7, %c0_8] : memref<16x512xf32, #tpu.memory_space<vmem>>, vector<16x512xf32>
    %cst_9 = arith.constant dense<0.000000e+00> : vector<64x512xf32>
    %17 = tpu.matmul %13, %16, %cst_9 {dimension_numbers = #tpu.dot_dimension_numbers<[1], [0], [0], [1], [0, 0, 1, 1], [], []>} : vector<64x16xf32>, vector<16x512xf32>, vector<64x512xf32> -> vector<64x512xf32>
    %18 = arith.addf %15, %17 : vector<64x512xf32>
    %19 = vector.shape_cast %18 : vector<64x512xf32> to vector<8x8x512xf32>
    %c0_10 = arith.constant 0 : index
    %c0_11 = arith.constant 0 : index
    %c0_12 = arith.constant 0 : index
    %20 = vector.load %arg11[%c0_10, %c0_11, %c0_12] : memref<8x8x512xf32, #tpu.memory_space<vmem>>, vector<8x8x512xf32>
    tpu.vector_store %arg11[%c0_10, %c0_11, %c0_12], %19 {strides = array<i32>} : memref<8x8x512xf32, #tpu.memory_space<vmem>>, vector<8x8x512xf32>,
    %c0_13 = arith.constant 0 : index
    %c0_14 = arith.constant 0 : index
    %21 = vector.load %arg3[%c0_13, %c0_14] : memref<8x128xf32, #tpu.memory_space<vmem>>, vector<8x128xf32>
    %c0_15 = arith.constant 0 : index
    %c0_16 = arith.constant 0 : index
    %22 = vector.load %arg4[%c0_15, %c0_16] : memref<8x128xf32, #tpu.memory_space<vmem>>, vector<8x128xf32>
    %c0_i32 = arith.constant 0 : i32
    %23 = arith.index_cast %c0_i32 : i32 to index
    %c0_17 = arith.constant 0 : index
    %c0_18 = arith.constant 0 : index
    %24 = vector.load %arg11[%23, %c0_17, %c0_18] : memref<8x8x512xf32, #tpu.memory_space<vmem>>, vector<1x8x512xf32>
    %25 = vector.shape_cast %24 : vector<1x8x512xf32> to vector<8x512xf32>
    %c0_19 = arith.constant 0 : index
    %c0_20 = arith.constant 0 : index
    %26 = vector.load %arg7[%c0_19, %c0_20] : memref<128x512xf32, #tpu.memory_space<vmem>>, vector<128x512xf32>
    %cst_21 = arith.constant dense<0.000000e+00> : vector<8x512xf32>
    %27 = tpu.matmul %21, %26, %cst_21 {dimension_numbers = #tpu.dot_dimension_numbers<[1], [0], [0], [1], [0, 0, 1, 1], [], []>} : vector<8x128xf32>, vector<128x512xf32>, vector<8x512xf32> -> vector<8x512xf32>
    %28 = arith.addf %25, %27 : vector<8x512xf32>
    %29 = vector.extract_strided_slice %28 {offsets = [0, 0], sizes = [8, 128], strides = [1, 1]} : vector<8x512xf32> to vector<8x128xf32>
    %cst_22 = arith.constant 5.000000e-01 : f32
    %30 = vector.broadcast %cst_22 : f32 to vector<8x128xf32>
    %31 = arith.mulf %30, %29 : vector<8x128xf32>
    %32 = math.tanh %31 : vector<8x128xf32>
    %cst_23 = arith.constant 5.000000e-01 : f32
    %33 = vector.broadcast %cst_23 : f32 to vector<8x128xf32>
    %34 = arith.mulf %33, %32 : vector<8x128xf32>
    %cst_24 = arith.constant 5.000000e-01 : f32
    %35 = vector.broadcast %cst_24 : f32 to vector<8x128xf32>
    %36 = arith.addf %34, %35 : vector<8x128xf32>
    %37 = vector.extract_strided_slice %28 {offsets = [0, 128], sizes = [8, 128], strides = [1, 1]} : vector<8x512xf32> to vector<8x128xf32>
    %cst_25 = arith.constant 5.000000e-01 : f32
    %38 = vector.broadcast %cst_25 : f32 to vector<8x128xf32>
    %39 = arith.mulf %38, %37 : vector<8x128xf32>
    %40 = math.tanh %39 : vector<8x128xf32>
    %cst_26 = arith.constant 5.000000e-01 : f32
    %41 = vector.broadcast %cst_26 : f32 to vector<8x128xf32>
    %42 = arith.mulf %41, %40 : vector<8x128xf32>
    %cst_27 = arith.constant 5.000000e-01 : f32
    %43 = vector.broadcast %cst_27 : f32 to vector<8x128xf32>
    %44 = arith.addf %42, %43 : vector<8x128xf32>
    %45 = vector.extract_strided_slice %28 {offsets = [0, 256], sizes = [8, 128], strides = [1, 1]} : vector<8x512xf32> to vector<8x128xf32>
    %46 = math.tanh %45 : vector<8x128xf32>
    %47 = vector.extract_strided_slice %28 {offsets = [0, 384], sizes = [8, 128], strides = [1, 1]} : vector<8x512xf32> to vector<8x128xf32>
    %cst_28 = arith.constant 5.000000e-01 : f32
    %48 = vector.broadcast %cst_28 : f32 to vector<8x128xf32>
    %49 = arith.mulf %48, %47 : vector<8x128xf32>
    %50 = math.tanh %49 : vector<8x128xf32>
    %cst_29 = arith.constant 5.000000e-01 : f32
    %51 = vector.broadcast %cst_29 : f32 to vector<8x128xf32>
    %52 = arith.mulf %51, %50 : vector<8x128xf32>
    %cst_30 = arith.constant 5.000000e-01 : f32
    %53 = vector.broadcast %cst_30 : f32 to vector<8x128xf32>
    %54 = arith.addf %52, %53 : vector<8x128xf32>
    %55 = arith.mulf %44, %22 : vector<8x128xf32>
    %56 = arith.mulf %36, %46 : vector<8x128xf32>
    %57 = arith.addf %55, %56 : vector<8x128xf32>
    %58 = math.tanh %57 : vector<8x128xf32>
    %59 = arith.mulf %54, %58 : vector<8x128xf32>
    %60 = vector.extract_strided_slice %59 {offsets = [0, 0], sizes = [2, 50], strides = [1, 1]} : vector<8x128xf32> to vector<2x50xf32>
    %61 = arith.index_cast %c0_i32 : i32 to index
    %c0_31 = arith.constant 0 : index
    %c0_32 = arith.constant 0 : index
    %62 = vector.load %arg8[%61, %c0_31, %c0_32] : memref<8x2x50xf32, #tpu.memory_space<vmem>>, vector<1x2x50xf32>
    %63 = vector.shape_cast %62 : vector<1x2x50xf32> to vector<2x50xf32>
    %64 = vector.shape_cast %60 : vector<2x50xf32> to vector<1x2x50xf32>
    tpu.vector_store %arg8[%61, %c0_31, %c0_32], %64 {strides = array<i32>} : memref<8x2x50xf32, #tpu.memory_space<vmem>>, vector<1x2x50xf32>,
    %c1_i32 = arith.constant 1 : i32
    %65 = arith.index_cast %c1_i32 : i32 to index
    %c0_33 = arith.constant 0 : index
    %c0_34 = arith.constant 0 : index
    %66 = vector.load %arg11[%65, %c0_33, %c0_34] : memref<8x8x512xf32, #tpu.memory_space<vmem>>, vector<1x8x512xf32>
    %67 = vector.shape_cast %66 : vector<1x8x512xf32> to vector<8x512xf32>
    %c0_35 = arith.constant 0 : index
    %c0_36 = arith.constant 0 : index
    %68 = vector.load %arg7[%c0_35, %c0_36] : memref<128x512xf32, #tpu.memory_space<vmem>>, vector<128x512xf32>
    %cst_37 = arith.constant dense<0.000000e+00> : vector<8x512xf32>
    %69 = tpu.matmul %59, %68, %cst_37 {dimension_numbers = #tpu.dot_dimension_numbers<[1], [0], [0], [1], [0, 0, 1, 1], [], []>} : vector<8x128xf32>, vector<128x512xf32>, vector<8x512xf32> -> vector<8x512xf32>
    %70 = arith.addf %67, %69 : vector<8x512xf32>
    %71 = vector.extract_strided_slice %70 {offsets = [0, 0], sizes = [8, 128], strides = [1, 1]} : vector<8x512xf32> to vector<8x128xf32>
    %cst_38 = arith.constant 5.000000e-01 : f32
    %72 = vector.broadcast %cst_38 : f32 to vector<8x128xf32>
    %73 = arith.mulf %72, %71 : vector<8x128xf32>
    %74 = math.tanh %73 : vector<8x128xf32>
    %cst_39 = arith.constant 5.000000e-01 : f32
    %75 = vector.broadcast %cst_39 : f32 to vector<8x128xf32>
    %76 = arith.mulf %75, %74 : vector<8x128xf32>
    %cst_40 = arith.constant 5.000000e-01 : f32
    %77 = vector.broadcast %cst_40 : f32 to vector<8x128xf32>
    %78 = arith.addf %76, %77 : vector<8x128xf32>
    %79 = vector.extract_strided_slice %70 {offsets = [0, 128], sizes = [8, 128], strides = [1, 1]} : vector<8x512xf32> to vector<8x128xf32>
    %cst_41 = arith.constant 5.000000e-01 : f32
    %80 = vector.broadcast %cst_41 : f32 to vector<8x128xf32>
    %81 = arith.mulf %80, %79 : vector<8x128xf32>
    %82 = math.tanh %81 : vector<8x128xf32>
    %cst_42 = arith.constant 5.000000e-01 : f32
    %83 = vector.broadcast %cst_42 : f32 to vector<8x128xf32>
    %84 = arith.mulf %83, %82 : vector<8x128xf32>
    %cst_43 = arith.constant 5.000000e-01 : f32
    %85 = vector.broadcast %cst_43 : f32 to vector<8x128xf32>
    %86 = arith.addf %84, %85 : vector<8x128xf32>
    %87 = vector.extract_strided_slice %70 {offsets = [0, 256], sizes = [8, 128], strides = [1, 1]} : vector<8x512xf32> to vector<8x128xf32>
    %88 = math.tanh %87 : vector<8x128xf32>
    %89 = vector.extract_strided_slice %70 {offsets = [0, 384], sizes = [8, 128], strides = [1, 1]} : vector<8x512xf32> to vector<8x128xf32>
    %cst_44 = arith.constant 5.000000e-01 : f32
    %90 = vector.broadcast %cst_44 : f32 to vector<8x128xf32>
    %91 = arith.mulf %90, %89 : vector<8x128xf32>
    %92 = math.tanh %91 : vector<8x128xf32>
    %cst_45 = arith.constant 5.000000e-01 : f32
    %93 = vector.broadcast %cst_45 : f32 to vector<8x128xf32>
    %94 = arith.mulf %93, %92 : vector<8x128xf32>
    %cst_46 = arith.constant 5.000000e-01 : f32
    %95 = vector.broadcast %cst_46 : f32 to vector<8x128xf32>
    %96 = arith.addf %94, %95 : vector<8x128xf32>
    %97 = arith.mulf %86, %57 : vector<8x128xf32>
    %98 = arith.mulf %78, %88 : vector<8x128xf32>
    %99 = arith.addf %97, %98 : vector<8x128xf32>
    %100 = math.tanh %99 : vector<8x128xf32>
    %101 = arith.mulf %96, %100 : vector<8x128xf32>
    %102 = vector.extract_strided_slice %101 {offsets = [0, 0], sizes = [2, 50], strides = [1, 1]} : vector<8x128xf32> to vector<2x50xf32>
    %103 = arith.index_cast %c1_i32 : i32 to index
    %c0_47 = arith.constant 0 : index
    %c0_48 = arith.constant 0 : index
    %104 = vector.load %arg8[%103, %c0_47, %c0_48] : memref<8x2x50xf32, #tpu.memory_space<vmem>>, vector<1x2x50xf32>
    %105 = vector.shape_cast %104 : vector<1x2x50xf32> to vector<2x50xf32>
    %106 = vector.shape_cast %102 : vector<2x50xf32> to vector<1x2x50xf32>
    tpu.vector_store %arg8[%103, %c0_47, %c0_48], %106 {strides = array<i32>} : memref<8x2x50xf32, #tpu.memory_space<vmem>>, vector<1x2x50xf32>,
    %c2_i32 = arith.constant 2 : i32
    %107 = arith.index_cast %c2_i32 : i32 to index
    %c0_49 = arith.constant 0 : index
    %c0_50 = arith.constant 0 : index
    %108 = vector.load %arg11[%107, %c0_49, %c0_50] : memref<8x8x512xf32, #tpu.memory_space<vmem>>, vector<1x8x512xf32>
    %109 = vector.shape_cast %108 : vector<1x8x512xf32> to vector<8x512xf32>
    %c0_51 = arith.constant 0 : index
    %c0_52 = arith.constant 0 : index
    %110 = vector.load %arg7[%c0_51, %c0_52] : memref<128x512xf32, #tpu.memory_space<vmem>>, vector<128x512xf32>
    %cst_53 = arith.constant dense<0.000000e+00> : vector<8x512xf32>
    %111 = tpu.matmul %101, %110, %cst_53 {dimension_numbers = #tpu.dot_dimension_numbers<[1], [0], [0], [1], [0, 0, 1, 1], [], []>} : vector<8x128xf32>, vector<128x512xf32>, vector<8x512xf32> -> vector<8x512xf32>
    %112 = arith.addf %109, %111 : vector<8x512xf32>
    %113 = vector.extract_strided_slice %112 {offsets = [0, 0], sizes = [8, 128], strides = [1, 1]} : vector<8x512xf32> to vector<8x128xf32>
    %cst_54 = arith.constant 5.000000e-01 : f32
    %114 = vector.broadcast %cst_54 : f32 to vector<8x128xf32>
    %115 = arith.mulf %114, %113 : vector<8x128xf32>
    %116 = math.tanh %115 : vector<8x128xf32>
    %cst_55 = arith.constant 5.000000e-01 : f32
    %117 = vector.broadcast %cst_55 : f32 to vector<8x128xf32>
    %118 = arith.mulf %117, %116 : vector<8x128xf32>
    %cst_56 = arith.constant 5.000000e-01 : f32
    %119 = vector.broadcast %cst_56 : f32 to vector<8x128xf32>
    %120 = arith.addf %118, %119 : vector<8x128xf32>
    %121 = vector.extract_strided_slice %112 {offsets = [0, 128], sizes = [8, 128], strides = [1, 1]} : vector<8x512xf32> to vector<8x128xf32>
    %cst_57 = arith.constant 5.000000e-01 : f32
    %122 = vector.broadcast %cst_57 : f32 to vector<8x128xf32>
    %123 = arith.mulf %122, %121 : vector<8x128xf32>
    %124 = math.tanh %123 : vector<8x128xf32>
    %cst_58 = arith.constant 5.000000e-01 : f32
    %125 = vector.broadcast %cst_58 : f32 to vector<8x128xf32>
    %126 = arith.mulf %125, %124 : vector<8x128xf32>
    %cst_59 = arith.constant 5.000000e-01 : f32
    %127 = vector.broadcast %cst_59 : f32 to vector<8x128xf32>
    %128 = arith.addf %126, %127 : vector<8x128xf32>
    %129 = vector.extract_strided_slice %112 {offsets = [0, 256], sizes = [8, 128], strides = [1, 1]} : vector<8x512xf32> to vector<8x128xf32>
    %130 = math.tanh %129 : vector<8x128xf32>
    %131 = vector.extract_strided_slice %112 {offsets = [0, 384], sizes = [8, 128], strides = [1, 1]} : vector<8x512xf32> to vector<8x128xf32>
    %cst_60 = arith.constant 5.000000e-01 : f32
    %132 = vector.broadcast %cst_60 : f32 to vector<8x128xf32>
    %133 = arith.mulf %132, %131 : vector<8x128xf32>
    %134 = math.tanh %133 : vector<8x128xf32>
    %cst_61 = arith.constant 5.000000e-01 : f32
    %135 = vector.broadcast %cst_61 : f32 to vector<8x128xf32>
    %136 = arith.mulf %135, %134 : vector<8x128xf32>
    %cst_62 = arith.constant 5.000000e-01 : f32
    %137 = vector.broadcast %cst_62 : f32 to vector<8x128xf32>
    %138 = arith.addf %136, %137 : vector<8x128xf32>
    %139 = arith.mulf %128, %99 : vector<8x128xf32>
    %140 = arith.mulf %120, %130 : vector<8x128xf32>
    %141 = arith.addf %139, %140 : vector<8x128xf32>
    %142 = math.tanh %141 : vector<8x128xf32>
    %143 = arith.mulf %138, %142 : vector<8x128xf32>
    %144 = vector.extract_strided_slice %143 {offsets = [0, 0], sizes = [2, 50], strides = [1, 1]} : vector<8x128xf32> to vector<2x50xf32>
    %145 = arith.index_cast %c2_i32 : i32 to index
    %c0_63 = arith.constant 0 : index
    %c0_64 = arith.constant 0 : index
    %146 = vector.load %arg8[%145, %c0_63, %c0_64] : memref<8x2x50xf32, #tpu.memory_space<vmem>>, vector<1x2x50xf32>
    %147 = vector.shape_cast %146 : vector<1x2x50xf32> to vector<2x50xf32>
    %148 = vector.shape_cast %144 : vector<2x50xf32> to vector<1x2x50xf32>
    tpu.vector_store %arg8[%145, %c0_63, %c0_64], %148 {strides = array<i32>} : memref<8x2x50xf32, #tpu.memory_space<vmem>>, vector<1x2x50xf32>,
    %c3_i32 = arith.constant 3 : i32
    %149 = arith.index_cast %c3_i32 : i32 to index
    %c0_65 = arith.constant 0 : index
    %c0_66 = arith.constant 0 : index
    %150 = vector.load %arg11[%149, %c0_65, %c0_66] : memref<8x8x512xf32, #tpu.memory_space<vmem>>, vector<1x8x512xf32>
    %151 = vector.shape_cast %150 : vector<1x8x512xf32> to vector<8x512xf32>
    %c0_67 = arith.constant 0 : index
    %c0_68 = arith.constant 0 : index
    %152 = vector.load %arg7[%c0_67, %c0_68] : memref<128x512xf32, #tpu.memory_space<vmem>>, vector<128x512xf32>
    %cst_69 = arith.constant dense<0.000000e+00> : vector<8x512xf32>
    %153 = tpu.matmul %143, %152, %cst_69 {dimension_numbers = #tpu.dot_dimension_numbers<[1], [0], [0], [1], [0, 0, 1, 1], [], []>} : vector<8x128xf32>, vector<128x512xf32>, vector<8x512xf32> -> vector<8x512xf32>
    %154 = arith.addf %151, %153 : vector<8x512xf32>
    %155 = vector.extract_strided_slice %154 {offsets = [0, 0], sizes = [8, 128], strides = [1, 1]} : vector<8x512xf32> to vector<8x128xf32>
    %cst_70 = arith.constant 5.000000e-01 : f32
    %156 = vector.broadcast %cst_70 : f32 to vector<8x128xf32>
    %157 = arith.mulf %156, %155 : vector<8x128xf32>
    %158 = math.tanh %157 : vector<8x128xf32>
    %cst_71 = arith.constant 5.000000e-01 : f32
    %159 = vector.broadcast %cst_71 : f32 to vector<8x128xf32>
    %160 = arith.mulf %159, %158 : vector<8x128xf32>
    %cst_72 = arith.constant 5.000000e-01 : f32
    %161 = vector.broadcast %cst_72 : f32 to vector<8x128xf32>
    %162 = arith.addf %160, %161 : vector<8x128xf32>
    %163 = vector.extract_strided_slice %154 {offsets = [0, 128], sizes = [8, 128], strides = [1, 1]} : vector<8x512xf32> to vector<8x128xf32>
    %cst_73 = arith.constant 5.000000e-01 : f32
    %164 = vector.broadcast %cst_73 : f32 to vector<8x128xf32>
    %165 = arith.mulf %164, %163 : vector<8x128xf32>
    %166 = math.tanh %165 : vector<8x128xf32>
    %cst_74 = arith.constant 5.000000e-01 : f32
    %167 = vector.broadcast %cst_74 : f32 to vector<8x128xf32>
    %168 = arith.mulf %167, %166 : vector<8x128xf32>
    %cst_75 = arith.constant 5.000000e-01 : f32
    %169 = vector.broadcast %cst_75 : f32 to vector<8x128xf32>
    %170 = arith.addf %168, %169 : vector<8x128xf32>
    %171 = vector.extract_strided_slice %154 {offsets = [0, 256], sizes = [8, 128], strides = [1, 1]} : vector<8x512xf32> to vector<8x128xf32>
    %172 = math.tanh %171 : vector<8x128xf32>
    %173 = vector.extract_strided_slice %154 {offsets = [0, 384], sizes = [8, 128], strides = [1, 1]} : vector<8x512xf32> to vector<8x128xf32>
    %cst_76 = arith.constant 5.000000e-01 : f32
    %174 = vector.broadcast %cst_76 : f32 to vector<8x128xf32>
    %175 = arith.mulf %174, %173 : vector<8x128xf32>
    %176 = math.tanh %175 : vector<8x128xf32>
    %cst_77 = arith.constant 5.000000e-01 : f32
    %177 = vector.broadcast %cst_77 : f32 to vector<8x128xf32>
    %178 = arith.mulf %177, %176 : vector<8x128xf32>
    %cst_78 = arith.constant 5.000000e-01 : f32
    %179 = vector.broadcast %cst_78 : f32 to vector<8x128xf32>
    %180 = arith.addf %178, %179 : vector<8x128xf32>
    %181 = arith.mulf %170, %141 : vector<8x128xf32>
    %182 = arith.mulf %162, %172 : vector<8x128xf32>
    %183 = arith.addf %181, %182 : vector<8x128xf32>
    %184 = math.tanh %183 : vector<8x128xf32>
    %185 = arith.mulf %180, %184 : vector<8x128xf32>
    %186 = vector.extract_strided_slice %185 {offsets = [0, 0], sizes = [2, 50], strides = [1, 1]} : vector<8x128xf32> to vector<2x50xf32>
    %187 = arith.index_cast %c3_i32 : i32 to index
    %c0_79 = arith.constant 0 : index
    %c0_80 = arith.constant 0 : index
    %188 = vector.load %arg8[%187, %c0_79, %c0_80] : memref<8x2x50xf32, #tpu.memory_space<vmem>>, vector<1x2x50xf32>
    %189 = vector.shape_cast %188 : vector<1x2x50xf32> to vector<2x50xf32>
    %190 = vector.shape_cast %186 : vector<2x50xf32> to vector<1x2x50xf32>
    tpu.vector_store %arg8[%187, %c0_79, %c0_80], %190 {strides = array<i32>} : memref<8x2x50xf32, #tpu.memory_space<vmem>>, vector<1x2x50xf32>,
    %c4_i32 = arith.constant 4 : i32
    %191 = arith.index_cast %c4_i32 : i32 to index
    %c0_81 = arith.constant 0 : index
    %c0_82 = arith.constant 0 : index
    %192 = vector.load %arg11[%191, %c0_81, %c0_82] : memref<8x8x512xf32, #tpu.memory_space<vmem>>, vector<1x8x512xf32>
    %193 = vector.shape_cast %192 : vector<1x8x512xf32> to vector<8x512xf32>
    %c0_83 = arith.constant 0 : index
    %c0_84 = arith.constant 0 : index
    %194 = vector.load %arg7[%c0_83, %c0_84] : memref<128x512xf32, #tpu.memory_space<vmem>>, vector<128x512xf32>
    %cst_85 = arith.constant dense<0.000000e+00> : vector<8x512xf32>
    %195 = tpu.matmul %185, %194, %cst_85 {dimension_numbers = #tpu.dot_dimension_numbers<[1], [0], [0], [1], [0, 0, 1, 1], [], []>} : vector<8x128xf32>, vector<128x512xf32>, vector<8x512xf32> -> vector<8x512xf32>
    %196 = arith.addf %193, %195 : vector<8x512xf32>
    %197 = vector.extract_strided_slice %196 {offsets = [0, 0], sizes = [8, 128], strides = [1, 1]} : vector<8x512xf32> to vector<8x128xf32>
    %cst_86 = arith.constant 5.000000e-01 : f32
    %198 = vector.broadcast %cst_86 : f32 to vector<8x128xf32>
    %199 = arith.mulf %198, %197 : vector<8x128xf32>
    %200 = math.tanh %199 : vector<8x128xf32>
    %cst_87 = arith.constant 5.000000e-01 : f32
    %201 = vector.broadcast %cst_87 : f32 to vector<8x128xf32>
    %202 = arith.mulf %201, %200 : vector<8x128xf32>
    %cst_88 = arith.constant 5.000000e-01 : f32
    %203 = vector.broadcast %cst_88 : f32 to vector<8x128xf32>
    %204 = arith.addf %202, %203 : vector<8x128xf32>
    %205 = vector.extract_strided_slice %196 {offsets = [0, 128], sizes = [8, 128], strides = [1, 1]} : vector<8x512xf32> to vector<8x128xf32>
    %cst_89 = arith.constant 5.000000e-01 : f32
    %206 = vector.broadcast %cst_89 : f32 to vector<8x128xf32>
    %207 = arith.mulf %206, %205 : vector<8x128xf32>
    %208 = math.tanh %207 : vector<8x128xf32>
    %cst_90 = arith.constant 5.000000e-01 : f32
    %209 = vector.broadcast %cst_90 : f32 to vector<8x128xf32>
    %210 = arith.mulf %209, %208 : vector<8x128xf32>
    %cst_91 = arith.constant 5.000000e-01 : f32
    %211 = vector.broadcast %cst_91 : f32 to vector<8x128xf32>
    %212 = arith.addf %210, %211 : vector<8x128xf32>
    %213 = vector.extract_strided_slice %196 {offsets = [0, 256], sizes = [8, 128], strides = [1, 1]} : vector<8x512xf32> to vector<8x128xf32>
    %214 = math.tanh %213 : vector<8x128xf32>
    %215 = vector.extract_strided_slice %196 {offsets = [0, 384], sizes = [8, 128], strides = [1, 1]} : vector<8x512xf32> to vector<8x128xf32>
    %cst_92 = arith.constant 5.000000e-01 : f32
    %216 = vector.broadcast %cst_92 : f32 to vector<8x128xf32>
    %217 = arith.mulf %216, %215 : vector<8x128xf32>
    %218 = math.tanh %217 : vector<8x128xf32>
    %cst_93 = arith.constant 5.000000e-01 : f32
    %219 = vector.broadcast %cst_93 : f32 to vector<8x128xf32>
    %220 = arith.mulf %219, %218 : vector<8x128xf32>
    %cst_94 = arith.constant 5.000000e-01 : f32
    %221 = vector.broadcast %cst_94 : f32 to vector<8x128xf32>
    %222 = arith.addf %220, %221 : vector<8x128xf32>
    %223 = arith.mulf %212, %183 : vector<8x128xf32>
    %224 = arith.mulf %204, %214 : vector<8x128xf32>
    %225 = arith.addf %223, %224 : vector<8x128xf32>
    %226 = math.tanh %225 : vector<8x128xf32>
    %227 = arith.mulf %222, %226 : vector<8x128xf32>
    %228 = vector.extract_strided_slice %227 {offsets = [0, 0], sizes = [2, 50], strides = [1, 1]} : vector<8x128xf32> to vector<2x50xf32>
    %229 = arith.index_cast %c4_i32 : i32 to index
    %c0_95 = arith.constant 0 : index
    %c0_96 = arith.constant 0 : index
    %230 = vector.load %arg8[%229, %c0_95, %c0_96] : memref<8x2x50xf32, #tpu.memory_space<vmem>>, vector<1x2x50xf32>
    %231 = vector.shape_cast %230 : vector<1x2x50xf32> to vector<2x50xf32>
    %232 = vector.shape_cast %228 : vector<2x50xf32> to vector<1x2x50xf32>
    tpu.vector_store %arg8[%229, %c0_95, %c0_96], %232 {strides = array<i32>} : memref<8x2x50xf32, #tpu.memory_space<vmem>>, vector<1x2x50xf32>,
    %c5_i32 = arith.constant 5 : i32
    %233 = arith.index_cast %c5_i32 : i32 to index
    %c0_97 = arith.constant 0 : index
    %c0_98 = arith.constant 0 : index
    %234 = vector.load %arg11[%233, %c0_97, %c0_98] : memref<8x8x512xf32, #tpu.memory_space<vmem>>, vector<1x8x512xf32>
    %235 = vector.shape_cast %234 : vector<1x8x512xf32> to vector<8x512xf32>
    %c0_99 = arith.constant 0 : index
    %c0_100 = arith.constant 0 : index
    %236 = vector.load %arg7[%c0_99, %c0_100] : memref<128x512xf32, #tpu.memory_space<vmem>>, vector<128x512xf32>
    %cst_101 = arith.constant dense<0.000000e+00> : vector<8x512xf32>
    %237 = tpu.matmul %227, %236, %cst_101 {dimension_numbers = #tpu.dot_dimension_numbers<[1], [0], [0], [1], [0, 0, 1, 1], [], []>} : vector<8x128xf32>, vector<128x512xf32>, vector<8x512xf32> -> vector<8x512xf32>
    %238 = arith.addf %235, %237 : vector<8x512xf32>
    %239 = vector.extract_strided_slice %238 {offsets = [0, 0], sizes = [8, 128], strides = [1, 1]} : vector<8x512xf32> to vector<8x128xf32>
    %cst_102 = arith.constant 5.000000e-01 : f32
    %240 = vector.broadcast %cst_102 : f32 to vector<8x128xf32>
    %241 = arith.mulf %240, %239 : vector<8x128xf32>
    %242 = math.tanh %241 : vector<8x128xf32>
    %cst_103 = arith.constant 5.000000e-01 : f32
    %243 = vector.broadcast %cst_103 : f32 to vector<8x128xf32>
    %244 = arith.mulf %243, %242 : vector<8x128xf32>
    %cst_104 = arith.constant 5.000000e-01 : f32
    %245 = vector.broadcast %cst_104 : f32 to vector<8x128xf32>
    %246 = arith.addf %244, %245 : vector<8x128xf32>
    %247 = vector.extract_strided_slice %238 {offsets = [0, 128], sizes = [8, 128], strides = [1, 1]} : vector<8x512xf32> to vector<8x128xf32>
    %cst_105 = arith.constant 5.000000e-01 : f32
    %248 = vector.broadcast %cst_105 : f32 to vector<8x128xf32>
    %249 = arith.mulf %248, %247 : vector<8x128xf32>
    %250 = math.tanh %249 : vector<8x128xf32>
    %cst_106 = arith.constant 5.000000e-01 : f32
    %251 = vector.broadcast %cst_106 : f32 to vector<8x128xf32>
    %252 = arith.mulf %251, %250 : vector<8x128xf32>
    %cst_107 = arith.constant 5.000000e-01 : f32
    %253 = vector.broadcast %cst_107 : f32 to vector<8x128xf32>
    %254 = arith.addf %252, %253 : vector<8x128xf32>
    %255 = vector.extract_strided_slice %238 {offsets = [0, 256], sizes = [8, 128], strides = [1, 1]} : vector<8x512xf32> to vector<8x128xf32>
    %256 = math.tanh %255 : vector<8x128xf32>
    %257 = vector.extract_strided_slice %238 {offsets = [0, 384], sizes = [8, 128], strides = [1, 1]} : vector<8x512xf32> to vector<8x128xf32>
    %cst_108 = arith.constant 5.000000e-01 : f32
    %258 = vector.broadcast %cst_108 : f32 to vector<8x128xf32>
    %259 = arith.mulf %258, %257 : vector<8x128xf32>
    %260 = math.tanh %259 : vector<8x128xf32>
    %cst_109 = arith.constant 5.000000e-01 : f32
    %261 = vector.broadcast %cst_109 : f32 to vector<8x128xf32>
    %262 = arith.mulf %261, %260 : vector<8x128xf32>
    %cst_110 = arith.constant 5.000000e-01 : f32
    %263 = vector.broadcast %cst_110 : f32 to vector<8x128xf32>
    %264 = arith.addf %262, %263 : vector<8x128xf32>
    %265 = arith.mulf %254, %225 : vector<8x128xf32>
    %266 = arith.mulf %246, %256 : vector<8x128xf32>
    %267 = arith.addf %265, %266 : vector<8x128xf32>
    %268 = math.tanh %267 : vector<8x128xf32>
    %269 = arith.mulf %264, %268 : vector<8x128xf32>
    %270 = vector.extract_strided_slice %269 {offsets = [0, 0], sizes = [2, 50], strides = [1, 1]} : vector<8x128xf32> to vector<2x50xf32>
    %271 = arith.index_cast %c5_i32 : i32 to index
    %c0_111 = arith.constant 0 : index
    %c0_112 = arith.constant 0 : index
    %272 = vector.load %arg8[%271, %c0_111, %c0_112] : memref<8x2x50xf32, #tpu.memory_space<vmem>>, vector<1x2x50xf32>
    %273 = vector.shape_cast %272 : vector<1x2x50xf32> to vector<2x50xf32>
    %274 = vector.shape_cast %270 : vector<2x50xf32> to vector<1x2x50xf32>
    tpu.vector_store %arg8[%271, %c0_111, %c0_112], %274 {strides = array<i32>} : memref<8x2x50xf32, #tpu.memory_space<vmem>>, vector<1x2x50xf32>,
    %c6_i32 = arith.constant 6 : i32
    %275 = arith.index_cast %c6_i32 : i32 to index
    %c0_113 = arith.constant 0 : index
    %c0_114 = arith.constant 0 : index
    %276 = vector.load %arg11[%275, %c0_113, %c0_114] : memref<8x8x512xf32, #tpu.memory_space<vmem>>, vector<1x8x512xf32>
    %277 = vector.shape_cast %276 : vector<1x8x512xf32> to vector<8x512xf32>
    %c0_115 = arith.constant 0 : index
    %c0_116 = arith.constant 0 : index
    %278 = vector.load %arg7[%c0_115, %c0_116] : memref<128x512xf32, #tpu.memory_space<vmem>>, vector<128x512xf32>
    %cst_117 = arith.constant dense<0.000000e+00> : vector<8x512xf32>
    %279 = tpu.matmul %269, %278, %cst_117 {dimension_numbers = #tpu.dot_dimension_numbers<[1], [0], [0], [1], [0, 0, 1, 1], [], []>} : vector<8x128xf32>, vector<128x512xf32>, vector<8x512xf32> -> vector<8x512xf32>
    %280 = arith.addf %277, %279 : vector<8x512xf32>
    %281 = vector.extract_strided_slice %280 {offsets = [0, 0], sizes = [8, 128], strides = [1, 1]} : vector<8x512xf32> to vector<8x128xf32>
    %cst_118 = arith.constant 5.000000e-01 : f32
    %282 = vector.broadcast %cst_118 : f32 to vector<8x128xf32>
    %283 = arith.mulf %282, %281 : vector<8x128xf32>
    %284 = math.tanh %283 : vector<8x128xf32>
    %cst_119 = arith.constant 5.000000e-01 : f32
    %285 = vector.broadcast %cst_119 : f32 to vector<8x128xf32>
    %286 = arith.mulf %285, %284 : vector<8x128xf32>
    %cst_120 = arith.constant 5.000000e-01 : f32
    %287 = vector.broadcast %cst_120 : f32 to vector<8x128xf32>
    %288 = arith.addf %286, %287 : vector<8x128xf32>
    %289 = vector.extract_strided_slice %280 {offsets = [0, 128], sizes = [8, 128], strides = [1, 1]} : vector<8x512xf32> to vector<8x128xf32>
    %cst_121 = arith.constant 5.000000e-01 : f32
    %290 = vector.broadcast %cst_121 : f32 to vector<8x128xf32>
    %291 = arith.mulf %290, %289 : vector<8x128xf32>
    %292 = math.tanh %291 : vector<8x128xf32>
    %cst_122 = arith.constant 5.000000e-01 : f32
    %293 = vector.broadcast %cst_122 : f32 to vector<8x128xf32>
    %294 = arith.mulf %293, %292 : vector<8x128xf32>
    %cst_123 = arith.constant 5.000000e-01 : f32
    %295 = vector.broadcast %cst_123 : f32 to vector<8x128xf32>
    %296 = arith.addf %294, %295 : vector<8x128xf32>
    %297 = vector.extract_strided_slice %280 {offsets = [0, 256], sizes = [8, 128], strides = [1, 1]} : vector<8x512xf32> to vector<8x128xf32>
    %298 = math.tanh %297 : vector<8x128xf32>
    %299 = vector.extract_strided_slice %280 {offsets = [0, 384], sizes = [8, 128], strides = [1, 1]} : vector<8x512xf32> to vector<8x128xf32>
    %cst_124 = arith.constant 5.000000e-01 : f32
    %300 = vector.broadcast %cst_124 : f32 to vector<8x128xf32>
    %301 = arith.mulf %300, %299 : vector<8x128xf32>
    %302 = math.tanh %301 : vector<8x128xf32>
    %cst_125 = arith.constant 5.000000e-01 : f32
    %303 = vector.broadcast %cst_125 : f32 to vector<8x128xf32>
    %304 = arith.mulf %303, %302 : vector<8x128xf32>
    %cst_126 = arith.constant 5.000000e-01 : f32
    %305 = vector.broadcast %cst_126 : f32 to vector<8x128xf32>
    %306 = arith.addf %304, %305 : vector<8x128xf32>
    %307 = arith.mulf %296, %267 : vector<8x128xf32>
    %308 = arith.mulf %288, %298 : vector<8x128xf32>
    %309 = arith.addf %307, %308 : vector<8x128xf32>
    %310 = math.tanh %309 : vector<8x128xf32>
    %311 = arith.mulf %306, %310 : vector<8x128xf32>
    %312 = vector.extract_strided_slice %311 {offsets = [0, 0], sizes = [2, 50], strides = [1, 1]} : vector<8x128xf32> to vector<2x50xf32>
    %313 = arith.index_cast %c6_i32 : i32 to index
    %c0_127 = arith.constant 0 : index
    %c0_128 = arith.constant 0 : index
    %314 = vector.load %arg8[%313, %c0_127, %c0_128] : memref<8x2x50xf32, #tpu.memory_space<vmem>>, vector<1x2x50xf32>
    %315 = vector.shape_cast %314 : vector<1x2x50xf32> to vector<2x50xf32>
    %316 = vector.shape_cast %312 : vector<2x50xf32> to vector<1x2x50xf32>
    tpu.vector_store %arg8[%313, %c0_127, %c0_128], %316 {strides = array<i32>} : memref<8x2x50xf32, #tpu.memory_space<vmem>>, vector<1x2x50xf32>,
    %c7_i32 = arith.constant 7 : i32
    %317 = arith.index_cast %c7_i32 : i32 to index
    %c0_129 = arith.constant 0 : index
    %c0_130 = arith.constant 0 : index
    %318 = vector.load %arg11[%317, %c0_129, %c0_130] : memref<8x8x512xf32, #tpu.memory_space<vmem>>, vector<1x8x512xf32>
    %319 = vector.shape_cast %318 : vector<1x8x512xf32> to vector<8x512xf32>
    %c0_131 = arith.constant 0 : index
    %c0_132 = arith.constant 0 : index
    %320 = vector.load %arg7[%c0_131, %c0_132] : memref<128x512xf32, #tpu.memory_space<vmem>>, vector<128x512xf32>
    %cst_133 = arith.constant dense<0.000000e+00> : vector<8x512xf32>
    %321 = tpu.matmul %311, %320, %cst_133 {dimension_numbers = #tpu.dot_dimension_numbers<[1], [0], [0], [1], [0, 0, 1, 1], [], []>} : vector<8x128xf32>, vector<128x512xf32>, vector<8x512xf32> -> vector<8x512xf32>
    %322 = arith.addf %319, %321 : vector<8x512xf32>
    %323 = vector.extract_strided_slice %322 {offsets = [0, 0], sizes = [8, 128], strides = [1, 1]} : vector<8x512xf32> to vector<8x128xf32>
    %cst_134 = arith.constant 5.000000e-01 : f32
    %324 = vector.broadcast %cst_134 : f32 to vector<8x128xf32>
    %325 = arith.mulf %324, %323 : vector<8x128xf32>
    %326 = math.tanh %325 : vector<8x128xf32>
    %cst_135 = arith.constant 5.000000e-01 : f32
    %327 = vector.broadcast %cst_135 : f32 to vector<8x128xf32>
    %328 = arith.mulf %327, %326 : vector<8x128xf32>
    %cst_136 = arith.constant 5.000000e-01 : f32
    %329 = vector.broadcast %cst_136 : f32 to vector<8x128xf32>
    %330 = arith.addf %328, %329 : vector<8x128xf32>
    %331 = vector.extract_strided_slice %322 {offsets = [0, 128], sizes = [8, 128], strides = [1, 1]} : vector<8x512xf32> to vector<8x128xf32>
    %cst_137 = arith.constant 5.000000e-01 : f32
    %332 = vector.broadcast %cst_137 : f32 to vector<8x128xf32>
    %333 = arith.mulf %332, %331 : vector<8x128xf32>
    %334 = math.tanh %333 : vector<8x128xf32>
    %cst_138 = arith.constant 5.000000e-01 : f32
    %335 = vector.broadcast %cst_138 : f32 to vector<8x128xf32>
    %336 = arith.mulf %335, %334 : vector<8x128xf32>
    %cst_139 = arith.constant 5.000000e-01 : f32
    %337 = vector.broadcast %cst_139 : f32 to vector<8x128xf32>
    %338 = arith.addf %336, %337 : vector<8x128xf32>
    %339 = vector.extract_strided_slice %322 {offsets = [0, 256], sizes = [8, 128], strides = [1, 1]} : vector<8x512xf32> to vector<8x128xf32>
    %340 = math.tanh %339 : vector<8x128xf32>
    %341 = vector.extract_strided_slice %322 {offsets = [0, 384], sizes = [8, 128], strides = [1, 1]} : vector<8x512xf32> to vector<8x128xf32>
    %cst_140 = arith.constant 5.000000e-01 : f32
    %342 = vector.broadcast %cst_140 : f32 to vector<8x128xf32>
    %343 = arith.mulf %342, %341 : vector<8x128xf32>
    %344 = math.tanh %343 : vector<8x128xf32>
    %cst_141 = arith.constant 5.000000e-01 : f32
    %345 = vector.broadcast %cst_141 : f32 to vector<8x128xf32>
    %346 = arith.mulf %345, %344 : vector<8x128xf32>
    %cst_142 = arith.constant 5.000000e-01 : f32
    %347 = vector.broadcast %cst_142 : f32 to vector<8x128xf32>
    %348 = arith.addf %346, %347 : vector<8x128xf32>
    %349 = arith.mulf %338, %309 : vector<8x128xf32>
    %350 = arith.mulf %330, %340 : vector<8x128xf32>
    %351 = arith.addf %349, %350 : vector<8x128xf32>
    %352 = math.tanh %351 : vector<8x128xf32>
    %353 = arith.mulf %348, %352 : vector<8x128xf32>
    %354 = vector.extract_strided_slice %353 {offsets = [0, 0], sizes = [2, 50], strides = [1, 1]} : vector<8x128xf32> to vector<2x50xf32>
    %355 = arith.index_cast %c7_i32 : i32 to index
    %c0_143 = arith.constant 0 : index
    %c0_144 = arith.constant 0 : index
    %356 = vector.load %arg8[%355, %c0_143, %c0_144] : memref<8x2x50xf32, #tpu.memory_space<vmem>>, vector<1x2x50xf32>
    %357 = vector.shape_cast %356 : vector<1x2x50xf32> to vector<2x50xf32>
    %358 = vector.shape_cast %354 : vector<2x50xf32> to vector<1x2x50xf32>
    tpu.vector_store %arg8[%355, %c0_143, %c0_144], %358 {strides = array<i32>} : memref<8x2x50xf32, #tpu.memory_space<vmem>>, vector<1x2x50xf32>,
    %c8_i32 = arith.constant 8 : i32
    %359 = vector.extract_strided_slice %353 {offsets = [0, 0], sizes = [2, 50], strides = [1, 1]} : vector<8x128xf32> to vector<2x50xf32>
    %c0_145 = arith.constant 0 : index
    %c0_146 = arith.constant 0 : index
    %360 = vector.load %arg9[%c0_145, %c0_146] : memref<2x50xf32, #tpu.memory_space<vmem>>, vector<2x50xf32>
    tpu.vector_store %arg9[%c0_145, %c0_146], %359 {strides = array<i32>} : memref<2x50xf32, #tpu.memory_space<vmem>>, vector<2x50xf32>,
    %361 = vector.extract_strided_slice %351 {offsets = [0, 0], sizes = [2, 50], strides = [1, 1]} : vector<8x128xf32> to vector<2x50xf32>
    %c0_147 = arith.constant 0 : index
    %c0_148 = arith.constant 0 : index
    %362 = vector.load %arg10[%c0_147, %c0_148] : memref<2x50xf32, #tpu.memory_space<vmem>>, vector<2x50xf32>
    tpu.vector_store %arg10[%c0_147, %c0_148], %361 {strides = array<i32>} : memref<2x50xf32, #tpu.memory_space<vmem>>, vector<2x50xf32>,
    return
  }
  func.func @transform_0(%arg0: i32) -> (i32, i32, i32) {
    %c0_i32 = arith.constant 0 : i32
    %c0_i32_0 = arith.constant 0 : i32
    %c0_i32_1 = arith.constant 0 : i32
    %c0_i32_2 = arith.constant 0 : i32
    return %c0_i32, %c0_i32_0, %c0_i32_1 : i32, i32, i32
  }
  func.func @transform_1(%arg0: i32) -> (i32, i32, i32) {
    %c0_i32 = arith.constant 0 : i32
    %c0_i32_0 = arith.constant 0 : i32
    %c0_i32_1 = arith.constant 0 : i32
    %c0_i32_2 = arith.constant 0 : i32
    return %c0_i32, %c0_i32_0, %c0_i32_1 : i32, i32, i32
  }
  func.func @transform_2(%arg0: i32) -> (i32, i32) {
    %c0_i32 = arith.constant 0 : i32
    %c0_i32_0 = arith.constant 0 : i32
    %c0_i32_1 = arith.constant 0 : i32
    return %c0_i32, %c0_i32_0 : i32, i32
  }
  func.func @transform_3(%arg0: i32) -> (i32, i32) {
    %c0_i32 = arith.constant 0 : i32
    %c0_i32_0 = arith.constant 0 : i32
    %c0_i32_1 = arith.constant 0 : i32
    return %c0_i32, %c0_i32_0 : i32, i32
  }
  func.func @transform_4(%arg0: i32) -> (i32, i32) {
    %c0_i32 = arith.constant 0 : i32
    %c0_i32_0 = arith.constant 0 : i32
    %c0_i32_1 = arith.constant 0 : i32
    return %c0_i32, %c0_i32_0 : i32, i32
  }
  func.func @transform_5(%arg0: i32) -> (i32, i32) {
    %c0_i32 = arith.constant 0 : i32
    %c0_i32_0 = arith.constant 0 : i32
    %c0_i32_1 = arith.constant 0 : i32
    return %c0_i32, %c0_i32_0 : i32, i32
  }
  func.func @transform_6(%arg0: i32) -> (i32, i32) {
    %c0_i32 = arith.constant 0 : i32
    %c0_i32_0 = arith.constant 0 : i32
    %c0_i32_1 = arith.constant 0 : i32
    return %c0_i32, %c0_i32_0 : i32, i32
  }
  func.func @transform_7(%arg0: i32) -> (i32, i32, i32) {
    %c0_i32 = arith.constant 0 : i32
    %c0_i32_0 = arith.constant 0 : i32
    %c0_i32_1 = arith.constant 0 : i32
    %c0_i32_2 = arith.constant 0 : i32
    return %c0_i32, %c0_i32_0, %c0_i32_1 : i32, i32, i32
  }
  func.func @transform_8(%arg0: i32) -> (i32, i32) {
    %c0_i32 = arith.constant 0 : i32
    %c0_i32_0 = arith.constant 0 : i32
    %c0_i32_1 = arith.constant 0 : i32
    return %c0_i32, %c0_i32_0 : i32, i32
  }
  func.func @transform_9(%arg0: i32) -> (i32, i32) {
    %c0_i32 = arith.constant 0 : i32
    %c0_i32_0 = arith.constant 0 : i32
    %c0_i32_1 = arith.constant 0 : i32
    return %c0_i32, %c0_i32_0 : i32, i32
  }
}

</mosaic_0001>

<llo_original>
// kernel: _encoder_lstm.1
$region0: #{_encoder_lstm.1}
  #allocation0 [shape = 'u32[]', space=smem, size = 0x4, offset = 0x4, fixed_abs, tag = 'smem constant byte address 0x4 - core index']
  #allocation1 [shape = 'u32[144,128]{1,0:T(1,128)}', space=vmem, size = 0x12000, scoped, tag = 'internal scratch']
  #allocation2 [shape = 'f32[8,8,512]{2,1,0:T(8,128)}', space=vmem, size = 0x20000, scoped, tag = 'scratch operand']
  %s0 = inlined_call_operand.vmem [shape: s32[8,8,1], index: 0, kind: input, shape index: {}]
  %s1 = inlined_call_operand.vmem [shape: s32[8,8,1], index: 1, kind: input, shape index: {}]
  %s2 = inlined_call_operand.vmem [shape: f32[8,128], index: 2, kind: input, shape index: {}]
  %s3 = inlined_call_operand.vmem [shape: f32[8,128], index: 3, kind: input, shape index: {}]
  %s4 = inlined_call_operand.vmem [shape: f32[16,512], index: 4, kind: input, shape index: {}]
  %s5 = inlined_call_operand.vmem [shape: f32[16,512], index: 5, kind: input, shape index: {}]
  %s6 = inlined_call_operand.hbm [shape: f32[128,512], index: 6, kind: input, shape index: {}]
  %s7 = inlined_call_operand.hbm [shape: f32[8,2,50], index: 7, kind: output, shape index: {0}]
  %s8 = inlined_call_operand.hbm [shape: f32[2,50], index: 8, kind: output, shape index: {1}]
  %s9 = inlined_call_operand.hbm [shape: f32[2,50], index: 9, kind: output, shape index: {2}]
  %10 = xla_tuple %s7, %s8, %s9
  %s11 = sld [smem:[#allocation0]]
  $region58: #{_encoder_lstm.1} parent=0
    _
  %s13 = ssub.s32 1, %s11
  %s14 = scalar_select 0, %s13, %s11
  $region1: #{_encoder_lstm.1} parent=0
    #allocation3 [shape = 'u8[262144]{0}', space=vmem, size = 0x40000, scoped, tag = 'input window, operand 6, single buffered']
    #allocation4 [shape = 's32[1]{0}', space=sflag, size = 0x4, scoped, tag = 'scoped memory for _encoder_lstm.1']
    #allocation5 [shape = 's32[1]{0}', space=sflag, size = 0x4, scoped, tag = 'scoped memory for _encoder_lstm.1']
    #allocation6 [shape = 'u8[8192]{0}', space=vmem, size = 0x2000, scoped, tag = 'output window, operand 0, single buffered']
    #allocation7 [shape = 'u8[1024]{0}', space=vmem, size = 0x400, scoped, tag = 'output window, operand 1, single buffered']
    #allocation8 [shape = 's32[1]{0}', space=sflag, size = 0x4, scoped, tag = 'scoped memory for _encoder_lstm.1']
    #allocation9 [shape = 'u8[1024]{0}', space=vmem, size = 0x400, scoped, tag = 'output window, operand 2, single buffered']
    %15 = vsyncpa [#allocation4], 0
    %16 = vsyncpa [#allocation5], 0
    %17 = vsyncpa [#allocation8], 0
    // Predicated region
    $region2: #{_encoder_lstm.1} parent=1 // pred_check
      _
    $region3: #{_encoder_lstm.1} parent=1 // pred_check_branch
      %19 = sbr.rel (0) target = $region5
    $region4: #{_encoder_lstm.1} parent=1 // pred_region
      _
    $region5: #{_encoder_lstm.1} parent=1 // pred_fallthru
      _
    // Predicated region
    $region6: #{_encoder_lstm.1} parent=1 // pred_check
      _
    $region7: #{_encoder_lstm.1} parent=1 // pred_check_branch
      %21 = sbr.rel (0) target = $region9
    $region8: #{_encoder_lstm.1} parent=1 // pred_region
      _
    $region9: #{_encoder_lstm.1} parent=1 // pred_fallthru
      _
    // Predicated region
    $region10: #{_encoder_lstm.1} parent=1 // pred_check
      _
    $region11: #{_encoder_lstm.1} parent=1 // pred_check_branch
      %23 = sbr.rel (0) target = $region13
    $region12: #{_encoder_lstm.1} parent=1 // pred_region
      _
    $region13: #{_encoder_lstm.1} parent=1 // pred_fallthru
      _
    // Predicated region
    $region14: #{_encoder_lstm.1} parent=1 // pred_check
      _
    $region15: #{_encoder_lstm.1} parent=1 // pred_check_branch
      %25 = sbr.rel (0) target = $region17
    $region16: #{_encoder_lstm.1} parent=1 // pred_region
      _
    $region17: #{_encoder_lstm.1} parent=1 // pred_fallthru
      _
    // Predicated region
    $region18: #{_encoder_lstm.1} parent=1 // pred_check
      _
    $region19: #{_encoder_lstm.1} parent=1 // pred_check_branch
      %27 = sbr.rel (0) target = $region21
    $region20: #{_encoder_lstm.1} parent=1 // pred_region
      _
    $region21: #{_encoder_lstm.1} parent=1 // pred_fallthru
      _
    // Predicated region
    $region22: #{_encoder_lstm.1} parent=1 // pred_check
      _
    $region23: #{_encoder_lstm.1} parent=1 // pred_check_branch
      %29 = sbr.rel (0) target = $region25
    $region24: #{_encoder_lstm.1} parent=1 // pred_region
      _
    $region25: #{_encoder_lstm.1} parent=1 // pred_fallthru
      _
    // Predicated region
    $region26: #{_encoder_lstm.1} parent=1 // pred_check
      _
    $region27: #{_encoder_lstm.1} parent=1 // pred_check_branch
      %31 = sbr.rel (0) target = $region29
    $region28: #{_encoder_lstm.1} parent=1 // pred_region
      %s33 = ssub.s32 8192, 8192
      %34 = vsyncadd [#allocation4], %s33
      %s35 = sshll.u32 [#allocation3], 4
      %s36 = int_to_ptr.vmem [resolvable:$true] %s35
      %41 = dma.hbm_to_vmem [thread:$0]  %s6, 8192, %s36, [#allocation4], 512, 512, 32
    $region29: #{_encoder_lstm.1} parent=1 // pred_fallthru
      _
    // Predicated region
    $region30: #{_encoder_lstm.1} parent=1 // pred_check
      _
    $region31: #{_encoder_lstm.1} parent=1 // pred_check_branch
      %43 = sbr.rel (0) target = $region33
    $region32: #{_encoder_lstm.1} parent=1 // pred_region
      %44 = dma.done [#allocation4], 8192
    $region33: #{_encoder_lstm.1} parent=1 // pred_fallthru
      _
    %v45 = vld [vmem:[%s0] sm:$0xff]
    %v46 = vld [vmem:[%s0 + $0x8] sm:$0xff]
    %v47 = vld [vmem:[%s0 + $0x10] sm:$0xff]
    %v48 = vld [vmem:[%s0 + $0x18] sm:$0xff]
    %v49 = vld [vmem:[%s0 + $0x20] sm:$0xff]
    %v50 = vld [vmem:[%s0 + $0x28] sm:$0xff]
    %v51 = vld [vmem:[%s0 + $0x30] sm:$0xff]
    %v52 = vld [vmem:[%s0 + $0x38] sm:$0xff]
    %v53 = vld [vmem:[%s1] sm:$0xff]
    %v54 = vld [vmem:[%s1 + $0x8] sm:$0xff]
    %v55 = vld [vmem:[%s1 + $0x10] sm:$0xff]
    %v56 = vld [vmem:[%s1 + $0x18] sm:$0xff]
    %v57 = vld [vmem:[%s1 + $0x20] sm:$0xff]
    %v58 = vld [vmem:[%s1 + $0x28] sm:$0xff]
    %v59 = vld [vmem:[%s1 + $0x30] sm:$0xff]
    %v60 = vld [vmem:[%s1 + $0x38] sm:$0xff]
    %v61 = vlaneseq
    %v62 = vand.u32 %v61, 127
    %63 = vset.pattern.permute.xlu0 0
    %64 = vperm.xlu0 %63, %v45
    %v65 = vpop.permute.xlu0 %64
    %66 = vset.pattern.permute.xlu0 0
    %67 = vperm.xlu0 %66, %v46
    %v68 = vpop.permute.xlu0 %67
    %69 = vset.pattern.permute.xlu0 0
    %70 = vperm.xlu0 %69, %v47
    %v71 = vpop.permute.xlu0 %70
    %72 = vset.pattern.permute.xlu0 0
    %73 = vperm.xlu0 %72, %v48
    %v74 = vpop.permute.xlu0 %73
    %75 = vset.pattern.permute.xlu0 0
    %76 = vperm.xlu0 %75, %v49
    %v77 = vpop.permute.xlu0 %76
    %78 = vset.pattern.permute.xlu0 0
    %79 = vperm.xlu0 %78, %v50
    %v80 = vpop.permute.xlu0 %79
    %81 = vset.pattern.permute.xlu0 0
    %82 = vperm.xlu0 %81, %v51
    %v83 = vpop.permute.xlu0 %82
    %84 = vset.pattern.permute.xlu0 0
    %85 = vperm.xlu0 %84, %v52
    %v86 = vpop.permute.xlu0 %85
    %vm87 = vcmp.eq.s32.totalorder %v62, %v65
    %vm88 = vcmp.eq.s32.totalorder %v62, %v68
    %vm89 = vcmp.eq.s32.totalorder %v62, %v71
    %vm90 = vcmp.eq.s32.totalorder %v62, %v74
    %vm91 = vcmp.eq.s32.totalorder %v62, %v77
    %vm92 = vcmp.eq.s32.totalorder %v62, %v80
    %vm93 = vcmp.eq.s32.totalorder %v62, %v83
    %vm94 = vcmp.eq.s32.totalorder %v62, %v86
    %v95 = vsel %vm87, 1, 0
    %v96 = vsel %vm88, 1, 0
    %v97 = vsel %vm89, 1, 0
    %v98 = vsel %vm90, 1, 0
    %v99 = vsel %vm91, 1, 0
    %v100 = vsel %vm92, 1, 0
    %v101 = vsel %vm93, 1, 0
    %v102 = vsel %vm94, 1, 0
    %v103 = vcvt.s32.f32 %v95
    %v104 = vcvt.s32.f32 %v96
    %v105 = vcvt.s32.f32 %v97
    %v106 = vcvt.s32.f32 %v98
    %v107 = vcvt.s32.f32 %v99
    %v108 = vcvt.s32.f32 %v100
    %v109 = vcvt.s32.f32 %v101
    %v110 = vcvt.s32.f32 %v102
    %111 = vset.pattern.permute.xlu0 0
    %112 = vperm.xlu0 %111, %v53
    %v113 = vpop.permute.xlu0 %112
    %114 = vset.pattern.permute.xlu0 0
    %115 = vperm.xlu0 %114, %v54
    %v116 = vpop.permute.xlu0 %115
    %117 = vset.pattern.permute.xlu0 0
    %118 = vperm.xlu0 %117, %v55
    %v119 = vpop.permute.xlu0 %118
    %120 = vset.pattern.permute.xlu0 0
    %121 = vperm.xlu0 %120, %v56
    %v122 = vpop.permute.xlu0 %121
    %123 = vset.pattern.permute.xlu0 0
    %124 = vperm.xlu0 %123, %v57
    %v125 = vpop.permute.xlu0 %124
    %126 = vset.pattern.permute.xlu0 0
    %127 = vperm.xlu0 %126, %v58
    %v128 = vpop.permute.xlu0 %127
    %129 = vset.pattern.permute.xlu0 0
    %130 = vperm.xlu0 %129, %v59
    %v131 = vpop.permute.xlu0 %130
    %132 = vset.pattern.permute.xlu0 0
    %133 = vperm.xlu0 %132, %v60
    %v134 = vpop.permute.xlu0 %133
    %vm135 = vcmp.eq.s32.totalorder %v62, %v113
    %vm136 = vcmp.eq.s32.totalorder %v62, %v116
    %vm137 = vcmp.eq.s32.totalorder %v62, %v119
    %vm138 = vcmp.eq.s32.totalorder %v62, %v122
    %vm139 = vcmp.eq.s32.totalorder %v62, %v125
    %vm140 = vcmp.eq.s32.totalorder %v62, %v128
    %vm141 = vcmp.eq.s32.totalorder %v62, %v131
    %vm142 = vcmp.eq.s32.totalorder %v62, %v134
    %v143 = vsel %vm135, 1, 0
    %v144 = vsel %vm136, 1, 0
    %v145 = vsel %vm137, 1, 0
    %v146 = vsel %vm138, 1, 0
    %v147 = vsel %vm139, 1, 0
    %v148 = vsel %vm140, 1, 0
    %v149 = vsel %vm141, 1, 0
    %v150 = vsel %vm142, 1, 0
    %v151 = vcvt.s32.f32 %v143
    %v152 = vcvt.s32.f32 %v144
    %v153 = vcvt.s32.f32 %v145
    %v154 = vcvt.s32.f32 %v146
    %v155 = vcvt.s32.f32 %v147
    %v156 = vcvt.s32.f32 %v148
    %v157 = vcvt.s32.f32 %v149
    %v158 = vcvt.s32.f32 %v150
    %v159 = vld [vmem:[%s4] sm:$0xff]
    %v160 = vld [vmem:[%s4 + $0x8] sm:$0xff]
    %v161 = vld [vmem:[%s4 + $0x10] sm:$0xff]
    %v162 = vld [vmem:[%s4 + $0x18] sm:$0xff]
    %v163 = vld [vmem:[%s4 + $0x20] sm:$0xff]
    %v164 = vld [vmem:[%s4 + $0x28] sm:$0xff]
    %v165 = vld [vmem:[%s4 + $0x30] sm:$0xff]
    %v166 = vld [vmem:[%s4 + $0x38] sm:$0xff]
    %v167 = vld [vmem:[%s5] sm:$0xff]
    %v168 = vld [vmem:[%s5 + $0x8] sm:$0xff]
    %v169 = vld [vmem:[%s5 + $0x10] sm:$0xff]
    %v170 = vld [vmem:[%s5 + $0x18] sm:$0xff]
    %v171 = vld [vmem:[%s5 + $0x20] sm:$0xff]
    %v172 = vld [vmem:[%s5 + $0x28] sm:$0xff]
    %v173 = vld [vmem:[%s5 + $0x30] sm:$0xff]
    %v174 = vld [vmem:[%s5 + $0x38] sm:$0xff]
    %vm175 = vcmask 130048
    %v177 = vsel %vm175, %v151, 0
    %v180 = vsel %vm175, %v152, 0
    %v183 = vsel %vm175, %v153, 0
    %v186 = vsel %vm175, %v154, 0
    %v189 = vsel %vm175, %v155, 0
    %v192 = vsel %vm175, %v156, 0
    %v195 = vsel %vm175, %v157, 0
    %v198 = vsel %vm175, %v158, 0
    %200 = vmatprep.subr.mxu0 %v168
    %201 = vmatpush1.msra.mxu0 %v167
    %202 = vmatprep.subr.mxu0 %v172
    %203 = vmatpush1.msra.mxu0 %v171
    %204 = vmatprep.subr.mxu0 0.0
    %205 = vmatpush1.msra.mxu0 0.0
    %206 = vmatprep.subr.mxu0 0.0
    %207 = vmatpush1.msra.mxu0 0.0
    %208 = vmatprep.subr.mxu0 0.0
    %209 = vmatpush1.msra.mxu0 0.0
    %210 = vmatprep.subr.mxu0 0.0
    %211 = vmatpush1.msra.mxu0 0.0
    %212 = vmatprep.subr.mxu0 0.0
    %213 = vmatpush1.msra.mxu0 0.0
    %214 = vmatprep.subr.mxu0 0.0
    %215 = vmatpush1.msra.mxu0 0.0
    %216 = vmatprep.subr.mxu0 0.0
    %217 = vmatpush1.msra.mxu0 0.0
    %218 = vmatprep.subr.mxu0 0.0
    %219 = vmatpush1.msra.mxu0 0.0
    %220 = vmatprep.subr.mxu0 0.0
    %221 = vmatpush1.msra.mxu0 0.0
    %222 = vmatprep.subr.mxu0 0.0
    %223 = vmatpush1.msra.mxu0 0.0
    %224 = vmatprep.subr.mxu0 0.0
    %225 = vmatpush1.msra.mxu0 0.0
    %226 = vmatprep.subr.mxu0 0.0
    %227 = vmatpush1.msra.mxu0 0.0
    %228 = vmatprep.subr.mxu0 0.0
    %229 = vmatpush1.msra.mxu0 0.0
    %230 = vmatprep.subr.mxu0 0.0
    %231 = vmatpush1.msra.mxu0 0.0
    %232 = vmatprep.subr.mxu0 0.0
    %233 = vmatpush1.msra.mxu0 0.0
    %234 = vmatprep.subr.mxu0 0.0
    %235 = vmatpush1.msra.mxu0 0.0
    %236 = vmatprep.subr.mxu0 0.0
    %237 = vmatpush1.msra.mxu0 0.0
    %238 = vmatprep.subr.mxu0 0.0
    %239 = vmatpush1.msra.mxu0 0.0
    %240 = vmatprep.subr.mxu0 0.0
    %241 = vmatpush1.msra.mxu0 0.0
    %242 = vmatprep.subr.mxu0 0.0
    %243 = vmatpush1.msra.mxu0 0.0
    %244 = vmatprep.subr.mxu0 0.0
    %245 = vmatpush1.msra.mxu0 0.0
    %246 = vmatprep.subr.mxu0 0.0
    %247 = vmatpush1.msra.mxu0 0.0
    %248 = vmatprep.subr.mxu0 0.0
    %249 = vmatpush1.msra.mxu0 0.0
    %250 = vmatprep.subr.mxu0 0.0
    %251 = vmatpush1.msra.mxu0 0.0
    %252 = vmatprep.subr.mxu0 0.0
    %253 = vmatpush1.msra.mxu0 0.0
    %254 = vmatprep.subr.mxu0 0.0
    %255 = vmatpush1.msra.mxu0 0.0
    %256 = vmatprep.subr.mxu0 0.0
    %257 = vmatpush1.msra.mxu0 0.0
    %258 = vmatprep.subr.mxu0 0.0
    %259 = vmatpush1.msra.mxu0 0.0
    %260 = vmatprep.subr.mxu0 0.0
    %261 = vmatpush1.msra.mxu0 0.0
    %262 = vmatprep.subr.mxu0 0.0
    %263 = vmatpush1.msra.mxu0 0.0
    %264 = vmatprep.mubr.f32.mxu0 0.0
    %265 = vmatmul.mubr.f32.gmra.mrb[0].mxu0 %v177
    %v266 = vpop.f32.mrb[0].mxu0
    %v267 = vadd.f32 0.0, %v266
    %v268 = vpop.f32.mrb[0].mxu0
    %v269 = vadd.f32 0.0, %v268
    %270 = vmatprep.mubr.f32.mxu0 0.0
    %271 = vmatmul.mubr.f32.gmra.mrb[0].mxu0 %v180
    %v272 = vpop.f32.mrb[0].mxu0
    %v273 = vadd.f32 0.0, %v272
    %v274 = vpop.f32.mrb[0].mxu0
    %v275 = vadd.f32 0.0, %v274
    %276 = vmatprep.mubr.f32.mxu0 0.0
    %277 = vmatmul.mubr.f32.gmra.mrb[0].mxu0 %v183
    %v278 = vpop.f32.mrb[0].mxu0
    %v279 = vadd.f32 0.0, %v278
    %v280 = vpop.f32.mrb[0].mxu0
    %v281 = vadd.f32 0.0, %v280
    %282 = vmatprep.mubr.f32.mxu0 0.0
    %283 = vmatmul.mubr.f32.gmra.mrb[0].mxu0 %v186
    %v284 = vpop.f32.mrb[0].mxu0
    %v285 = vadd.f32 0.0, %v284
    %v286 = vpop.f32.mrb[0].mxu0
    %v287 = vadd.f32 0.0, %v286
    %288 = vmatprep.mubr.f32.mxu0 0.0
    %289 = vmatmul.mubr.f32.gmra.mrb[0].mxu0 %v189
    %v290 = vpop.f32.mrb[0].mxu0
    %v291 = vadd.f32 0.0, %v290
    %v292 = vpop.f32.mrb[0].mxu0
    %v293 = vadd.f32 0.0, %v292
    %294 = vmatprep.mubr.f32.mxu0 0.0
    %295 = vmatmul.mubr.f32.gmra.mrb[0].mxu0 %v192
    %v296 = vpop.f32.mrb[0].mxu0
    %v297 = vadd.f32 0.0, %v296
    %v298 = vpop.f32.mrb[0].mxu0
    %v299 = vadd.f32 0.0, %v298
    %300 = vmatprep.mubr.f32.mxu0 0.0
    %301 = vmatmul.mubr.f32.gmra.mrb[0].mxu0 %v195
    %v302 = vpop.f32.mrb[0].mxu0
    %v303 = vadd.f32 0.0, %v302
    %v304 = vpop.f32.mrb[0].mxu0
    %v305 = vadd.f32 0.0, %v304
    %306 = vmatprep.mubr.f32.mxu0 0.0
    %307 = vmatmul.mubr.f32.gmra.mrb[0].mxu0 %v198
    %v308 = vpop.f32.mrb[0].mxu0
    %v309 = vadd.f32 0.0, %v308
    %v310 = vpop.f32.mrb[0].mxu0
    %v311 = vadd.f32 0.0, %v310
    %312 = vdwg.mxu0
    %313 = vmatprep.subr.mxu0 %v170
    %314 = vmatpush1.msra.mxu0 %v169
    %315 = vmatprep.subr.mxu0 %v174
    %316 = vmatpush1.msra.mxu0 %v173
    %317 = vmatprep.subr.mxu0 0.0
    %318 = vmatpush1.msra.mxu0 0.0
    %319 = vmatprep.subr.mxu0 0.0
    %320 = vmatpush1.msra.mxu0 0.0
    %321 = vmatprep.subr.mxu0 0.0
    %322 = vmatpush1.msra.mxu0 0.0
    %323 = vmatprep.subr.mxu0 0.0
    %324 = vmatpush1.msra.mxu0 0.0
    %325 = vmatprep.subr.mxu0 0.0
    %326 = vmatpush1.msra.mxu0 0.0
    %327 = vmatprep.subr.mxu0 0.0
    %328 = vmatpush1.msra.mxu0 0.0
    %329 = vmatprep.subr.mxu0 0.0
    %330 = vmatpush1.msra.mxu0 0.0
    %331 = vmatprep.subr.mxu0 0.0
    %332 = vmatpush1.msra.mxu0 0.0
    %333 = vmatprep.subr.mxu0 0.0
    %334 = vmatpush1.msra.mxu0 0.0
    %335 = vmatprep.subr.mxu0 0.0
    %336 = vmatpush1.msra.mxu0 0.0
    %337 = vmatprep.subr.mxu0 0.0
    %338 = vmatpush1.msra.mxu0 0.0
    %339 = vmatprep.subr.mxu0 0.0
    %340 = vmatpush1.msra.mxu0 0.0
    %341 = vmatprep.subr.mxu0 0.0
    %342 = vmatpush1.msra.mxu0 0.0
    %343 = vmatprep.subr.mxu0 0.0
    %344 = vmatpush1.msra.mxu0 0.0
    %345 = vmatprep.subr.mxu0 0.0
    %346 = vmatpush1.msra.mxu0 0.0
    %347 = vmatprep.subr.mxu0 0.0
    %348 = vmatpush1.msra.mxu0 0.0
    %349 = vmatprep.subr.mxu0 0.0
    %350 = vmatpush1.msra.mxu0 0.0
    %351 = vmatprep.subr.mxu0 0.0
    %352 = vmatpush1.msra.mxu0 0.0
    %353 = vmatprep.subr.mxu0 0.0
    %354 = vmatpush1.msra.mxu0 0.0
    %355 = vmatprep.subr.mxu0 0.0
    %356 = vmatpush1.msra.mxu0 0.0
    %357 = vmatprep.subr.mxu0 0.0
    %358 = vmatpush1.msra.mxu0 0.0
    %359 = vmatprep.subr.mxu0 0.0
    %360 = vmatpush1.msra.mxu0 0.0
    %361 = vmatprep.subr.mxu0 0.0
    %362 = vmatpush1.msra.mxu0 0.0
    %363 = vmatprep.subr.mxu0 0.0
    %364 = vmatpush1.msra.mxu0 0.0
    %365 = vmatprep.subr.mxu0 0.0
    %366 = vmatpush1.msra.mxu0 0.0
    %367 = vmatprep.subr.mxu0 0.0
    %368 = vmatpush1.msra.mxu0 0.0
    %369 = vmatprep.subr.mxu0 0.0
    %370 = vmatpush1.msra.mxu0 0.0
    %371 = vmatprep.subr.mxu0 0.0
    %372 = vmatpush1.msra.mxu0 0.0
    %373 = vmatprep.subr.mxu0 0.0
    %374 = vmatpush1.msra.mxu0 0.0
    %375 = vmatprep.subr.mxu0 0.0
    %376 = vmatpush1.msra.mxu0 0.0
    %377 = vmatprep.mubr.f32.mxu0 0.0
    %378 = vmatmul.mubr.f32.gmra.mrb[0].mxu0 %v177
    %v379 = vpop.f32.mrb[0].mxu0
    %v380 = vadd.f32 0.0, %v379
    %v381 = vpop.f32.mrb[0].mxu0
    %v382 = vadd.f32 0.0, %v381
    %383 = vmatprep.mubr.f32.mxu0 0.0
    %384 = vmatmul.mubr.f32.gmra.mrb[0].mxu0 %v180
    %v385 = vpop.f32.mrb[0].mxu0
    %v386 = vadd.f32 0.0, %v385
    %v387 = vpop.f32.mrb[0].mxu0
    %v388 = vadd.f32 0.0, %v387
    %389 = vmatprep.mubr.f32.mxu0 0.0
    %390 = vmatmul.mubr.f32.gmra.mrb[0].mxu0 %v183
    %v391 = vpop.f32.mrb[0].mxu0
    %v392 = vadd.f32 0.0, %v391
    %v393 = vpop.f32.mrb[0].mxu0
    %v394 = vadd.f32 0.0, %v393
    %395 = vmatprep.mubr.f32.mxu0 0.0
    %396 = vmatmul.mubr.f32.gmra.mrb[0].mxu0 %v186
    %v397 = vpop.f32.mrb[0].mxu0
    %v398 = vadd.f32 0.0, %v397
    %v399 = vpop.f32.mrb[0].mxu0
    %v400 = vadd.f32 0.0, %v399
    %401 = vmatprep.mubr.f32.mxu0 0.0
    %402 = vmatmul.mubr.f32.gmra.mrb[0].mxu0 %v189
    %v403 = vpop.f32.mrb[0].mxu0
    %v404 = vadd.f32 0.0, %v403
    %v405 = vpop.f32.mrb[0].mxu0
    %v406 = vadd.f32 0.0, %v405
    %407 = vmatprep.mubr.f32.mxu0 0.0
    %408 = vmatmul.mubr.f32.gmra.mrb[0].mxu0 %v192
    %v409 = vpop.f32.mrb[0].mxu0
    %v410 = vadd.f32 0.0, %v409
    %v411 = vpop.f32.mrb[0].mxu0
    %v412 = vadd.f32 0.0, %v411
    %413 = vmatprep.mubr.f32.mxu0 0.0
    %414 = vmatmul.mubr.f32.gmra.mrb[0].mxu0 %v195
    %v415 = vpop.f32.mrb[0].mxu0
    %v416 = vadd.f32 0.0, %v415
    %v417 = vpop.f32.mrb[0].mxu0
    %v418 = vadd.f32 0.0, %v417
    %419 = vmatprep.mubr.f32.mxu0 0.0
    %420 = vmatmul.mubr.f32.gmra.mrb[0].mxu0 %v198
    %v421 = vpop.f32.mrb[0].mxu0
    %v422 = vadd.f32 0.0, %v421
    %v423 = vpop.f32.mrb[0].mxu0
    %v424 = vadd.f32 0.0, %v423
    %425 = vdwg.mxu0
    %v427 = vsel %vm175, %v103, 0
    %v430 = vsel %vm175, %v104, 0
    %v433 = vsel %vm175, %v105, 0
    %v436 = vsel %vm175, %v106, 0
    %v439 = vsel %vm175, %v107, 0
    %v442 = vsel %vm175, %v108, 0
    %v445 = vsel %vm175, %v109, 0
    %v448 = vsel %vm175, %v110, 0
    %450 = vmatprep.subr.mxu0 %v160
    %451 = vmatpush1.msra.mxu0 %v159
    %452 = vmatprep.subr.mxu0 %v164
    %453 = vmatpush1.msra.mxu0 %v163
    %454 = vmatprep.subr.mxu0 0.0
    %455 = vmatpush1.msra.mxu0 0.0
    %456 = vmatprep.subr.mxu0 0.0
    %457 = vmatpush1.msra.mxu0 0.0
    %458 = vmatprep.subr.mxu0 0.0
    %459 = vmatpush1.msra.mxu0 0.0
    %460 = vmatprep.subr.mxu0 0.0
    %461 = vmatpush1.msra.mxu0 0.0
    %462 = vmatprep.subr.mxu0 0.0
    %463 = vmatpush1.msra.mxu0 0.0
    %464 = vmatprep.subr.mxu0 0.0
    %465 = vmatpush1.msra.mxu0 0.0
    %466 = vmatprep.subr.mxu0 0.0
    %467 = vmatpush1.msra.mxu0 0.0
    %468 = vmatprep.subr.mxu0 0.0
    %469 = vmatpush1.msra.mxu0 0.0
    %470 = vmatprep.subr.mxu0 0.0
    %471 = vmatpush1.msra.mxu0 0.0
    %472 = vmatprep.subr.mxu0 0.0
    %473 = vmatpush1.msra.mxu0 0.0
    %474 = vmatprep.subr.mxu0 0.0
    %475 = vmatpush1.msra.mxu0 0.0
    %476 = vmatprep.subr.mxu0 0.0
    %477 = vmatpush1.msra.mxu0 0.0
    %478 = vmatprep.subr.mxu0 0.0
    %479 = vmatpush1.msra.mxu0 0.0
    %480 = vmatprep.subr.mxu0 0.0
    %481 = vmatpush1.msra.mxu0 0.0
    %482 = vmatprep.subr.mxu0 0.0
    %483 = vmatpush1.msra.mxu0 0.0
    %484 = vmatprep.subr.mxu0 0.0
    %485 = vmatpush1.msra.mxu0 0.0
    %486 = vmatprep.subr.mxu0 0.0
    %487 = vmatpush1.msra.mxu0 0.0
    %488 = vmatprep.subr.mxu0 0.0
    %489 = vmatpush1.msra.mxu0 0.0
    %490 = vmatprep.subr.mxu0 0.0
    %491 = vmatpush1.msra.mxu0 0.0
    %492 = vmatprep.subr.mxu0 0.0
    %493 = vmatpush1.msra.mxu0 0.0
    %494 = vmatprep.subr.mxu0 0.0
    %495 = vmatpush1.msra.mxu0 0.0
    %496 = vmatprep.subr.mxu0 0.0
    %497 = vmatpush1.msra.mxu0 0.0
    %498 = vmatprep.subr.mxu0 0.0
    %499 = vmatpush1.msra.mxu0 0.0
    %500 = vmatprep.subr.mxu0 0.0
    %501 = vmatpush1.msra.mxu0 0.0
    %502 = vmatprep.subr.mxu0 0.0
    %503 = vmatpush1.msra.mxu0 0.0
    %504 = vmatprep.subr.mxu0 0.0
    %505 = vmatpush1.msra.mxu0 0.0
    %506 = vmatprep.subr.mxu0 0.0
    %507 = vmatpush1.msra.mxu0 0.0
    %508 = vmatprep.subr.mxu0 0.0
    %509 = vmatpush1.msra.mxu0 0.0
    %510 = vmatprep.subr.mxu0 0.0
    %511 = vmatpush1.msra.mxu0 0.0
    %512 = vmatprep.subr.mxu0 0.0
    %513 = vmatpush1.msra.mxu0 0.0
    %514 = vmatprep.mubr.f32.mxu0 0.0
    %515 = vmatmul.mubr.f32.gmra.mrb[0].mxu0 %v427
    %v516 = vpop.f32.mrb[0].mxu0
    %v517 = vadd.f32 %v267, %v516
    %v518 = vpop.f32.mrb[0].mxu0
    %v519 = vadd.f32 %v269, %v518
    %520 = vmatprep.mubr.f32.mxu0 0.0
    %521 = vmatmul.mubr.f32.gmra.mrb[0].mxu0 %v430
    %v522 = vpop.f32.mrb[0].mxu0
    %v523 = vadd.f32 %v273, %v522
    %v524 = vpop.f32.mrb[0].mxu0
    %v525 = vadd.f32 %v275, %v524
    %526 = vmatprep.mubr.f32.mxu0 0.0
    %527 = vmatmul.mubr.f32.gmra.mrb[0].mxu0 %v433
    %v528 = vpop.f32.mrb[0].mxu0
    %v529 = vadd.f32 %v279, %v528
    %v530 = vpop.f32.mrb[0].mxu0
    %v531 = vadd.f32 %v281, %v530
    %532 = vmatprep.mubr.f32.mxu0 0.0
    %533 = vmatmul.mubr.f32.gmra.mrb[0].mxu0 %v436
    %v534 = vpop.f32.mrb[0].mxu0
    %v535 = vadd.f32 %v285, %v534
    %v536 = vpop.f32.mrb[0].mxu0
    %v537 = vadd.f32 %v287, %v536
    %538 = vmatprep.mubr.f32.mxu0 0.0
    %539 = vmatmul.mubr.f32.gmra.mrb[0].mxu0 %v439
    %v540 = vpop.f32.mrb[0].mxu0
    %v541 = vadd.f32 %v291, %v540
    %v542 = vpop.f32.mrb[0].mxu0
    %v543 = vadd.f32 %v293, %v542
    %544 = vmatprep.mubr.f32.mxu0 0.0
    %545 = vmatmul.mubr.f32.gmra.mrb[0].mxu0 %v442
    %v546 = vpop.f32.mrb[0].mxu0
    %v547 = vadd.f32 %v297, %v546
    %v548 = vpop.f32.mrb[0].mxu0
    %v549 = vadd.f32 %v299, %v548
    %550 = vmatprep.mubr.f32.mxu0 0.0
    %551 = vmatmul.mubr.f32.gmra.mrb[0].mxu0 %v445
    %v552 = vpop.f32.mrb[0].mxu0
    %v553 = vadd.f32 %v303, %v552
    %v554 = vpop.f32.mrb[0].mxu0
    %v555 = vadd.f32 %v305, %v554
    %556 = vmatprep.mubr.f32.mxu0 0.0
    %557 = vmatmul.mubr.f32.gmra.mrb[0].mxu0 %v448
    %v558 = vpop.f32.mrb[0].mxu0
    %v559 = vadd.f32 %v309, %v558
    %v560 = vpop.f32.mrb[0].mxu0
    %v561 = vadd.f32 %v311, %v560
    %562 = vdwg.mxu0
    %563 = vmatprep.subr.mxu0 %v162
    %564 = vmatpush1.msra.mxu0 %v161
    %565 = vmatprep.subr.mxu0 %v166
    %566 = vmatpush1.msra.mxu0 %v165
    %567 = vmatprep.subr.mxu0 0.0
    %568 = vmatpush1.msra.mxu0 0.0
    %569 = vmatprep.subr.mxu0 0.0
    %570 = vmatpush1.msra.mxu0 0.0
    %571 = vmatprep.subr.mxu0 0.0
    %572 = vmatpush1.msra.mxu0 0.0
    %573 = vmatprep.subr.mxu0 0.0
    %574 = vmatpush1.msra.mxu0 0.0
    %575 = vmatprep.subr.mxu0 0.0
    %576 = vmatpush1.msra.mxu0 0.0
    %577 = vmatprep.subr.mxu0 0.0
    %578 = vmatpush1.msra.mxu0 0.0
    %579 = vmatprep.subr.mxu0 0.0
    %580 = vmatpush1.msra.mxu0 0.0
    %581 = vmatprep.subr.mxu0 0.0
    %582 = vmatpush1.msra.mxu0 0.0
    %583 = vmatprep.subr.mxu0 0.0
    %584 = vmatpush1.msra.mxu0 0.0
    %585 = vmatprep.subr.mxu0 0.0
    %586 = vmatpush1.msra.mxu0 0.0
    %587 = vmatprep.subr.mxu0 0.0
    %588 = vmatpush1.msra.mxu0 0.0
    %589 = vmatprep.subr.mxu0 0.0
    %590 = vmatpush1.msra.mxu0 0.0
    %591 = vmatprep.subr.mxu0 0.0
    %592 = vmatpush1.msra.mxu0 0.0
    %593 = vmatprep.subr.mxu0 0.0
    %594 = vmatpush1.msra.mxu0 0.0
    %595 = vmatprep.subr.mxu0 0.0
    %596 = vmatpush1.msra.mxu0 0.0
    %597 = vmatprep.subr.mxu0 0.0
    %598 = vmatpush1.msra.mxu0 0.0
    %599 = vmatprep.subr.mxu0 0.0
    %600 = vmatpush1.msra.mxu0 0.0
    %601 = vmatprep.subr.mxu0 0.0
    %602 = vmatpush1.msra.mxu0 0.0
    %603 = vmatprep.subr.mxu0 0.0
    %604 = vmatpush1.msra.mxu0 0.0
    %605 = vmatprep.subr.mxu0 0.0
    %606 = vmatpush1.msra.mxu0 0.0
    %607 = vmatprep.subr.mxu0 0.0
    %608 = vmatpush1.msra.mxu0 0.0
    %609 = vmatprep.subr.mxu0 0.0
    %610 = vmatpush1.msra.mxu0 0.0
    %611 = vmatprep.subr.mxu0 0.0
    %612 = vmatpush1.msra.mxu0 0.0
    %613 = vmatprep.subr.mxu0 0.0
    %614 = vmatpush1.msra.mxu0 0.0
    %615 = vmatprep.subr.mxu0 0.0
    %616 = vmatpush1.msra.mxu0 0.0
    %617 = vmatprep.subr.mxu0 0.0
    %618 = vmatpush1.msra.mxu0 0.0
    %619 = vmatprep.subr.mxu0 0.0
    %620 = vmatpush1.msra.mxu0 0.0
    %621 = vmatprep.subr.mxu0 0.0
    %622 = vmatpush1.msra.mxu0 0.0
    %623 = vmatprep.subr.mxu0 0.0
    %624 = vmatpush1.msra.mxu0 0.0
    %625 = vmatprep.subr.mxu0 0.0
    %626 = vmatpush1.msra.mxu0 0.0
    %627 = vmatprep.mubr.f32.mxu0 0.0
    %628 = vmatmul.mubr.f32.gmra.mrb[0].mxu0 %v427
    %v629 = vpop.f32.mrb[0].mxu0
    %v630 = vadd.f32 %v380, %v629
    %v631 = vpop.f32.mrb[0].mxu0
    %v632 = vadd.f32 %v382, %v631
    %633 = vmatprep.mubr.f32.mxu0 0.0
    %634 = vmatmul.mubr.f32.gmra.mrb[0].mxu0 %v430
    %v635 = vpop.f32.mrb[0].mxu0
    %v636 = vadd.f32 %v386, %v635
    %v637 = vpop.f32.mrb[0].mxu0
    %v638 = vadd.f32 %v388, %v637
    %639 = vmatprep.mubr.f32.mxu0 0.0
    %640 = vmatmul.mubr.f32.gmra.mrb[0].mxu0 %v433
    %v641 = vpop.f32.mrb[0].mxu0
    %v642 = vadd.f32 %v392, %v641
    %v643 = vpop.f32.mrb[0].mxu0
    %v644 = vadd.f32 %v394, %v643
    %645 = vmatprep.mubr.f32.mxu0 0.0
    %646 = vmatmul.mubr.f32.gmra.mrb[0].mxu0 %v436
    %v647 = vpop.f32.mrb[0].mxu0
    %v648 = vadd.f32 %v398, %v647
    %v649 = vpop.f32.mrb[0].mxu0
    %v650 = vadd.f32 %v400, %v649
    %651 = vmatprep.mubr.f32.mxu0 0.0
    %652 = vmatmul.mubr.f32.gmra.mrb[0].mxu0 %v439
    %v653 = vpop.f32.mrb[0].mxu0
    %v654 = vadd.f32 %v404, %v653
    %v655 = vpop.f32.mrb[0].mxu0
    %v656 = vadd.f32 %v406, %v655
    %657 = vmatprep.mubr.f32.mxu0 0.0
    %658 = vmatmul.mubr.f32.gmra.mrb[0].mxu0 %v442
    %v659 = vpop.f32.mrb[0].mxu0
    %v660 = vadd.f32 %v410, %v659
    %v661 = vpop.f32.mrb[0].mxu0
    %v662 = vadd.f32 %v412, %v661
    %663 = vmatprep.mubr.f32.mxu0 0.0
    %664 = vmatmul.mubr.f32.gmra.mrb[0].mxu0 %v445
    %v665 = vpop.f32.mrb[0].mxu0
    %v666 = vadd.f32 %v416, %v665
    %v667 = vpop.f32.mrb[0].mxu0
    %v668 = vadd.f32 %v418, %v667
    %669 = vmatprep.mubr.f32.mxu0 0.0
    %670 = vmatmul.mubr.f32.gmra.mrb[0].mxu0 %v448
    %v671 = vpop.f32.mrb[0].mxu0
    %v672 = vadd.f32 %v422, %v671
    %v673 = vpop.f32.mrb[0].mxu0
    %v674 = vadd.f32 %v424, %v673
    %675 = vdwg.mxu0
    %676 = vst [vmem:[#allocation2] sm:$0xff] %v517
    %677 = vst [vmem:[#allocation2 + $0x8] sm:$0xff] %v519
    %678 = vst [vmem:[#allocation2 + $0x10] sm:$0xff] %v630
    %679 = vst [vmem:[#allocation2 + $0x18] sm:$0xff] %v632
    %680 = vst [vmem:[#allocation2 + $0x20] sm:$0xff] %v523
    %681 = vst [vmem:[#allocation2 + $0x28] sm:$0xff] %v525
    %682 = vst [vmem:[#allocation2 + $0x30] sm:$0xff] %v636
    %683 = vst [vmem:[#allocation2 + $0x38] sm:$0xff] %v638
    %684 = vst [vmem:[#allocation2 + $0x40] sm:$0xff] %v529
    %685 = vst [vmem:[#allocation2 + $0x48] sm:$0xff] %v531
    %686 = vst [vmem:[#allocation2 + $0x50] sm:$0xff] %v642
    %687 = vst [vmem:[#allocation2 + $0x58] sm:$0xff] %v644
    %688 = vst [vmem:[#allocation2 + $0x60] sm:$0xff] %v535
    %689 = vst [vmem:[#allocation2 + $0x68] sm:$0xff] %v537
    %690 = vst [vmem:[#allocation2 + $0x70] sm:$0xff] %v648
    %691 = vst [vmem:[#allocation2 + $0x78] sm:$0xff] %v650
    %692 = vst [vmem:[#allocation2 + $0x80] sm:$0xff] %v541
    %693 = vst [vmem:[#allocation2 + $0x88] sm:$0xff] %v543
    %694 = vst [vmem:[#allocation2 + $0x90] sm:$0xff] %v654
    %695 = vst [vmem:[#allocation2 + $0x98] sm:$0xff] %v656
    %696 = vst [vmem:[#allocation2 + $0xa0] sm:$0xff] %v547
    %697 = vst [vmem:[#allocation2 + $0xa8] sm:$0xff] %v549
    %698 = vst [vmem:[#allocation2 + $0xb0] sm:$0xff] %v660
    %699 = vst [vmem:[#allocation2 + $0xb8] sm:$0xff] %v662
    %700 = vst [vmem:[#allocation2 + $0xc0] sm:$0xff] %v553
    %701 = vst [vmem:[#allocation2 + $0xc8] sm:$0xff] %v555
    %702 = vst [vmem:[#allocation2 + $0xd0] sm:$0xff] %v666
    %703 = vst [vmem:[#allocation2 + $0xd8] sm:$0xff] %v668
    %704 = vst [vmem:[#allocation2 + $0xe0] sm:$0xff] %v559
    %705 = vst [vmem:[#allocation2 + $0xe8] sm:$0xff] %v561
    %706 = vst [vmem:[#allocation2 + $0xf0] sm:$0xff] %v672
    %707 = vst [vmem:[#allocation2 + $0xf8] sm:$0xff] %v674
    %v708 = vld [vmem:[%s2] sm:$0xff]
    %v709 = vld [vmem:[%s3] sm:$0xff]
    %v710 = vld [vmem:[#allocation2] sm:$0xff]
    %v711 = vld [vmem:[#allocation2 + $0x8] sm:$0xff]
    %v712 = vld [vmem:[#allocation2 + $0x10] sm:$0xff]
    %v713 = vld [vmem:[#allocation2 + $0x18] sm:$0xff]
    %v714 = vld [vmem:[#allocation3] sm:$0xff]
    %v715 = vld [vmem:[#allocation3 + $0x8] sm:$0xff]
    %v716 = vld [vmem:[#allocation3 + $0x10] sm:$0xff]
    %v717 = vld [vmem:[#allocation3 + $0x18] sm:$0xff]
    %v718 = vld [vmem:[#allocation3 + $0x20] sm:$0xff]
    %v719 = vld [vmem:[#allocation3 + $0x28] sm:$0xff]
    %v720 = vld [vmem:[#allocation3 + $0x30] sm:$0xff]
    %v721 = vld [vmem:[#allocation3 + $0x38] sm:$0xff]
    %v722 = vld [vmem:[#allocation3 + $0x40] sm:$0xff]
    %v723 = vld [vmem:[#allocation3 + $0x48] sm:$0xff]
    %v724 = vld [vmem:[#allocation3 + $0x50] sm:$0xff]
    %v725 = vld [vmem:[#allocation3 + $0x58] sm:$0xff]
    %v726 = vld [vmem:[#allocation3 + $0x60] sm:$0xff]
    %v727 = vld [vmem:[#allocation3 + $0x68] sm:$0xff]
    %v728 = vld [vmem:[#allocation3 + $0x70] sm:$0xff]
    %v729 = vld [vmem:[#allocation3 + $0x78] sm:$0xff]
    %v730 = vld [vmem:[#allocation3 + $0x80] sm:$0xff]
    %v731 = vld [vmem:[#allocation3 + $0x88] sm:$0xff]
    %v732 = vld [vmem:[#allocation3 + $0x90] sm:$0xff]
    %v733 = vld [vmem:[#allocation3 + $0x98] sm:$0xff]
    %v734 = vld [vmem:[#allocation3 + $0xa0] sm:$0xff]
    %v735 = vld [vmem:[#allocation3 + $0xa8] sm:$0xff]
    %v736 = vld [vmem:[#allocation3 + $0xb0] sm:$0xff]
    %v737 = vld [vmem:[#allocation3 + $0xb8] sm:$0xff]
    %v738 = vld [vmem:[#allocation3 + $0xc0] sm:$0xff]
    %v739 = vld [vmem:[#allocation3 + $0xc8] sm:$0xff]
    %v740 = vld [vmem:[#allocation3 + $0xd0] sm:$0xff]
    %v741 = vld [vmem:[#allocation3 + $0xd8] sm:$0xff]
    %v742 = vld [vmem:[#allocation3 + $0xe0] sm:$0xff]
    %v743 = vld [vmem:[#allocation3 + $0xe8] sm:$0xff]
    %v744 = vld [vmem:[#allocation3 + $0xf0] sm:$0xff]
    %v745 = vld [vmem:[#allocation3 + $0xf8] sm:$0xff]
    %v746 = vld [vmem:[#allocation3 + $0x100] sm:$0xff]
    %v747 = vld [vmem:[#allocation3 + $0x108] sm:$0xff]
    %v748 = vld [vmem:[#allocation3 + $0x110] sm:$0xff]
    %v749 = vld [vmem:[#allocation3 + $0x118] sm:$0xff]
    %v750 = vld [vmem:[#allocation3 + $0x120] sm:$0xff]
    %v751 = vld [vmem:[#allocation3 + $0x128] sm:$0xff]
    %v752 = vld [vmem:[#allocation3 + $0x130] sm:$0xff]
    %v753 = vld [vmem:[#allocation3 + $0x138] sm:$0xff]
    %v754 = vld [vmem:[#allocation3 + $0x140] sm:$0xff]
    %v755 = vld [vmem:[#allocation3 + $0x148] sm:$0xff]
    %v756 = vld [vmem:[#allocation3 + $0x150] sm:$0xff]
    %v757 = vld [vmem:[#allocation3 + $0x158] sm:$0xff]
    %v758 = vld [vmem:[#allocation3 + $0x160] sm:$0xff]
    %v759 = vld [vmem:[#allocation3 + $0x168] sm:$0xff]
    %v760 = vld [vmem:[#allocation3 + $0x170] sm:$0xff]
    %v761 = vld [vmem:[#allocation3 + $0x178] sm:$0xff]
    %v762 = vld [vmem:[#allocation3 + $0x180] sm:$0xff]
    %v763 = vld [vmem:[#allocation3 + $0x188] sm:$0xff]
    %v764 = vld [vmem:[#allocation3 + $0x190] sm:$0xff]
    %v765 = vld [vmem:[#allocation3 + $0x198] sm:$0xff]
    %v766 = vld [vmem:[#allocation3 + $0x1a0] sm:$0xff]
    %v767 = vld [vmem:[#allocation3 + $0x1a8] sm:$0xff]
    %v768 = vld [vmem:[#allocation3 + $0x1b0] sm:$0xff]
    %v769 = vld [vmem:[#allocation3 + $0x1b8] sm:$0xff]
    %v770 = vld [vmem:[#allocation3 + $0x1c0] sm:$0xff]
    %v771 = vld [vmem:[#allocation3 + $0x1c8] sm:$0xff]
    %v772 = vld [vmem:[#allocation3 + $0x1d0] sm:$0xff]
    %v773 = vld [vmem:[#allocation3 + $0x1d8] sm:$0xff]
    %v774 = vld [vmem:[#allocation3 + $0x1e0] sm:$0xff]
    %v775 = vld [vmem:[#allocation3 + $0x1e8] sm:$0xff]
    %v776 = vld [vmem:[#allocation3 + $0x1f0] sm:$0xff]
    %v777 = vld [vmem:[#allocation3 + $0x1f8] sm:$0xff]
    %778 = vmatprep.subr.mxu0 %v715
    %779 = vmatpush1.msra.mxu0 %v714
    %780 = vmatprep.subr.mxu0 %v719
    %781 = vmatpush1.msra.mxu0 %v718
    %782 = vmatprep.subr.mxu0 %v723
    %783 = vmatpush1.msra.mxu0 %v722
    %784 = vmatprep.subr.mxu0 %v727
    %785 = vmatpush1.msra.mxu0 %v726
    %786 = vmatprep.subr.mxu0 %v731
    %787 = vmatpush1.msra.mxu0 %v730
    %788 = vmatprep.subr.mxu0 %v735
    %789 = vmatpush1.msra.mxu0 %v734
    %790 = vmatprep.subr.mxu0 %v739
    %791 = vmatpush1.msra.mxu0 %v738
    %792 = vmatprep.subr.mxu0 %v743
    %793 = vmatpush1.msra.mxu0 %v742
    %794 = vmatprep.subr.mxu0 %v747
    %795 = vmatpush1.msra.mxu0 %v746
    %796 = vmatprep.subr.mxu0 %v751
    %797 = vmatpush1.msra.mxu0 %v750
    %798 = vmatprep.subr.mxu0 %v755
    %799 = vmatpush1.msra.mxu0 %v754
    %800 = vmatprep.subr.mxu0 %v759
    %801 = vmatpush1.msra.mxu0 %v758
    %802 = vmatprep.subr.mxu0 %v763
    %803 = vmatpush1.msra.mxu0 %v762
    %804 = vmatprep.subr.mxu0 %v767
    %805 = vmatpush1.msra.mxu0 %v766
    %806 = vmatprep.subr.mxu0 %v771
    %807 = vmatpush1.msra.mxu0 %v770
    %808 = vmatprep.subr.mxu0 %v775
    %809 = vmatpush1.msra.mxu0 %v774
    %810 = vmatprep.subr.mxu0 0.0
    %811 = vmatpush1.msra.mxu0 0.0
    %812 = vmatprep.subr.mxu0 0.0
    %813 = vmatpush1.msra.mxu0 0.0
    %814 = vmatprep.subr.mxu0 0.0
    %815 = vmatpush1.msra.mxu0 0.0
    %816 = vmatprep.subr.mxu0 0.0
    %817 = vmatpush1.msra.mxu0 0.0
    %818 = vmatprep.subr.mxu0 0.0
    %819 = vmatpush1.msra.mxu0 0.0
    %820 = vmatprep.subr.mxu0 0.0
    %821 = vmatpush1.msra.mxu0 0.0
    %822 = vmatprep.subr.mxu0 0.0
    %823 = vmatpush1.msra.mxu0 0.0
    %824 = vmatprep.subr.mxu0 0.0
    %825 = vmatpush1.msra.mxu0 0.0
    %826 = vmatprep.subr.mxu0 0.0
    %827 = vmatpush1.msra.mxu0 0.0
    %828 = vmatprep.subr.mxu0 0.0
    %829 = vmatpush1.msra.mxu0 0.0
    %830 = vmatprep.subr.mxu0 0.0
    %831 = vmatpush1.msra.mxu0 0.0
    %832 = vmatprep.subr.mxu0 0.0
    %833 = vmatpush1.msra.mxu0 0.0
    %834 = vmatprep.subr.mxu0 0.0
    %835 = vmatpush1.msra.mxu0 0.0
    %836 = vmatprep.subr.mxu0 0.0
    %837 = vmatpush1.msra.mxu0 0.0
    %838 = vmatprep.subr.mxu0 0.0
    %839 = vmatpush1.msra.mxu0 0.0
    %840 = vmatprep.subr.mxu0 0.0
    %841 = vmatpush1.msra.mxu0 0.0
    %842 = vmatprep.mubr.f32.mxu0 0.0
    %843 = vmatmul.mubr.f32.gmra.mrb[0].mxu0 %v708
    %v844 = vpop.f32.mrb[0].mxu0
    %v845 = vadd.f32 0.0, %v844
    %v846 = vpop.f32.mrb[0].mxu0
    %v847 = vadd.f32 0.0, %v846
    %848 = vdwg.mxu0
    %849 = vmatprep.subr.mxu0 %v717
    %850 = vmatpush1.msra.mxu0 %v716
    %851 = vmatprep.subr.mxu0 %v721
    %852 = vmatpush1.msra.mxu0 %v720
    %853 = vmatprep.subr.mxu0 %v725
    %854 = vmatpush1.msra.mxu0 %v724
    %855 = vmatprep.subr.mxu0 %v729
    %856 = vmatpush1.msra.mxu0 %v728
    %857 = vmatprep.subr.mxu0 %v733
    %858 = vmatpush1.msra.mxu0 %v732
    %859 = vmatprep.subr.mxu0 %v737
    %860 = vmatpush1.msra.mxu0 %v736
    %861 = vmatprep.subr.mxu0 %v741
    %862 = vmatpush1.msra.mxu0 %v740
    %863 = vmatprep.subr.mxu0 %v745
    %864 = vmatpush1.msra.mxu0 %v744
    %865 = vmatprep.subr.mxu0 %v749
    %866 = vmatpush1.msra.mxu0 %v748
    %867 = vmatprep.subr.mxu0 %v753
    %868 = vmatpush1.msra.mxu0 %v752
    %869 = vmatprep.subr.mxu0 %v757
    %870 = vmatpush1.msra.mxu0 %v756
    %871 = vmatprep.subr.mxu0 %v761
    %872 = vmatpush1.msra.mxu0 %v760
    %873 = vmatprep.subr.mxu0 %v765
    %874 = vmatpush1.msra.mxu0 %v764
    %875 = vmatprep.subr.mxu0 %v769
    %876 = vmatpush1.msra.mxu0 %v768
    %877 = vmatprep.subr.mxu0 %v773
    %878 = vmatpush1.msra.mxu0 %v772
    %879 = vmatprep.subr.mxu0 %v777
    %880 = vmatpush1.msra.mxu0 %v776
    %881 = vmatprep.subr.mxu0 0.0
    %882 = vmatpush1.msra.mxu0 0.0
    %883 = vmatprep.subr.mxu0 0.0
    %884 = vmatpush1.msra.mxu0 0.0
    %885 = vmatprep.subr.mxu0 0.0
    %886 = vmatpush1.msra.mxu0 0.0
    %887 = vmatprep.subr.mxu0 0.0
    %888 = vmatpush1.msra.mxu0 0.0
    %889 = vmatprep.subr.mxu0 0.0
    %890 = vmatpush1.msra.mxu0 0.0
    %891 = vmatprep.subr.mxu0 0.0
    %892 = vmatpush1.msra.mxu0 0.0
    %893 = vmatprep.subr.mxu0 0.0
    %894 = vmatpush1.msra.mxu0 0.0
    %895 = vmatprep.subr.mxu0 0.0
    %896 = vmatpush1.msra.mxu0 0.0
    %897 = vmatprep.subr.mxu0 0.0
    %898 = vmatpush1.msra.mxu0 0.0
    %899 = vmatprep.subr.mxu0 0.0
    %900 = vmatpush1.msra.mxu0 0.0
    %901 = vmatprep.subr.mxu0 0.0
    %902 = vmatpush1.msra.mxu0 0.0
    %903 = vmatprep.subr.mxu0 0.0
    %904 = vmatpush1.msra.mxu0 0.0
    %905 = vmatprep.subr.mxu0 0.0
    %906 = vmatpush1.msra.mxu0 0.0
    %907 = vmatprep.subr.mxu0 0.0
    %908 = vmatpush1.msra.mxu0 0.0
    %909 = vmatprep.subr.mxu0 0.0
    %910 = vmatpush1.msra.mxu0 0.0
    %911 = vmatprep.subr.mxu0 0.0
    %912 = vmatpush1.msra.mxu0 0.0
    %913 = vmatprep.mubr.f32.mxu0 0.0
    %914 = vmatmul.mubr.f32.gmra.mrb[0].mxu0 %v708
    %v915 = vpop.f32.mrb[0].mxu0
    %v916 = vadd.f32 0.0, %v915
    %v917 = vpop.f32.mrb[0].mxu0
    %v918 = vadd.f32 0.0, %v917
    %919 = vdwg.mxu0
    %v920 = vadd.f32 %v710, %v845
    %v921 = vadd.f32 %v711, %v847
    %v922 = vadd.f32 %v712, %v916
    %v923 = vadd.f32 %v713, %v918
    %v924 = vmul.f32 %v920, 0.5
    %v925 = vtanh.pop %v924
    %v926 = vmul.f32 %v925, 0.5
    %v927 = vadd.f32 %v926, 0.5
    %v928 = vmul.f32 %v921, 0.5
    %v929 = vtanh.pop %v928
    %v930 = vmul.f32 %v929, 0.5
    %v931 = vadd.f32 %v930, 0.5
    %v932 = vtanh.pop %v922
    %v933 = vmul.f32 %v923, 0.5
    %v934 = vtanh.pop %v933
    %v935 = vmul.f32 %v934, 0.5
    %v936 = vadd.f32 %v935, 0.5
    %v937 = vmul.f32 %v931, %v709
    %v938 = vmul.f32 %v927, %v932
    %v939 = vadd.f32 %v937, %v938
    %v940 = vtanh.pop %v939
    %v941 = vmul.f32 %v936, %v940
    %vm942 = vcmask 402432
    %943 = vst.msk [vmem:[#allocation6] sm:$0x3] %vm942, %v941
    %s944 = scalar_lea.vmem [#allocation2], 32
    %v945 = vld [vmem:[%s944] sm:$0xff]
    %v946 = vld [vmem:[%s944 + $0x8] sm:$0xff]
    %v947 = vld [vmem:[%s944 + $0x10] sm:$0xff]
    %v948 = vld [vmem:[%s944 + $0x18] sm:$0xff]
    %v949 = vld [vmem:[#allocation3] sm:$0xff]
    %v950 = vld [vmem:[#allocation3 + $0x8] sm:$0xff]
    %v951 = vld [vmem:[#allocation3 + $0x10] sm:$0xff]
    %v952 = vld [vmem:[#allocation3 + $0x18] sm:$0xff]
    %v953 = vld [vmem:[#allocation3 + $0x20] sm:$0xff]
    %v954 = vld [vmem:[#allocation3 + $0x28] sm:$0xff]
    %v955 = vld [vmem:[#allocation3 + $0x30] sm:$0xff]
    %v956 = vld [vmem:[#allocation3 + $0x38] sm:$0xff]
    %v957 = vld [vmem:[#allocation3 + $0x40] sm:$0xff]
    %v958 = vld [vmem:[#allocation3 + $0x48] sm:$0xff]
    %v959 = vld [vmem:[#allocation3 + $0x50] sm:$0xff]
    %v960 = vld [vmem:[#allocation3 + $0x58] sm:$0xff]
    %v961 = vld [vmem:[#allocation3 + $0x60] sm:$0xff]
    %v962 = vld [vmem:[#allocation3 + $0x68] sm:$0xff]
    %v963 = vld [vmem:[#allocation3 + $0x70] sm:$0xff]
    %v964 = vld [vmem:[#allocation3 + $0x78] sm:$0xff]
    %v965 = vld [vmem:[#allocation3 + $0x80] sm:$0xff]
    %v966 = vld [vmem:[#allocation3 + $0x88] sm:$0xff]
    %v967 = vld [vmem:[#allocation3 + $0x90] sm:$0xff]
    %v968 = vld [vmem:[#allocation3 + $0x98] sm:$0xff]
    %v969 = vld [vmem:[#allocation3 + $0xa0] sm:$0xff]
    %v970 = vld [vmem:[#allocation3 + $0xa8] sm:$0xff]
    %v971 = vld [vmem:[#allocation3 + $0xb0] sm:$0xff]
    %v972 = vld [vmem:[#allocation3 + $0xb8] sm:$0xff]
    %v973 = vld [vmem:[#allocation3 + $0xc0] sm:$0xff]
    %v974 = vld [vmem:[#allocation3 + $0xc8] sm:$0xff]
    %v975 = vld [vmem:[#allocation3 + $0xd0] sm:$0xff]
    %v976 = vld [vmem:[#allocation3 + $0xd8] sm:$0xff]
    %v977 = vld [vmem:[#allocation3 + $0xe0] sm:$0xff]
    %v978 = vld [vmem:[#allocation3 + $0xe8] sm:$0xff]
    %v979 = vld [vmem:[#allocation3 + $0xf0] sm:$0xff]
    %v980 = vld [vmem:[#allocation3 + $0xf8] sm:$0xff]
    %v981 = vld [vmem:[#allocation3 + $0x100] sm:$0xff]
    %v982 = vld [vmem:[#allocation3 + $0x108] sm:$0xff]
    %v983 = vld [vmem:[#allocation3 + $0x110] sm:$0xff]
    %v984 = vld [vmem:[#allocation3 + $0x118] sm:$0xff]
    %v985 = vld [vmem:[#allocation3 + $0x120] sm:$0xff]
    %v986 = vld [vmem:[#allocation3 + $0x128] sm:$0xff]
    %v987 = vld [vmem:[#allocation3 + $0x130] sm:$0xff]
    %v988 = vld [vmem:[#allocation3 + $0x138] sm:$0xff]
    %v989 = vld [vmem:[#allocation3 + $0x140] sm:$0xff]
    %v990 = vld [vmem:[#allocation3 + $0x148] sm:$0xff]
    %v991 = vld [vmem:[#allocation3 + $0x150] sm:$0xff]
    %v992 = vld [vmem:[#allocation3 + $0x158] sm:$0xff]
    %v993 = vld [vmem:[#allocation3 + $0x160] sm:$0xff]
    %v994 = vld [vmem:[#allocation3 + $0x168] sm:$0xff]
    %v995 = vld [vmem:[#allocation3 + $0x170] sm:$0xff]
    %v996 = vld [vmem:[#allocation3 + $0x178] sm:$0xff]
    %v997 = vld [vmem:[#allocation3 + $0x180] sm:$0xff]
    %v998 = vld [vmem:[#allocation3 + $0x188] sm:$0xff]
    %v999 = vld [vmem:[#allocation3 + $0x190] sm:$0xff]
    %v1000 = vld [vmem:[#allocation3 + $0x198] sm:$0xff]
    %v1001 = vld [vmem:[#allocation3 + $0x1a0] sm:$0xff]
    %v1002 = vld [vmem:[#allocation3 + $0x1a8] sm:$0xff]
    %v1003 = vld [vmem:[#allocation3 + $0x1b0] sm:$0xff]
    %v1004 = vld [vmem:[#allocation3 + $0x1b8] sm:$0xff]
    %v1005 = vld [vmem:[#allocation3 + $0x1c0] sm:$0xff]
    %v1006 = vld [vmem:[#allocation3 + $0x1c8] sm:$0xff]
    %v1007 = vld [vmem:[#allocation3 + $0x1d0] sm:$0xff]
    %v1008 = vld [vmem:[#allocation3 + $0x1d8] sm:$0xff]
    %v1009 = vld [vmem:[#allocation3 + $0x1e0] sm:$0xff]
    %v1010 = vld [vmem:[#allocation3 + $0x1e8] sm:$0xff]
    %v1011 = vld [vmem:[#allocation3 + $0x1f0] sm:$0xff]
    %v1012 = vld [vmem:[#allocation3 + $0x1f8] sm:$0xff]
    %1013 = vmatprep.subr.mxu0 %v950
    %1014 = vmatpush1.msra.mxu0 %v949
    %1015 = vmatprep.subr.mxu0 %v954
    %1016 = vmatpush1.msra.mxu0 %v953
    %1017 = vmatprep.subr.mxu0 %v958
    %1018 = vmatpush1.msra.mxu0 %v957
    %1019 = vmatprep.subr.mxu0 %v962
    %1020 = vmatpush1.msra.mxu0 %v961
    %1021 = vmatprep.subr.mxu0 %v966
    %1022 = vmatpush1.msra.mxu0 %v965
    %1023 = vmatprep.subr.mxu0 %v970
    %1024 = vmatpush1.msra.mxu0 %v969
    %1025 = vmatprep.subr.mxu0 %v974
    %1026 = vmatpush1.msra.mxu0 %v973
    %1027 = vmatprep.subr.mxu0 %v978
    %1028 = vmatpush1.msra.mxu0 %v977
    %1029 = vmatprep.subr.mxu0 %v982
    %1030 = vmatpush1.msra.mxu0 %v981
    %1031 = vmatprep.subr.mxu0 %v986
    %1032 = vmatpush1.msra.mxu0 %v985
    %1033 = vmatprep.subr.mxu0 %v990
    %1034 = vmatpush1.msra.mxu0 %v989
    %1035 = vmatprep.subr.mxu0 %v994
    %1036 = vmatpush1.msra.mxu0 %v993
    %1037 = vmatprep.subr.mxu0 %v998
    %1038 = vmatpush1.msra.mxu0 %v997
    %1039 = vmatprep.subr.mxu0 %v1002
    %1040 = vmatpush1.msra.mxu0 %v1001
    %1041 = vmatprep.subr.mxu0 %v1006
    %1042 = vmatpush1.msra.mxu0 %v1005
    %1043 = vmatprep.subr.mxu0 %v1010
    %1044 = vmatpush1.msra.mxu0 %v1009
    %1045 = vmatprep.subr.mxu0 0.0
    %1046 = vmatpush1.msra.mxu0 0.0
    %1047 = vmatprep.subr.mxu0 0.0
    %1048 = vmatpush1.msra.mxu0 0.0
    %1049 = vmatprep.subr.mxu0 0.0
    %1050 = vmatpush1.msra.mxu0 0.0
    %1051 = vmatprep.subr.mxu0 0.0
    %1052 = vmatpush1.msra.mxu0 0.0
    %1053 = vmatprep.subr.mxu0 0.0
    %1054 = vmatpush1.msra.mxu0 0.0
    %1055 = vmatprep.subr.mxu0 0.0
    %1056 = vmatpush1.msra.mxu0 0.0
    %1057 = vmatprep.subr.mxu0 0.0
    %1058 = vmatpush1.msra.mxu0 0.0
    %1059 = vmatprep.subr.mxu0 0.0
    %1060 = vmatpush1.msra.mxu0 0.0
    %1061 = vmatprep.subr.mxu0 0.0
    %1062 = vmatpush1.msra.mxu0 0.0
    %1063 = vmatprep.subr.mxu0 0.0
    %1064 = vmatpush1.msra.mxu0 0.0
    %1065 = vmatprep.subr.mxu0 0.0
    %1066 = vmatpush1.msra.mxu0 0.0
    %1067 = vmatprep.subr.mxu0 0.0
    %1068 = vmatpush1.msra.mxu0 0.0
    %1069 = vmatprep.subr.mxu0 0.0
    %1070 = vmatpush1.msra.mxu0 0.0
    %1071 = vmatprep.subr.mxu0 0.0
    %1072 = vmatpush1.msra.mxu0 0.0
    %1073 = vmatprep.subr.mxu0 0.0
    %1074 = vmatpush1.msra.mxu0 0.0
    %1075 = vmatprep.subr.mxu0 0.0
    %1076 = vmatpush1.msra.mxu0 0.0
    %1077 = vmatprep.mubr.f32.mxu0 0.0
    %1078 = vmatmul.mubr.f32.gmra.mrb[0].mxu0 %v941
    %v1079 = vpop.f32.mrb[0].mxu0
    %v1080 = vadd.f32 0.0, %v1079
    %v1081 = vpop.f32.mrb[0].mxu0
    %v1082 = vadd.f32 0.0, %v1081
    %1083 = vdwg.mxu0
    %1084 = vmatprep.subr.mxu0 %v952
    %1085 = vmatpush1.msra.mxu0 %v951
    %1086 = vmatprep.subr.mxu0 %v956
    %1087 = vmatpush1.msra.mxu0 %v955
    %1088 = vmatprep.subr.mxu0 %v960
    %1089 = vmatpush1.msra.mxu0 %v959
    %1090 = vmatprep.subr.mxu0 %v964
    %1091 = vmatpush1.msra.mxu0 %v963
    %1092 = vmatprep.subr.mxu0 %v968
    %1093 = vmatpush1.msra.mxu0 %v967
    %1094 = vmatprep.subr.mxu0 %v972
    %1095 = vmatpush1.msra.mxu0 %v971
    %1096 = vmatprep.subr.mxu0 %v976
    %1097 = vmatpush1.msra.mxu0 %v975
    %1098 = vmatprep.subr.mxu0 %v980
    %1099 = vmatpush1.msra.mxu0 %v979
    %1100 = vmatprep.subr.mxu0 %v984
    %1101 = vmatpush1.msra.mxu0 %v983
    %1102 = vmatprep.subr.mxu0 %v988
    %1103 = vmatpush1.msra.mxu0 %v987
    %1104 = vmatprep.subr.mxu0 %v992
    %1105 = vmatpush1.msra.mxu0 %v991
    %1106 = vmatprep.subr.mxu0 %v996
    %1107 = vmatpush1.msra.mxu0 %v995
    %1108 = vmatprep.subr.mxu0 %v1000
    %1109 = vmatpush1.msra.mxu0 %v999
    %1110 = vmatprep.subr.mxu0 %v1004
    %1111 = vmatpush1.msra.mxu0 %v1003
    %1112 = vmatprep.subr.mxu0 %v1008
    %1113 = vmatpush1.msra.mxu0 %v1007
    %1114 = vmatprep.subr.mxu0 %v1012
    %1115 = vmatpush1.msra.mxu0 %v1011
    %1116 = vmatprep.subr.mxu0 0.0
    %1117 = vmatpush1.msra.mxu0 0.0
    %1118 = vmatprep.subr.mxu0 0.0
    %1119 = vmatpush1.msra.mxu0 0.0
    %1120 = vmatprep.subr.mxu0 0.0
    %1121 = vmatpush1.msra.mxu0 0.0
    %1122 = vmatprep.subr.mxu0 0.0
    %1123 = vmatpush1.msra.mxu0 0.0
    %1124 = vmatprep.subr.mxu0 0.0
    %1125 = vmatpush1.msra.mxu0 0.0
    %1126 = vmatprep.subr.mxu0 0.0
    %1127 = vmatpush1.msra.mxu0 0.0
    %1128 = vmatprep.subr.mxu0 0.0
    %1129 = vmatpush1.msra.mxu0 0.0
    %1130 = vmatprep.subr.mxu0 0.0
    %1131 = vmatpush1.msra.mxu0 0.0
    %1132 = vmatprep.subr.mxu0 0.0
    %1133 = vmatpush1.msra.mxu0 0.0
    %1134 = vmatprep.subr.mxu0 0.0
    %1135 = vmatpush1.msra.mxu0 0.0
    %1136 = vmatprep.subr.mxu0 0.0
    %1137 = vmatpush1.msra.mxu0 0.0
    %1138 = vmatprep.subr.mxu0 0.0
    %1139 = vmatpush1.msra.mxu0 0.0
    %1140 = vmatprep.subr.mxu0 0.0
    %1141 = vmatpush1.msra.mxu0 0.0
    %1142 = vmatprep.subr.mxu0 0.0
    %1143 = vmatpush1.msra.mxu0 0.0
    %1144 = vmatprep.subr.mxu0 0.0
    %1145 = vmatpush1.msra.mxu0 0.0
    %1146 = vmatprep.subr.mxu0 0.0
    %1147 = vmatpush1.msra.mxu0 0.0
    %1148 = vmatprep.mubr.f32.mxu0 0.0
    %1149 = vmatmul.mubr.f32.gmra.mrb[0].mxu0 %v941
    %v1150 = vpop.f32.mrb[0].mxu0
    %v1151 = vadd.f32 0.0, %v1150
    %v1152 = vpop.f32.mrb[0].mxu0
    %v1153 = vadd.f32 0.0, %v1152
    %1154 = vdwg.mxu0
    %v1155 = vadd.f32 %v945, %v1080
    %v1156 = vadd.f32 %v946, %v1082
    %v1157 = vadd.f32 %v947, %v1151
    %v1158 = vadd.f32 %v948, %v1153
    %v1159 = vmul.f32 %v1155, 0.5
    %v1160 = vtanh.pop %v1159
    %v1161 = vmul.f32 %v1160, 0.5
    %v1162 = vadd.f32 %v1161, 0.5
    %v1163 = vmul.f32 %v1156, 0.5
    %v1164 = vtanh.pop %v1163
    %v1165 = vmul.f32 %v1164, 0.5
    %v1166 = vadd.f32 %v1165, 0.5
    %v1167 = vtanh.pop %v1157
    %v1168 = vmul.f32 %v1158, 0.5
    %v1169 = vtanh.pop %v1168
    %v1170 = vmul.f32 %v1169, 0.5
    %v1171 = vadd.f32 %v1170, 0.5
    %v1172 = vmul.f32 %v1166, %v939
    %v1173 = vmul.f32 %v1162, %v1167
    %v1174 = vadd.f32 %v1172, %v1173
    %v1175 = vtanh.pop %v1174
    %v1176 = vmul.f32 %v1171, %v1175
    %s1177 = scalar_lea.vmem [#allocation6], 2
    %1178 = vst.msk [vmem:[%s1177] sm:$0x3] %vm942, %v1176
    %s1179 = scalar_lea.vmem [#allocation2], 64
    %v1180 = vld [vmem:[%s1179] sm:$0xff]
    %v1181 = vld [vmem:[%s1179 + $0x8] sm:$0xff]
    %v1182 = vld [vmem:[%s1179 + $0x10] sm:$0xff]
    %v1183 = vld [vmem:[%s1179 + $0x18] sm:$0xff]
    %v1184 = vld [vmem:[#allocation3] sm:$0xff]
    %v1185 = vld [vmem:[#allocation3 + $0x8] sm:$0xff]
    %v1186 = vld [vmem:[#allocation3 + $0x10] sm:$0xff]
    %v1187 = vld [vmem:[#allocation3 + $0x18] sm:$0xff]
    %v1188 = vld [vmem:[#allocation3 + $0x20] sm:$0xff]
    %v1189 = vld [vmem:[#allocation3 + $0x28] sm:$0xff]
    %v1190 = vld [vmem:[#allocation3 + $0x30] sm:$0xff]
    %v1191 = vld [vmem:[#allocation3 + $0x38] sm:$0xff]
    %v1192 = vld [vmem:[#allocation3 + $0x40] sm:$0xff]
    %v1193 = vld [vmem:[#allocation3 + $0x48] sm:$0xff]
    %v1194 = vld [vmem:[#allocation3 + $0x50] sm:$0xff]
    %v1195 = vld [vmem:[#allocation3 + $0x58] sm:$0xff]
    %v1196 = vld [vmem:[#allocation3 + $0x60] sm:$0xff]
    %v1197 = vld [vmem:[#allocation3 + $0x68] sm:$0xff]
    %v1198 = vld [vmem:[#allocation3 + $0x70] sm:$0xff]
    %v1199 = vld [vmem:[#allocation3 + $0x78] sm:$0xff]
    %v1200 = vld [vmem:[#allocation3 + $0x80] sm:$0xff]
    %v1201 = vld [vmem:[#allocation3 + $0x88] sm:$0xff]
    %v1202 = vld [vmem:[#allocation3 + $0x90] sm:$0xff]
    %v1203 = vld [vmem:[#allocation3 + $0x98] sm:$0xff]
    %v1204 = vld [vmem:[#allocation3 + $0xa0] sm:$0xff]
    %v1205 = vld [vmem:[#allocation3 + $0xa8] sm:$0xff]
    %v1206 = vld [vmem:[#allocation3 + $0xb0] sm:$0xff]
    %v1207 = vld [vmem:[#allocation3 + $0xb8] sm:$0xff]
    %v1208 = vld [vmem:[#allocation3 + $0xc0] sm:$0xff]
    %v1209 = vld [vmem:[#allocation3 + $0xc8] sm:$0xff]
    %v1210 = vld [vmem:[#allocation3 + $0xd0] sm:$0xff]
    %v1211 = vld [vmem:[#allocation3 + $0xd8] sm:$0xff]
    %v1212 = vld [vmem:[#allocation3 + $0xe0] sm:$0xff]
    %v1213 = vld [vmem:[#allocation3 + $0xe8] sm:$0xff]
    %v1214 = vld [vmem:[#allocation3 + $0xf0] sm:$0xff]
    %v1215 = vld [vmem:[#allocation3 + $0xf8] sm:$0xff]
    %v1216 = vld [vmem:[#allocation3 + $0x100] sm:$0xff]
    %v1217 = vld [vmem:[#allocation3 + $0x108] sm:$0xff]
    %v1218 = vld [vmem:[#allocation3 + $0x110] sm:$0xff]
    %v1219 = vld [vmem:[#allocation3 + $0x118] sm:$0xff]
    %v1220 = vld [vmem:[#allocation3 + $0x120] sm:$0xff]
    %v1221 = vld [vmem:[#allocation3 + $0x128] sm:$0xff]
    %v1222 = vld [vmem:[#allocation3 + $0x130] sm:$0xff]
    %v1223 = vld [vmem:[#allocation3 + $0x138] sm:$0xff]
    %v1224 = vld [vmem:[#allocation3 + $0x140] sm:$0xff]
    %v1225 = vld [vmem:[#allocation3 + $0x148] sm:$0xff]
    %v1226 = vld [vmem:[#allocation3 + $0x150] sm:$0xff]
    %v1227 = vld [vmem:[#allocation3 + $0x158] sm:$0xff]
    %v1228 = vld [vmem:[#allocation3 + $0x160] sm:$0xff]
    %v1229 = vld [vmem:[#allocation3 + $0x168] sm:$0xff]
    %v1230 = vld [vmem:[#allocation3 + $0x170] sm:$0xff]
    %v1231 = vld [vmem:[#allocation3 + $0x178] sm:$0xff]
    %v1232 = vld [vmem:[#allocation3 + $0x180] sm:$0xff]
    %v1233 = vld [vmem:[#allocation3 + $0x188] sm:$0xff]
    %v1234 = vld [vmem:[#allocation3 + $0x190] sm:$0xff]
    %v1235 = vld [vmem:[#allocation3 + $0x198] sm:$0xff]
    %v1236 = vld [vmem:[#allocation3 + $0x1a0] sm:$0xff]
    %v1237 = vld [vmem:[#allocation3 + $0x1a8] sm:$0xff]
    %v1238 = vld [vmem:[#allocation3 + $0x1b0] sm:$0xff]
    %v1239 = vld [vmem:[#allocation3 + $0x1b8] sm:$0xff]
    %v1240 = vld [vmem:[#allocation3 + $0x1c0] sm:$0xff]
    %v1241 = vld [vmem:[#allocation3 + $0x1c8] sm:$0xff]
    %v1242 = vld [vmem:[#allocation3 + $0x1d0] sm:$0xff]
    %v1243 = vld [vmem:[#allocation3 + $0x1d8] sm:$0xff]
    %v1244 = vld [vmem:[#allocation3 + $0x1e0] sm:$0xff]
    %v1245 = vld [vmem:[#allocation3 + $0x1e8] sm:$0xff]
    %v1246 = vld [vmem:[#allocation3 + $0x1f0] sm:$0xff]
    %v1247 = vld [vmem:[#allocation3 + $0x1f8] sm:$0xff]
    %1248 = vmatprep.subr.mxu0 %v1185
    %1249 = vmatpush1.msra.mxu0 %v1184
    %1250 = vmatprep.subr.mxu0 %v1189
    %1251 = vmatpush1.msra.mxu0 %v1188
    %1252 = vmatprep.subr.mxu0 %v1193
    %1253 = vmatpush1.msra.mxu0 %v1192
    %1254 = vmatprep.subr.mxu0 %v1197
    %1255 = vmatpush1.msra.mxu0 %v1196
    %1256 = vmatprep.subr.mxu0 %v1201
    %1257 = vmatpush1.msra.mxu0 %v1200
    %1258 = vmatprep.subr.mxu0 %v1205
    %1259 = vmatpush1.msra.mxu0 %v1204
    %1260 = vmatprep.subr.mxu0 %v1209
    %1261 = vmatpush1.msra.mxu0 %v1208
    %1262 = vmatprep.subr.mxu0 %v1213
    %1263 = vmatpush1.msra.mxu0 %v1212
    %1264 = vmatprep.subr.mxu0 %v1217
    %1265 = vmatpush1.msra.mxu0 %v1216
    %1266 = vmatprep.subr.mxu0 %v1221
    %1267 = vmatpush1.msra.mxu0 %v1220
    %1268 = vmatprep.subr.mxu0 %v1225
    %1269 = vmatpush1.msra.mxu0 %v1224
    %1270 = vmatprep.subr.mxu0 %v1229
    %1271 = vmatpush1.msra.mxu0 %v1228
    %1272 = vmatprep.subr.mxu0 %v1233
    %1273 = vmatpush1.msra.mxu0 %v1232
    %1274 = vmatprep.subr.mxu0 %v1237
    %1275 = vmatpush1.msra.mxu0 %v1236
    %1276 = vmatprep.subr.mxu0 %v1241
    %1277 = vmatpush1.msra.mxu0 %v1240
    %1278 = vmatprep.subr.mxu0 %v1245
    %1279 = vmatpush1.msra.mxu0 %v1244
    %1280 = vmatprep.subr.mxu0 0.0
    %1281 = vmatpush1.msra.mxu0 0.0
    %1282 = vmatprep.subr.mxu0 0.0
    %1283 = vmatpush1.msra.mxu0 0.0
    %1284 = vmatprep.subr.mxu0 0.0
    %1285 = vmatpush1.msra.mxu0 0.0
    %1286 = vmatprep.subr.mxu0 0.0
    %1287 = vmatpush1.msra.mxu0 0.0
    %1288 = vmatprep.subr.mxu0 0.0
    %1289 = vmatpush1.msra.mxu0 0.0
    %1290 = vmatprep.subr.mxu0 0.0
    %1291 = vmatpush1.msra.mxu0 0.0
    %1292 = vmatprep.subr.mxu0 0.0
    %1293 = vmatpush1.msra.mxu0 0.0
    %1294 = vmatprep.subr.mxu0 0.0
    %1295 = vmatpush1.msra.mxu0 0.0
    %1296 = vmatprep.subr.mxu0 0.0
    %1297 = vmatpush1.msra.mxu0 0.0
    %1298 = vmatprep.subr.mxu0 0.0
    %1299 = vmatpush1.msra.mxu0 0.0
    %1300 = vmatprep.subr.mxu0 0.0
    %1301 = vmatpush1.msra.mxu0 0.0
    %1302 = vmatprep.subr.mxu0 0.0
    %1303 = vmatpush1.msra.mxu0 0.0
    %1304 = vmatprep.subr.mxu0 0.0
    %1305 = vmatpush1.msra.mxu0 0.0
    %1306 = vmatprep.subr.mxu0 0.0
    %1307 = vmatpush1.msra.mxu0 0.0
    %1308 = vmatprep.subr.mxu0 0.0
    %1309 = vmatpush1.msra.mxu0 0.0
    %1310 = vmatprep.subr.mxu0 0.0
    %1311 = vmatpush1.msra.mxu0 0.0
    %1312 = vmatprep.mubr.f32.mxu0 0.0
    %1313 = vmatmul.mubr.f32.gmra.mrb[0].mxu0 %v1176
    %v1314 = vpop.f32.mrb[0].mxu0
    %v1315 = vadd.f32 0.0, %v1314
    %v1316 = vpop.f32.mrb[0].mxu0
    %v1317 = vadd.f32 0.0, %v1316
    %1318 = vdwg.mxu0
    %1319 = vmatprep.subr.mxu0 %v1187
    %1320 = vmatpush1.msra.mxu0 %v1186
    %1321 = vmatprep.subr.mxu0 %v1191
    %1322 = vmatpush1.msra.mxu0 %v1190
    %1323 = vmatprep.subr.mxu0 %v1195
    %1324 = vmatpush1.msra.mxu0 %v1194
    %1325 = vmatprep.subr.mxu0 %v1199
    %1326 = vmatpush1.msra.mxu0 %v1198
    %1327 = vmatprep.subr.mxu0 %v1203
    %1328 = vmatpush1.msra.mxu0 %v1202
    %1329 = vmatprep.subr.mxu0 %v1207
    %1330 = vmatpush1.msra.mxu0 %v1206
    %1331 = vmatprep.subr.mxu0 %v1211
    %1332 = vmatpush1.msra.mxu0 %v1210
    %1333 = vmatprep.subr.mxu0 %v1215
    %1334 = vmatpush1.msra.mxu0 %v1214
    %1335 = vmatprep.subr.mxu0 %v1219
    %1336 = vmatpush1.msra.mxu0 %v1218
    %1337 = vmatprep.subr.mxu0 %v1223
    %1338 = vmatpush1.msra.mxu0 %v1222
    %1339 = vmatprep.subr.mxu0 %v1227
    %1340 = vmatpush1.msra.mxu0 %v1226
    %1341 = vmatprep.subr.mxu0 %v1231
    %1342 = vmatpush1.msra.mxu0 %v1230
    %1343 = vmatprep.subr.mxu0 %v1235
    %1344 = vmatpush1.msra.mxu0 %v1234
    %1345 = vmatprep.subr.mxu0 %v1239
    %1346 = vmatpush1.msra.mxu0 %v1238
    %1347 = vmatprep.subr.mxu0 %v1243
    %1348 = vmatpush1.msra.mxu0 %v1242
    %1349 = vmatprep.subr.mxu0 %v1247
    %1350 = vmatpush1.msra.mxu0 %v1246
    %1351 = vmatprep.subr.mxu0 0.0
    %1352 = vmatpush1.msra.mxu0 0.0
    %1353 = vmatprep.subr.mxu0 0.0
    %1354 = vmatpush1.msra.mxu0 0.0
    %1355 = vmatprep.subr.mxu0 0.0
    %1356 = vmatpush1.msra.mxu0 0.0
    %1357 = vmatprep.subr.mxu0 0.0
    %1358 = vmatpush1.msra.mxu0 0.0
    %1359 = vmatprep.subr.mxu0 0.0
    %1360 = vmatpush1.msra.mxu0 0.0
    %1361 = vmatprep.subr.mxu0 0.0
    %1362 = vmatpush1.msra.mxu0 0.0
    %1363 = vmatprep.subr.mxu0 0.0
    %1364 = vmatpush1.msra.mxu0 0.0
    %1365 = vmatprep.subr.mxu0 0.0
    %1366 = vmatpush1.msra.mxu0 0.0
    %1367 = vmatprep.subr.mxu0 0.0
    %1368 = vmatpush1.msra.mxu0 0.0
    %1369 = vmatprep.subr.mxu0 0.0
    %1370 = vmatpush1.msra.mxu0 0.0
    %1371 = vmatprep.subr.mxu0 0.0
    %1372 = vmatpush1.msra.mxu0 0.0
    %1373 = vmatprep.subr.mxu0 0.0
    %1374 = vmatpush1.msra.mxu0 0.0
    %1375 = vmatprep.subr.mxu0 0.0
    %1376 = vmatpush1.msra.mxu0 0.0
    %1377 = vmatprep.subr.mxu0 0.0
    %1378 = vmatpush1.msra.mxu0 0.0
    %1379 = vmatprep.subr.mxu0 0.0
    %1380 = vmatpush1.msra.mxu0 0.0
    %1381 = vmatprep.subr.mxu0 0.0
    %1382 = vmatpush1.msra.mxu0 0.0
    %1383 = vmatprep.mubr.f32.mxu0 0.0
    %1384 = vmatmul.mubr.f32.gmra.mrb[0].mxu0 %v1176
    %v1385 = vpop.f32.mrb[0].mxu0
    %v1386 = vadd.f32 0.0, %v1385
    %v1387 = vpop.f32.mrb[0].mxu0
    %v1388 = vadd.f32 0.0, %v1387
    %1389 = vdwg.mxu0
    %v1390 = vadd.f32 %v1180, %v1315
    %v1391 = vadd.f32 %v1181, %v1317
    %v1392 = vadd.f32 %v1182, %v1386
    %v1393 = vadd.f32 %v1183, %v1388
    %v1394 = vmul.f32 %v1390, 0.5
    %v1395 = vtanh.pop %v1394
    %v1396 = vmul.f32 %v1395, 0.5
    %v1397 = vadd.f32 %v1396, 0.5
    %v1398 = vmul.f32 %v1391, 0.5
    %v1399 = vtanh.pop %v1398
    %v1400 = vmul.f32 %v1399, 0.5
    %v1401 = vadd.f32 %v1400, 0.5
    %v1402 = vtanh.pop %v1392
    %v1403 = vmul.f32 %v1393, 0.5
    %v1404 = vtanh.pop %v1403
    %v1405 = vmul.f32 %v1404, 0.5
    %v1406 = vadd.f32 %v1405, 0.5
    %v1407 = vmul.f32 %v1401, %v1174
    %v1408 = vmul.f32 %v1397, %v1402
    %v1409 = vadd.f32 %v1407, %v1408
    %v1410 = vtanh.pop %v1409
    %v1411 = vmul.f32 %v1406, %v1410
    %s1412 = scalar_lea.vmem [#allocation6], 4
    %1413 = vst.msk [vmem:[%s1412] sm:$0x3] %vm942, %v1411
    %s1414 = scalar_lea.vmem [#allocation2], 96
    %v1415 = vld [vmem:[%s1414] sm:$0xff]
    %v1416 = vld [vmem:[%s1414 + $0x8] sm:$0xff]
    %v1417 = vld [vmem:[%s1414 + $0x10] sm:$0xff]
    %v1418 = vld [vmem:[%s1414 + $0x18] sm:$0xff]
    %v1419 = vld [vmem:[#allocation3] sm:$0xff]
    %v1420 = vld [vmem:[#allocation3 + $0x8] sm:$0xff]
    %v1421 = vld [vmem:[#allocation3 + $0x10] sm:$0xff]
    %v1422 = vld [vmem:[#allocation3 + $0x18] sm:$0xff]
    %v1423 = vld [vmem:[#allocation3 + $0x20] sm:$0xff]
    %v1424 = vld [vmem:[#allocation3 + $0x28] sm:$0xff]
    %v1425 = vld [vmem:[#allocation3 + $0x30] sm:$0xff]
    %v1426 = vld [vmem:[#allocation3 + $0x38] sm:$0xff]
    %v1427 = vld [vmem:[#allocation3 + $0x40] sm:$0xff]
    %v1428 = vld [vmem:[#allocation3 + $0x48] sm:$0xff]
    %v1429 = vld [vmem:[#allocation3 + $0x50] sm:$0xff]
    %v1430 = vld [vmem:[#allocation3 + $0x58] sm:$0xff]
    %v1431 = vld [vmem:[#allocation3 + $0x60] sm:$0xff]
    %v1432 = vld [vmem:[#allocation3 + $0x68] sm:$0xff]
    %v1433 = vld [vmem:[#allocation3 + $0x70] sm:$0xff]
    %v1434 = vld [vmem:[#allocation3 + $0x78] sm:$0xff]
    %v1435 = vld [vmem:[#allocation3 + $0x80] sm:$0xff]
    %v1436 = vld [vmem:[#allocation3 + $0x88] sm:$0xff]
    %v1437 = vld [vmem:[#allocation3 + $0x90] sm:$0xff]
    %v1438 = vld [vmem:[#allocation3 + $0x98] sm:$0xff]
    %v1439 = vld [vmem:[#allocation3 + $0xa0] sm:$0xff]
    %v1440 = vld [vmem:[#allocation3 + $0xa8] sm:$0xff]
    %v1441 = vld [vmem:[#allocation3 + $0xb0] sm:$0xff]
    %v1442 = vld [vmem:[#allocation3 + $0xb8] sm:$0xff]
    %v1443 = vld [vmem:[#allocation3 + $0xc0] sm:$0xff]
    %v1444 = vld [vmem:[#allocation3 + $0xc8] sm:$0xff]
    %v1445 = vld [vmem:[#allocation3 + $0xd0] sm:$0xff]
    %v1446 = vld [vmem:[#allocation3 + $0xd8] sm:$0xff]
    %v1447 = vld [vmem:[#allocation3 + $0xe0] sm:$0xff]
    %v1448 = vld [vmem:[#allocation3 + $0xe8] sm:$0xff]
    %v1449 = vld [vmem:[#allocation3 + $0xf0] sm:$0xff]
    %v1450 = vld [vmem:[#allocation3 + $0xf8] sm:$0xff]
    %v1451 = vld [vmem:[#allocation3 + $0x100] sm:$0xff]
    %v1452 = vld [vmem:[#allocation3 + $0x108] sm:$0xff]
    %v1453 = vld [vmem:[#allocation3 + $0x110] sm:$0xff]
    %v1454 = vld [vmem:[#allocation3 + $0x118] sm:$0xff]
    %v1455 = vld [vmem:[#allocation3 + $0x120] sm:$0xff]
    %v1456 = vld [vmem:[#allocation3 + $0x128] sm:$0xff]
    %v1457 = vld [vmem:[#allocation3 + $0x130] sm:$0xff]
    %v1458 = vld [vmem:[#allocation3 + $0x138] sm:$0xff]
    %v1459 = vld [vmem:[#allocation3 + $0x140] sm:$0xff]
    %v1460 = vld [vmem:[#allocation3 + $0x148] sm:$0xff]
    %v1461 = vld [vmem:[#allocation3 + $0x150] sm:$0xff]
    %v1462 = vld [vmem:[#allocation3 + $0x158] sm:$0xff]
    %v1463 = vld [vmem:[#allocation3 + $0x160] sm:$0xff]
    %v1464 = vld [vmem:[#allocation3 + $0x168] sm:$0xff]
    %v1465 = vld [vmem:[#allocation3 + $0x170] sm:$0xff]
    %v1466 = vld [vmem:[#allocation3 + $0x178] sm:$0xff]
    %v1467 = vld [vmem:[#allocation3 + $0x180] sm:$0xff]
    %v1468 = vld [vmem:[#allocation3 + $0x188] sm:$0xff]
    %v1469 = vld [vmem:[#allocation3 + $0x190] sm:$0xff]
    %v1470 = vld [vmem:[#allocation3 + $0x198] sm:$0xff]
    %v1471 = vld [vmem:[#allocation3 + $0x1a0] sm:$0xff]
    %v1472 = vld [vmem:[#allocation3 + $0x1a8] sm:$0xff]
    %v1473 = vld [vmem:[#allocation3 + $0x1b0] sm:$0xff]
    %v1474 = vld [vmem:[#allocation3 + $0x1b8] sm:$0xff]
    %v1475 = vld [vmem:[#allocation3 + $0x1c0] sm:$0xff]
    %v1476 = vld [vmem:[#allocation3 + $0x1c8] sm:$0xff]
    %v1477 = vld [vmem:[#allocation3 + $0x1d0] sm:$0xff]
    %v1478 = vld [vmem:[#allocation3 + $0x1d8] sm:$0xff]
    %v1479 = vld [vmem:[#allocation3 + $0x1e0] sm:$0xff]
    %v1480 = vld [vmem:[#allocation3 + $0x1e8] sm:$0xff]
    %v1481 = vld [vmem:[#allocation3 + $0x1f0] sm:$0xff]
    %v1482 = vld [vmem:[#allocation3 + $0x1f8] sm:$0xff]
    %1483 = vmatprep.subr.mxu0 %v1420
    %1484 = vmatpush1.msra.mxu0 %v1419
    %1485 = vmatprep.subr.mxu0 %v1424
    %1486 = vmatpush1.msra.mxu0 %v1423
    %1487 = vmatprep.subr.mxu0 %v1428
    %1488 = vmatpush1.msra.mxu0 %v1427
    %1489 = vmatprep.subr.mxu0 %v1432
    %1490 = vmatpush1.msra.mxu0 %v1431
    %1491 = vmatprep.subr.mxu0 %v1436
    %1492 = vmatpush1.msra.mxu0 %v1435
    %1493 = vmatprep.subr.mxu0 %v1440
    %1494 = vmatpush1.msra.mxu0 %v1439
    %1495 = vmatprep.subr.mxu0 %v1444
    %1496 = vmatpush1.msra.mxu0 %v1443
    %1497 = vmatprep.subr.mxu0 %v1448
    %1498 = vmatpush1.msra.mxu0 %v1447
    %1499 = vmatprep.subr.mxu0 %v1452
    %1500 = vmatpush1.msra.mxu0 %v1451
    %1501 = vmatprep.subr.mxu0 %v1456
    %1502 = vmatpush1.msra.mxu0 %v1455
    %1503 = vmatprep.subr.mxu0 %v1460
    %1504 = vmatpush1.msra.mxu0 %v1459
    %1505 = vmatprep.subr.mxu0 %v1464
    %1506 = vmatpush1.msra.mxu0 %v1463
    %1507 = vmatprep.subr.mxu0 %v1468
    %1508 = vmatpush1.msra.mxu0 %v1467
    %1509 = vmatprep.subr.mxu0 %v1472
    %1510 = vmatpush1.msra.mxu0 %v1471
    %1511 = vmatprep.subr.mxu0 %v1476
    %1512 = vmatpush1.msra.mxu0 %v1475
    %1513 = vmatprep.subr.mxu0 %v1480
    %1514 = vmatpush1.msra.mxu0 %v1479
    %1515 = vmatprep.subr.mxu0 0.0
    %1516 = vmatpush1.msra.mxu0 0.0
    %1517 = vmatprep.subr.mxu0 0.0
    %1518 = vmatpush1.msra.mxu0 0.0
    %1519 = vmatprep.subr.mxu0 0.0
    %1520 = vmatpush1.msra.mxu0 0.0
    %1521 = vmatprep.subr.mxu0 0.0
    %1522 = vmatpush1.msra.mxu0 0.0
    %1523 = vmatprep.subr.mxu0 0.0
    %1524 = vmatpush1.msra.mxu0 0.0
    %1525 = vmatprep.subr.mxu0 0.0
    %1526 = vmatpush1.msra.mxu0 0.0
    %1527 = vmatprep.subr.mxu0 0.0
    %1528 = vmatpush1.msra.mxu0 0.0
    %1529 = vmatprep.subr.mxu0 0.0
    %1530 = vmatpush1.msra.mxu0 0.0
    %1531 = vmatprep.subr.mxu0 0.0
    %1532 = vmatpush1.msra.mxu0 0.0
    %1533 = vmatprep.subr.mxu0 0.0
    %1534 = vmatpush1.msra.mxu0 0.0
    %1535 = vmatprep.subr.mxu0 0.0
    %1536 = vmatpush1.msra.mxu0 0.0
    %1537 = vmatprep.subr.mxu0 0.0
    %1538 = vmatpush1.msra.mxu0 0.0
    %1539 = vmatprep.subr.mxu0 0.0
    %1540 = vmatpush1.msra.mxu0 0.0
    %1541 = vmatprep.subr.mxu0 0.0
    %1542 = vmatpush1.msra.mxu0 0.0
    %1543 = vmatprep.subr.mxu0 0.0
    %1544 = vmatpush1.msra.mxu0 0.0
    %1545 = vmatprep.subr.mxu0 0.0
    %1546 = vmatpush1.msra.mxu0 0.0
    %1547 = vmatprep.mubr.f32.mxu0 0.0
    %1548 = vmatmul.mubr.f32.gmra.mrb[0].mxu0 %v1411
    %v1549 = vpop.f32.mrb[0].mxu0
    %v1550 = vadd.f32 0.0, %v1549
    %v1551 = vpop.f32.mrb[0].mxu0
    %v1552 = vadd.f32 0.0, %v1551
    %1553 = vdwg.mxu0
    %1554 = vmatprep.subr.mxu0 %v1422
    %1555 = vmatpush1.msra.mxu0 %v1421
    %1556 = vmatprep.subr.mxu0 %v1426
    %1557 = vmatpush1.msra.mxu0 %v1425
    %1558 = vmatprep.subr.mxu0 %v1430
    %1559 = vmatpush1.msra.mxu0 %v1429
    %1560 = vmatprep.subr.mxu0 %v1434
    %1561 = vmatpush1.msra.mxu0 %v1433
    %1562 = vmatprep.subr.mxu0 %v1438
    %1563 = vmatpush1.msra.mxu0 %v1437
    %1564 = vmatprep.subr.mxu0 %v1442
    %1565 = vmatpush1.msra.mxu0 %v1441
    %1566 = vmatprep.subr.mxu0 %v1446
    %1567 = vmatpush1.msra.mxu0 %v1445
    %1568 = vmatprep.subr.mxu0 %v1450
    %1569 = vmatpush1.msra.mxu0 %v1449
    %1570 = vmatprep.subr.mxu0 %v1454
    %1571 = vmatpush1.msra.mxu0 %v1453
    %1572 = vmatprep.subr.mxu0 %v1458
    %1573 = vmatpush1.msra.mxu0 %v1457
    %1574 = vmatprep.subr.mxu0 %v1462
    %1575 = vmatpush1.msra.mxu0 %v1461
    %1576 = vmatprep.subr.mxu0 %v1466
    %1577 = vmatpush1.msra.mxu0 %v1465
    %1578 = vmatprep.subr.mxu0 %v1470
    %1579 = vmatpush1.msra.mxu0 %v1469
    %1580 = vmatprep.subr.mxu0 %v1474
    %1581 = vmatpush1.msra.mxu0 %v1473
    %1582 = vmatprep.subr.mxu0 %v1478
    %1583 = vmatpush1.msra.mxu0 %v1477
    %1584 = vmatprep.subr.mxu0 %v1482
    %1585 = vmatpush1.msra.mxu0 %v1481
    %1586 = vmatprep.subr.mxu0 0.0
    %1587 = vmatpush1.msra.mxu0 0.0
    %1588 = vmatprep.subr.mxu0 0.0
    %1589 = vmatpush1.msra.mxu0 0.0
    %1590 = vmatprep.subr.mxu0 0.0
    %1591 = vmatpush1.msra.mxu0 0.0
    %1592 = vmatprep.subr.mxu0 0.0
    %1593 = vmatpush1.msra.mxu0 0.0
    %1594 = vmatprep.subr.mxu0 0.0
    %1595 = vmatpush1.msra.mxu0 0.0
    %1596 = vmatprep.subr.mxu0 0.0
    %1597 = vmatpush1.msra.mxu0 0.0
    %1598 = vmatprep.subr.mxu0 0.0
    %1599 = vmatpush1.msra.mxu0 0.0
    %1600 = vmatprep.subr.mxu0 0.0
    %1601 = vmatpush1.msra.mxu0 0.0
    %1602 = vmatprep.subr.mxu0 0.0
    %1603 = vmatpush1.msra.mxu0 0.0
    %1604 = vmatprep.subr.mxu0 0.0
    %1605 = vmatpush1.msra.mxu0 0.0
    %1606 = vmatprep.subr.mxu0 0.0
    %1607 = vmatpush1.msra.mxu0 0.0
    %1608 = vmatprep.subr.mxu0 0.0
    %1609 = vmatpush1.msra.mxu0 0.0
    %1610 = vmatprep.subr.mxu0 0.0
    %1611 = vmatpush1.msra.mxu0 0.0
    %1612 = vmatprep.subr.mxu0 0.0
    %1613 = vmatpush1.msra.mxu0 0.0
    %1614 = vmatprep.subr.mxu0 0.0
    %1615 = vmatpush1.msra.mxu0 0.0
    %1616 = vmatprep.subr.mxu0 0.0
    %1617 = vmatpush1.msra.mxu0 0.0
    %1618 = vmatprep.mubr.f32.mxu0 0.0
    %1619 = vmatmul.mubr.f32.gmra.mrb[0].mxu0 %v1411
    %v1620 = vpop.f32.mrb[0].mxu0
    %v1621 = vadd.f32 0.0, %v1620
    %v1622 = vpop.f32.mrb[0].mxu0
    %v1623 = vadd.f32 0.0, %v1622
    %1624 = vdwg.mxu0
    %v1625 = vadd.f32 %v1415, %v1550
    %v1626 = vadd.f32 %v1416, %v1552
    %v1627 = vadd.f32 %v1417, %v1621
    %v1628 = vadd.f32 %v1418, %v1623
    %v1629 = vmul.f32 %v1625, 0.5
    %v1630 = vtanh.pop %v1629
    %v1631 = vmul.f32 %v1630, 0.5
    %v1632 = vadd.f32 %v1631, 0.5
    %v1633 = vmul.f32 %v1626, 0.5
    %v1634 = vtanh.pop %v1633
    %v1635 = vmul.f32 %v1634, 0.5
    %v1636 = vadd.f32 %v1635, 0.5
    %v1637 = vtanh.pop %v1627
    %v1638 = vmul.f32 %v1628, 0.5
    %v1639 = vtanh.pop %v1638
    %v1640 = vmul.f32 %v1639, 0.5
    %v1641 = vadd.f32 %v1640, 0.5
    %v1642 = vmul.f32 %v1636, %v1409
    %v1643 = vmul.f32 %v1632, %v1637
    %v1644 = vadd.f32 %v1642, %v1643
    %v1645 = vtanh.pop %v1644
    %v1646 = vmul.f32 %v1641, %v1645
    %s1647 = scalar_lea.vmem [#allocation6], 6
    %1648 = vst.msk [vmem:[%s1647] sm:$0x3] %vm942, %v1646
    %s1649 = scalar_lea.vmem [#allocation2], 128
    %v1650 = vld [vmem:[%s1649] sm:$0xff]
    %v1651 = vld [vmem:[%s1649 + $0x8] sm:$0xff]
    %v1652 = vld [vmem:[%s1649 + $0x10] sm:$0xff]
    %v1653 = vld [vmem:[%s1649 + $0x18] sm:$0xff]
    %v1654 = vld [vmem:[#allocation3] sm:$0xff]
    %v1655 = vld [vmem:[#allocation3 + $0x8] sm:$0xff]
    %v1656 = vld [vmem:[#allocation3 + $0x10] sm:$0xff]
    %v1657 = vld [vmem:[#allocation3 + $0x18] sm:$0xff]
    %v1658 = vld [vmem:[#allocation3 + $0x20] sm:$0xff]
    %v1659 = vld [vmem:[#allocation3 + $0x28] sm:$0xff]
    %v1660 = vld [vmem:[#allocation3 + $0x30] sm:$0xff]
    %v1661 = vld [vmem:[#allocation3 + $0x38] sm:$0xff]
    %v1662 = vld [vmem:[#allocation3 + $0x40] sm:$0xff]
    %v1663 = vld [vmem:[#allocation3 + $0x48] sm:$0xff]
    %v1664 = vld [vmem:[#allocation3 + $0x50] sm:$0xff]
    %v1665 = vld [vmem:[#allocation3 + $0x58] sm:$0xff]
    %v1666 = vld [vmem:[#allocation3 + $0x60] sm:$0xff]
    %v1667 = vld [vmem:[#allocation3 + $0x68] sm:$0xff]
    %v1668 = vld [vmem:[#allocation3 + $0x70] sm:$0xff]
    %v1669 = vld [vmem:[#allocation3 + $0x78] sm:$0xff]
    %v1670 = vld [vmem:[#allocation3 + $0x80] sm:$0xff]
    %v1671 = vld [vmem:[#allocation3 + $0x88] sm:$0xff]
    %v1672 = vld [vmem:[#allocation3 + $0x90] sm:$0xff]
    %v1673 = vld [vmem:[#allocation3 + $0x98] sm:$0xff]
    %v1674 = vld [vmem:[#allocation3 + $0xa0] sm:$0xff]
    %v1675 = vld [vmem:[#allocation3 + $0xa8] sm:$0xff]
    %v1676 = vld [vmem:[#allocation3 + $0xb0] sm:$0xff]
    %v1677 = vld [vmem:[#allocation3 + $0xb8] sm:$0xff]
    %v1678 = vld [vmem:[#allocation3 + $0xc0] sm:$0xff]
    %v1679 = vld [vmem:[#allocation3 + $0xc8] sm:$0xff]
    %v1680 = vld [vmem:[#allocation3 + $0xd0] sm:$0xff]
    %v1681 = vld [vmem:[#allocation3 + $0xd8] sm:$0xff]
    %v1682 = vld [vmem:[#allocation3 + $0xe0] sm:$0xff]
    %v1683 = vld [vmem:[#allocation3 + $0xe8] sm:$0xff]
    %v1684 = vld [vmem:[#allocation3 + $0xf0] sm:$0xff]
    %v1685 = vld [vmem:[#allocation3 + $0xf8] sm:$0xff]
    %v1686 = vld [vmem:[#allocation3 + $0x100] sm:$0xff]
    %v1687 = vld [vmem:[#allocation3 + $0x108] sm:$0xff]
    %v1688 = vld [vmem:[#allocation3 + $0x110] sm:$0xff]
    %v1689 = vld [vmem:[#allocation3 + $0x118] sm:$0xff]
    %v1690 = vld [vmem:[#allocation3 + $0x120] sm:$0xff]
    %v1691 = vld [vmem:[#allocation3 + $0x128] sm:$0xff]
    %v1692 = vld [vmem:[#allocation3 + $0x130] sm:$0xff]
    %v1693 = vld [vmem:[#allocation3 + $0x138] sm:$0xff]
    %v1694 = vld [vmem:[#allocation3 + $0x140] sm:$0xff]
    %v1695 = vld [vmem:[#allocation3 + $0x148] sm:$0xff]
    %v1696 = vld [vmem:[#allocation3 + $0x150] sm:$0xff]
    %v1697 = vld [vmem:[#allocation3 + $0x158] sm:$0xff]
    %v1698 = vld [vmem:[#allocation3 + $0x160] sm:$0xff]
    %v1699 = vld [vmem:[#allocation3 + $0x168] sm:$0xff]
    %v1700 = vld [vmem:[#allocation3 + $0x170] sm:$0xff]
    %v1701 = vld [vmem:[#allocation3 + $0x178] sm:$0xff]
    %v1702 = vld [vmem:[#allocation3 + $0x180] sm:$0xff]
    %v1703 = vld [vmem:[#allocation3 + $0x188] sm:$0xff]
    %v1704 = vld [vmem:[#allocation3 + $0x190] sm:$0xff]
    %v1705 = vld [vmem:[#allocation3 + $0x198] sm:$0xff]
    %v1706 = vld [vmem:[#allocation3 + $0x1a0] sm:$0xff]
    %v1707 = vld [vmem:[#allocation3 + $0x1a8] sm:$0xff]
    %v1708 = vld [vmem:[#allocation3 + $0x1b0] sm:$0xff]
    %v1709 = vld [vmem:[#allocation3 + $0x1b8] sm:$0xff]
    %v1710 = vld [vmem:[#allocation3 + $0x1c0] sm:$0xff]
    %v1711 = vld [vmem:[#allocation3 + $0x1c8] sm:$0xff]
    %v1712 = vld [vmem:[#allocation3 + $0x1d0] sm:$0xff]
    %v1713 = vld [vmem:[#allocation3 + $0x1d8] sm:$0xff]
    %v1714 = vld [vmem:[#allocation3 + $0x1e0] sm:$0xff]
    %v1715 = vld [vmem:[#allocation3 + $0x1e8] sm:$0xff]
    %v1716 = vld [vmem:[#allocation3 + $0x1f0] sm:$0xff]
    %v1717 = vld [vmem:[#allocation3 + $0x1f8] sm:$0xff]
    %1718 = vmatprep.subr.mxu0 %v1655
    %1719 = vmatpush1.msra.mxu0 %v1654
    %1720 = vmatprep.subr.mxu0 %v1659
    %1721 = vmatpush1.msra.mxu0 %v1658
    %1722 = vmatprep.subr.mxu0 %v1663
    %1723 = vmatpush1.msra.mxu0 %v1662
    %1724 = vmatprep.subr.mxu0 %v1667
    %1725 = vmatpush1.msra.mxu0 %v1666
    %1726 = vmatprep.subr.mxu0 %v1671
    %1727 = vmatpush1.msra.mxu0 %v1670
    %1728 = vmatprep.subr.mxu0 %v1675
    %1729 = vmatpush1.msra.mxu0 %v1674
    %1730 = vmatprep.subr.mxu0 %v1679
    %1731 = vmatpush1.msra.mxu0 %v1678
    %1732 = vmatprep.subr.mxu0 %v1683
    %1733 = vmatpush1.msra.mxu0 %v1682
    %1734 = vmatprep.subr.mxu0 %v1687
    %1735 = vmatpush1.msra.mxu0 %v1686
    %1736 = vmatprep.subr.mxu0 %v1691
    %1737 = vmatpush1.msra.mxu0 %v1690
    %1738 = vmatprep.subr.mxu0 %v1695
    %1739 = vmatpush1.msra.mxu0 %v1694
    %1740 = vmatprep.subr.mxu0 %v1699
    %1741 = vmatpush1.msra.mxu0 %v1698
    %1742 = vmatprep.subr.mxu0 %v1703
    %1743 = vmatpush1.msra.mxu0 %v1702
    %1744 = vmatprep.subr.mxu0 %v1707
    %1745 = vmatpush1.msra.mxu0 %v1706
    %1746 = vmatprep.subr.mxu0 %v1711
    %1747 = vmatpush1.msra.mxu0 %v1710
    %1748 = vmatprep.subr.mxu0 %v1715
    %1749 = vmatpush1.msra.mxu0 %v1714
    %1750 = vmatprep.subr.mxu0 0.0
    %1751 = vmatpush1.msra.mxu0 0.0
    %1752 = vmatprep.subr.mxu0 0.0
    %1753 = vmatpush1.msra.mxu0 0.0
    %1754 = vmatprep.subr.mxu0 0.0
    %1755 = vmatpush1.msra.mxu0 0.0
    %1756 = vmatprep.subr.mxu0 0.0
    %1757 = vmatpush1.msra.mxu0 0.0
    %1758 = vmatprep.subr.mxu0 0.0
    %1759 = vmatpush1.msra.mxu0 0.0
    %1760 = vmatprep.subr.mxu0 0.0
    %1761 = vmatpush1.msra.mxu0 0.0
    %1762 = vmatprep.subr.mxu0 0.0
    %1763 = vmatpush1.msra.mxu0 0.0
    %1764 = vmatprep.subr.mxu0 0.0
    %1765 = vmatpush1.msra.mxu0 0.0
    %1766 = vmatprep.subr.mxu0 0.0
    %1767 = vmatpush1.msra.mxu0 0.0
    %1768 = vmatprep.subr.mxu0 0.0
    %1769 = vmatpush1.msra.mxu0 0.0
    %1770 = vmatprep.subr.mxu0 0.0
    %1771 = vmatpush1.msra.mxu0 0.0
    %1772 = vmatprep.subr.mxu0 0.0
    %1773 = vmatpush1.msra.mxu0 0.0
    %1774 = vmatprep.subr.mxu0 0.0
    %1775 = vmatpush1.msra.mxu0 0.0
    %1776 = vmatprep.subr.mxu0 0.0
    %1777 = vmatpush1.msra.mxu0 0.0
    %1778 = vmatprep.subr.mxu0 0.0
    %1779 = vmatpush1.msra.mxu0 0.0
    %1780 = vmatprep.subr.mxu0 0.0
    %1781 = vmatpush1.msra.mxu0 0.0
    %1782 = vmatprep.mubr.f32.mxu0 0.0
    %1783 = vmatmul.mubr.f32.gmra.mrb[0].mxu0 %v1646
    %v1784 = vpop.f32.mrb[0].mxu0
    %v1785 = vadd.f32 0.0, %v1784
    %v1786 = vpop.f32.mrb[0].mxu0
    %v1787 = vadd.f32 0.0, %v1786
    %1788 = vdwg.mxu0
    %1789 = vmatprep.subr.mxu0 %v1657
    %1790 = vmatpush1.msra.mxu0 %v1656
    %1791 = vmatprep.subr.mxu0 %v1661
    %1792 = vmatpush1.msra.mxu0 %v1660
    %1793 = vmatprep.subr.mxu0 %v1665
    %1794 = vmatpush1.msra.mxu0 %v1664
    %1795 = vmatprep.subr.mxu0 %v1669
    %1796 = vmatpush1.msra.mxu0 %v1668
    %1797 = vmatprep.subr.mxu0 %v1673
    %1798 = vmatpush1.msra.mxu0 %v1672
    %1799 = vmatprep.subr.mxu0 %v1677
    %1800 = vmatpush1.msra.mxu0 %v1676
    %1801 = vmatprep.subr.mxu0 %v1681
    %1802 = vmatpush1.msra.mxu0 %v1680
    %1803 = vmatprep.subr.mxu0 %v1685
    %1804 = vmatpush1.msra.mxu0 %v1684
    %1805 = vmatprep.subr.mxu0 %v1689
    %1806 = vmatpush1.msra.mxu0 %v1688
    %1807 = vmatprep.subr.mxu0 %v1693
    %1808 = vmatpush1.msra.mxu0 %v1692
    %1809 = vmatprep.subr.mxu0 %v1697
    %1810 = vmatpush1.msra.mxu0 %v1696
    %1811 = vmatprep.subr.mxu0 %v1701
    %1812 = vmatpush1.msra.mxu0 %v1700
    %1813 = vmatprep.subr.mxu0 %v1705
    %1814 = vmatpush1.msra.mxu0 %v1704
    %1815 = vmatprep.subr.mxu0 %v1709
    %1816 = vmatpush1.msra.mxu0 %v1708
    %1817 = vmatprep.subr.mxu0 %v1713
    %1818 = vmatpush1.msra.mxu0 %v1712
    %1819 = vmatprep.subr.mxu0 %v1717
    %1820 = vmatpush1.msra.mxu0 %v1716
    %1821 = vmatprep.subr.mxu0 0.0
    %1822 = vmatpush1.msra.mxu0 0.0
    %1823 = vmatprep.subr.mxu0 0.0
    %1824 = vmatpush1.msra.mxu0 0.0
    %1825 = vmatprep.subr.mxu0 0.0
    %1826 = vmatpush1.msra.mxu0 0.0
    %1827 = vmatprep.subr.mxu0 0.0
    %1828 = vmatpush1.msra.mxu0 0.0
    %1829 = vmatprep.subr.mxu0 0.0
    %1830 = vmatpush1.msra.mxu0 0.0
    %1831 = vmatprep.subr.mxu0 0.0
    %1832 = vmatpush1.msra.mxu0 0.0
    %1833 = vmatprep.subr.mxu0 0.0
    %1834 = vmatpush1.msra.mxu0 0.0
    %1835 = vmatprep.subr.mxu0 0.0
    %1836 = vmatpush1.msra.mxu0 0.0
    %1837 = vmatprep.subr.mxu0 0.0
    %1838 = vmatpush1.msra.mxu0 0.0
    %1839 = vmatprep.subr.mxu0 0.0
    %1840 = vmatpush1.msra.mxu0 0.0
    %1841 = vmatprep.subr.mxu0 0.0
    %1842 = vmatpush1.msra.mxu0 0.0
    %1843 = vmatprep.subr.mxu0 0.0
    %1844 = vmatpush1.msra.mxu0 0.0
    %1845 = vmatprep.subr.mxu0 0.0
    %1846 = vmatpush1.msra.mxu0 0.0
    %1847 = vmatprep.subr.mxu0 0.0
    %1848 = vmatpush1.msra.mxu0 0.0
    %1849 = vmatprep.subr.mxu0 0.0
    %1850 = vmatpush1.msra.mxu0 0.0
    %1851 = vmatprep.subr.mxu0 0.0
    %1852 = vmatpush1.msra.mxu0 0.0
    %1853 = vmatprep.mubr.f32.mxu0 0.0
    %1854 = vmatmul.mubr.f32.gmra.mrb[0].mxu0 %v1646
    %v1855 = vpop.f32.mrb[0].mxu0
    %v1856 = vadd.f32 0.0, %v1855
    %v1857 = vpop.f32.mrb[0].mxu0
    %v1858 = vadd.f32 0.0, %v1857
    %1859 = vdwg.mxu0
    %v1860 = vadd.f32 %v1650, %v1785
    %v1861 = vadd.f32 %v1651, %v1787
    %v1862 = vadd.f32 %v1652, %v1856
    %v1863 = vadd.f32 %v1653, %v1858
    %v1864 = vmul.f32 %v1860, 0.5
    %v1865 = vtanh.pop %v1864
    %v1866 = vmul.f32 %v1865, 0.5
    %v1867 = vadd.f32 %v1866, 0.5
    %v1868 = vmul.f32 %v1861, 0.5
    %v1869 = vtanh.pop %v1868
    %v1870 = vmul.f32 %v1869, 0.5
    %v1871 = vadd.f32 %v1870, 0.5
    %v1872 = vtanh.pop %v1862
    %v1873 = vmul.f32 %v1863, 0.5
    %v1874 = vtanh.pop %v1873
    %v1875 = vmul.f32 %v1874, 0.5
    %v1876 = vadd.f32 %v1875, 0.5
    %v1877 = vmul.f32 %v1871, %v1644
    %v1878 = vmul.f32 %v1867, %v1872
    %v1879 = vadd.f32 %v1877, %v1878
    %v1880 = vtanh.pop %v1879
    %v1881 = vmul.f32 %v1876, %v1880
    %s1882 = scalar_lea.vmem [#allocation6], 8
    %1883 = vst.msk [vmem:[%s1882] sm:$0x3] %vm942, %v1881
    %s1884 = scalar_lea.vmem [#allocation2], 160
    %v1885 = vld [vmem:[%s1884] sm:$0xff]
    %v1886 = vld [vmem:[%s1884 + $0x8] sm:$0xff]
    %v1887 = vld [vmem:[%s1884 + $0x10] sm:$0xff]
    %v1888 = vld [vmem:[%s1884 + $0x18] sm:$0xff]
    %v1889 = vld [vmem:[#allocation3] sm:$0xff]
    %v1890 = vld [vmem:[#allocation3 + $0x8] sm:$0xff]
    %v1891 = vld [vmem:[#allocation3 + $0x10] sm:$0xff]
    %v1892 = vld [vmem:[#allocation3 + $0x18] sm:$0xff]
    %v1893 = vld [vmem:[#allocation3 + $0x20] sm:$0xff]
    %v1894 = vld [vmem:[#allocation3 + $0x28] sm:$0xff]
    %v1895 = vld [vmem:[#allocation3 + $0x30] sm:$0xff]
    %v1896 = vld [vmem:[#allocation3 + $0x38] sm:$0xff]
    %v1897 = vld [vmem:[#allocation3 + $0x40] sm:$0xff]
    %v1898 = vld [vmem:[#allocation3 + $0x48] sm:$0xff]
    %v1899 = vld [vmem:[#allocation3 + $0x50] sm:$0xff]
    %v1900 = vld [vmem:[#allocation3 + $0x58] sm:$0xff]
    %v1901 = vld [vmem:[#allocation3 + $0x60] sm:$0xff]
    %v1902 = vld [vmem:[#allocation3 + $0x68] sm:$0xff]
    %v1903 = vld [vmem:[#allocation3 + $0x70] sm:$0xff]
    %v1904 = vld [vmem:[#allocation3 + $0x78] sm:$0xff]
    %v1905 = vld [vmem:[#allocation3 + $0x80] sm:$0xff]
    %v1906 = vld [vmem:[#allocation3 + $0x88] sm:$0xff]
    %v1907 = vld [vmem:[#allocation3 + $0x90] sm:$0xff]
    %v1908 = vld [vmem:[#allocation3 + $0x98] sm:$0xff]
    %v1909 = vld [vmem:[#allocation3 + $0xa0] sm:$0xff]
    %v1910 = vld [vmem:[#allocation3 + $0xa8] sm:$0xff]
    %v1911 = vld [vmem:[#allocation3 + $0xb0] sm:$0xff]
    %v1912 = vld [vmem:[#allocation3 + $0xb8] sm:$0xff]
    %v1913 = vld [vmem:[#allocation3 + $0xc0] sm:$0xff]
    %v1914 = vld [vmem:[#allocation3 + $0xc8] sm:$0xff]
    %v1915 = vld [vmem:[#allocation3 + $0xd0] sm:$0xff]
    %v1916 = vld [vmem:[#allocation3 + $0xd8] sm:$0xff]
    %v1917 = vld [vmem:[#allocation3 + $0xe0] sm:$0xff]
    %v1918 = vld [vmem:[#allocation3 + $0xe8] sm:$0xff]
    %v1919 = vld [vmem:[#allocation3 + $0xf0] sm:$0xff]
    %v1920 = vld [vmem:[#allocation3 + $0xf8] sm:$0xff]
    %v1921 = vld [vmem:[#allocation3 + $0x100] sm:$0xff]
    %v1922 = vld [vmem:[#allocation3 + $0x108] sm:$0xff]
    %v1923 = vld [vmem:[#allocation3 + $0x110] sm:$0xff]
    %v1924 = vld [vmem:[#allocation3 + $0x118] sm:$0xff]
    %v1925 = vld [vmem:[#allocation3 + $0x120] sm:$0xff]
    %v1926 = vld [vmem:[#allocation3 + $0x128] sm:$0xff]
    %v1927 = vld [vmem:[#allocation3 + $0x130] sm:$0xff]
    %v1928 = vld [vmem:[#allocation3 + $0x138] sm:$0xff]
    %v1929 = vld [vmem:[#allocation3 + $0x140] sm:$0xff]
    %v1930 = vld [vmem:[#allocation3 + $0x148] sm:$0xff]
    %v1931 = vld [vmem:[#allocation3 + $0x150] sm:$0xff]
    %v1932 = vld [vmem:[#allocation3 + $0x158] sm:$0xff]
    %v1933 = vld [vmem:[#allocation3 + $0x160] sm:$0xff]
    %v1934 = vld [vmem:[#allocation3 + $0x168] sm:$0xff]
    %v1935 = vld [vmem:[#allocation3 + $0x170] sm:$0xff]
    %v1936 = vld [vmem:[#allocation3 + $0x178] sm:$0xff]
    %v1937 = vld [vmem:[#allocation3 + $0x180] sm:$0xff]
    %v1938 = vld [vmem:[#allocation3 + $0x188] sm:$0xff]
    %v1939 = vld [vmem:[#allocation3 + $0x190] sm:$0xff]
    %v1940 = vld [vmem:[#allocation3 + $0x198] sm:$0xff]
    %v1941 = vld [vmem:[#allocation3 + $0x1a0] sm:$0xff]
    %v1942 = vld [vmem:[#allocation3 + $0x1a8] sm:$0xff]
    %v1943 = vld [vmem:[#allocation3 + $0x1b0] sm:$0xff]
    %v1944 = vld [vmem:[#allocation3 + $0x1b8] sm:$0xff]
    %v1945 = vld [vmem:[#allocation3 + $0x1c0] sm:$0xff]
    %v1946 = vld [vmem:[#allocation3 + $0x1c8] sm:$0xff]
    %v1947 = vld [vmem:[#allocation3 + $0x1d0] sm:$0xff]
    %v1948 = vld [vmem:[#allocation3 + $0x1d8] sm:$0xff]
    %v1949 = vld [vmem:[#allocation3 + $0x1e0] sm:$0xff]
    %v1950 = vld [vmem:[#allocation3 + $0x1e8] sm:$0xff]
    %v1951 = vld [vmem:[#allocation3 + $0x1f0] sm:$0xff]
    %v1952 = vld [vmem:[#allocation3 + $0x1f8] sm:$0xff]
    %1953 = vmatprep.subr.mxu0 %v1890
    %1954 = vmatpush1.msra.mxu0 %v1889
    %1955 = vmatprep.subr.mxu0 %v1894
    %1956 = vmatpush1.msra.mxu0 %v1893
    %1957 = vmatprep.subr.mxu0 %v1898
    %1958 = vmatpush1.msra.mxu0 %v1897
    %1959 = vmatprep.subr.mxu0 %v1902
    %1960 = vmatpush1.msra.mxu0 %v1901
    %1961 = vmatprep.subr.mxu0 %v1906
    %1962 = vmatpush1.msra.mxu0 %v1905
    %1963 = vmatprep.subr.mxu0 %v1910
    %1964 = vmatpush1.msra.mxu0 %v1909
    %1965 = vmatprep.subr.mxu0 %v1914
    %1966 = vmatpush1.msra.mxu0 %v1913
    %1967 = vmatprep.subr.mxu0 %v1918
    %1968 = vmatpush1.msra.mxu0 %v1917
    %1969 = vmatprep.subr.mxu0 %v1922
    %1970 = vmatpush1.msra.mxu0 %v1921
    %1971 = vmatprep.subr.mxu0 %v1926
    %1972 = vmatpush1.msra.mxu0 %v1925
    %1973 = vmatprep.subr.mxu0 %v1930
    %1974 = vmatpush1.msra.mxu0 %v1929
    %1975 = vmatprep.subr.mxu0 %v1934
    %1976 = vmatpush1.msra.mxu0 %v1933
    %1977 = vmatprep.subr.mxu0 %v1938
    %1978 = vmatpush1.msra.mxu0 %v1937
    %1979 = vmatprep.subr.mxu0 %v1942
    %1980 = vmatpush1.msra.mxu0 %v1941
    %1981 = vmatprep.subr.mxu0 %v1946
    %1982 = vmatpush1.msra.mxu0 %v1945
    %1983 = vmatprep.subr.mxu0 %v1950
    %1984 = vmatpush1.msra.mxu0 %v1949
    %1985 = vmatprep.subr.mxu0 0.0
    %1986 = vmatpush1.msra.mxu0 0.0
    %1987 = vmatprep.subr.mxu0 0.0
    %1988 = vmatpush1.msra.mxu0 0.0
    %1989 = vmatprep.subr.mxu0 0.0
    %1990 = vmatpush1.msra.mxu0 0.0
    %1991 = vmatprep.subr.mxu0 0.0
    %1992 = vmatpush1.msra.mxu0 0.0
    %1993 = vmatprep.subr.mxu0 0.0
    %1994 = vmatpush1.msra.mxu0 0.0
    %1995 = vmatprep.subr.mxu0 0.0
    %1996 = vmatpush1.msra.mxu0 0.0
    %1997 = vmatprep.subr.mxu0 0.0
    %1998 = vmatpush1.msra.mxu0 0.0
    %1999 = vmatprep.subr.mxu0 0.0
    %2000 = vmatpush1.msra.mxu0 0.0
    %2001 = vmatprep.subr.mxu0 0.0
    %2002 = vmatpush1.msra.mxu0 0.0
    %2003 = vmatprep.subr.mxu0 0.0
    %2004 = vmatpush1.msra.mxu0 0.0
    %2005 = vmatprep.subr.mxu0 0.0
    %2006 = vmatpush1.msra.mxu0 0.0
    %2007 = vmatprep.subr.mxu0 0.0
    %2008 = vmatpush1.msra.mxu0 0.0
    %2009 = vmatprep.subr.mxu0 0.0
    %2010 = vmatpush1.msra.mxu0 0.0
    %2011 = vmatprep.subr.mxu0 0.0
    %2012 = vmatpush1.msra.mxu0 0.0
    %2013 = vmatprep.subr.mxu0 0.0
    %2014 = vmatpush1.msra.mxu0 0.0
    %2015 = vmatprep.subr.mxu0 0.0
    %2016 = vmatpush1.msra.mxu0 0.0
    %2017 = vmatprep.mubr.f32.mxu0 0.0
    %2018 = vmatmul.mubr.f32.gmra.mrb[0].mxu0 %v1881
    %v2019 = vpop.f32.mrb[0].mxu0
    %v2020 = vadd.f32 0.0, %v2019
    %v2021 = vpop.f32.mrb[0].mxu0
    %v2022 = vadd.f32 0.0, %v2021
    %2023 = vdwg.mxu0
    %2024 = vmatprep.subr.mxu0 %v1892
    %2025 = vmatpush1.msra.mxu0 %v1891
    %2026 = vmatprep.subr.mxu0 %v1896
    %2027 = vmatpush1.msra.mxu0 %v1895
    %2028 = vmatprep.subr.mxu0 %v1900
    %2029 = vmatpush1.msra.mxu0 %v1899
    %2030 = vmatprep.subr.mxu0 %v1904
    %2031 = vmatpush1.msra.mxu0 %v1903
    %2032 = vmatprep.subr.mxu0 %v1908
    %2033 = vmatpush1.msra.mxu0 %v1907
    %2034 = vmatprep.subr.mxu0 %v1912
    %2035 = vmatpush1.msra.mxu0 %v1911
    %2036 = vmatprep.subr.mxu0 %v1916
    %2037 = vmatpush1.msra.mxu0 %v1915
    %2038 = vmatprep.subr.mxu0 %v1920
    %2039 = vmatpush1.msra.mxu0 %v1919
    %2040 = vmatprep.subr.mxu0 %v1924
    %2041 = vmatpush1.msra.mxu0 %v1923
    %2042 = vmatprep.subr.mxu0 %v1928
    %2043 = vmatpush1.msra.mxu0 %v1927
    %2044 = vmatprep.subr.mxu0 %v1932
    %2045 = vmatpush1.msra.mxu0 %v1931
    %2046 = vmatprep.subr.mxu0 %v1936
    %2047 = vmatpush1.msra.mxu0 %v1935
    %2048 = vmatprep.subr.mxu0 %v1940
    %2049 = vmatpush1.msra.mxu0 %v1939
    %2050 = vmatprep.subr.mxu0 %v1944
    %2051 = vmatpush1.msra.mxu0 %v1943
    %2052 = vmatprep.subr.mxu0 %v1948
    %2053 = vmatpush1.msra.mxu0 %v1947
    %2054 = vmatprep.subr.mxu0 %v1952
    %2055 = vmatpush1.msra.mxu0 %v1951
    %2056 = vmatprep.subr.mxu0 0.0
    %2057 = vmatpush1.msra.mxu0 0.0
    %2058 = vmatprep.subr.mxu0 0.0
    %2059 = vmatpush1.msra.mxu0 0.0
    %2060 = vmatprep.subr.mxu0 0.0
    %2061 = vmatpush1.msra.mxu0 0.0
    %2062 = vmatprep.subr.mxu0 0.0
    %2063 = vmatpush1.msra.mxu0 0.0
    %2064 = vmatprep.subr.mxu0 0.0
    %2065 = vmatpush1.msra.mxu0 0.0
    %2066 = vmatprep.subr.mxu0 0.0
    %2067 = vmatpush1.msra.mxu0 0.0
    %2068 = vmatprep.subr.mxu0 0.0
    %2069 = vmatpush1.msra.mxu0 0.0
    %2070 = vmatprep.subr.mxu0 0.0
    %2071 = vmatpush1.msra.mxu0 0.0
    %2072 = vmatprep.subr.mxu0 0.0
    %2073 = vmatpush1.msra.mxu0 0.0
    %2074 = vmatprep.subr.mxu0 0.0
    %2075 = vmatpush1.msra.mxu0 0.0
    %2076 = vmatprep.subr.mxu0 0.0
    %2077 = vmatpush1.msra.mxu0 0.0
    %2078 = vmatprep.subr.mxu0 0.0
    %2079 = vmatpush1.msra.mxu0 0.0
    %2080 = vmatprep.subr.mxu0 0.0
    %2081 = vmatpush1.msra.mxu0 0.0
    %2082 = vmatprep.subr.mxu0 0.0
    %2083 = vmatpush1.msra.mxu0 0.0
    %2084 = vmatprep.subr.mxu0 0.0
    %2085 = vmatpush1.msra.mxu0 0.0
    %2086 = vmatprep.subr.mxu0 0.0
    %2087 = vmatpush1.msra.mxu0 0.0
    %2088 = vmatprep.mubr.f32.mxu0 0.0
    %2089 = vmatmul.mubr.f32.gmra.mrb[0].mxu0 %v1881
    %v2090 = vpop.f32.mrb[0].mxu0
    %v2091 = vadd.f32 0.0, %v2090
    %v2092 = vpop.f32.mrb[0].mxu0
    %v2093 = vadd.f32 0.0, %v2092
    %2094 = vdwg.mxu0
    %v2095 = vadd.f32 %v1885, %v2020
    %v2096 = vadd.f32 %v1886, %v2022
    %v2097 = vadd.f32 %v1887, %v2091
    %v2098 = vadd.f32 %v1888, %v2093
    %v2099 = vmul.f32 %v2095, 0.5
    %v2100 = vtanh.pop %v2099
    %v2101 = vmul.f32 %v2100, 0.5
    %v2102 = vadd.f32 %v2101, 0.5
    %v2103 = vmul.f32 %v2096, 0.5
    %v2104 = vtanh.pop %v2103
    %v2105 = vmul.f32 %v2104, 0.5
    %v2106 = vadd.f32 %v2105, 0.5
    %v2107 = vtanh.pop %v2097
    %v2108 = vmul.f32 %v2098, 0.5
    %v2109 = vtanh.pop %v2108
    %v2110 = vmul.f32 %v2109, 0.5
    %v2111 = vadd.f32 %v2110, 0.5
    %v2112 = vmul.f32 %v2106, %v1879
    %v2113 = vmul.f32 %v2102, %v2107
    %v2114 = vadd.f32 %v2112, %v2113
    %v2115 = vtanh.pop %v2114
    %v2116 = vmul.f32 %v2111, %v2115
    %s2117 = scalar_lea.vmem [#allocation6], 10
    %2118 = vst.msk [vmem:[%s2117] sm:$0x3] %vm942, %v2116
    %s2119 = scalar_lea.vmem [#allocation2], 192
    %v2120 = vld [vmem:[%s2119] sm:$0xff]
    %v2121 = vld [vmem:[%s2119 + $0x8] sm:$0xff]
    %v2122 = vld [vmem:[%s2119 + $0x10] sm:$0xff]
    %v2123 = vld [vmem:[%s2119 + $0x18] sm:$0xff]
    %v2124 = vld [vmem:[#allocation3] sm:$0xff]
    %v2125 = vld [vmem:[#allocation3 + $0x8] sm:$0xff]
    %v2126 = vld [vmem:[#allocation3 + $0x10] sm:$0xff]
    %v2127 = vld [vmem:[#allocation3 + $0x18] sm:$0xff]
    %v2128 = vld [vmem:[#allocation3 + $0x20] sm:$0xff]
    %v2129 = vld [vmem:[#allocation3 + $0x28] sm:$0xff]
    %v2130 = vld [vmem:[#allocation3 + $0x30] sm:$0xff]
    %v2131 = vld [vmem:[#allocation3 + $0x38] sm:$0xff]
    %v2132 = vld [vmem:[#allocation3 + $0x40] sm:$0xff]
    %v2133 = vld [vmem:[#allocation3 + $0x48] sm:$0xff]
    %v2134 = vld [vmem:[#allocation3 + $0x50] sm:$0xff]
    %v2135 = vld [vmem:[#allocation3 + $0x58] sm:$0xff]
    %v2136 = vld [vmem:[#allocation3 + $0x60] sm:$0xff]
    %v2137 = vld [vmem:[#allocation3 + $0x68] sm:$0xff]
    %v2138 = vld [vmem:[#allocation3 + $0x70] sm:$0xff]
    %v2139 = vld [vmem:[#allocation3 + $0x78] sm:$0xff]
    %v2140 = vld [vmem:[#allocation3 + $0x80] sm:$0xff]
    %v2141 = vld [vmem:[#allocation3 + $0x88] sm:$0xff]
    %v2142 = vld [vmem:[#allocation3 + $0x90] sm:$0xff]
    %v2143 = vld [vmem:[#allocation3 + $0x98] sm:$0xff]
    %v2144 = vld [vmem:[#allocation3 + $0xa0] sm:$0xff]
    %v2145 = vld [vmem:[#allocation3 + $0xa8] sm:$0xff]
    %v2146 = vld [vmem:[#allocation3 + $0xb0] sm:$0xff]
    %v2147 = vld [vmem:[#allocation3 + $0xb8] sm:$0xff]
    %v2148 = vld [vmem:[#allocation3 + $0xc0] sm:$0xff]
    %v2149 = vld [vmem:[#allocation3 + $0xc8] sm:$0xff]
    %v2150 = vld [vmem:[#allocation3 + $0xd0] sm:$0xff]
    %v2151 = vld [vmem:[#allocation3 + $0xd8] sm:$0xff]
    %v2152 = vld [vmem:[#allocation3 + $0xe0] sm:$0xff]
    %v2153 = vld [vmem:[#allocation3 + $0xe8] sm:$0xff]
    %v2154 = vld [vmem:[#allocation3 + $0xf0] sm:$0xff]
    %v2155 = vld [vmem:[#allocation3 + $0xf8] sm:$0xff]
    %v2156 = vld [vmem:[#allocation3 + $0x100] sm:$0xff]
    %v2157 = vld [vmem:[#allocation3 + $0x108] sm:$0xff]
    %v2158 = vld [vmem:[#allocation3 + $0x110] sm:$0xff]
    %v2159 = vld [vmem:[#allocation3 + $0x118] sm:$0xff]
    %v2160 = vld [vmem:[#allocation3 + $0x120] sm:$0xff]
    %v2161 = vld [vmem:[#allocation3 + $0x128] sm:$0xff]
    %v2162 = vld [vmem:[#allocation3 + $0x130] sm:$0xff]
    %v2163 = vld [vmem:[#allocation3 + $0x138] sm:$0xff]
    %v2164 = vld [vmem:[#allocation3 + $0x140] sm:$0xff]
    %v2165 = vld [vmem:[#allocation3 + $0x148] sm:$0xff]
    %v2166 = vld [vmem:[#allocation3 + $0x150] sm:$0xff]
    %v2167 = vld [vmem:[#allocation3 + $0x158] sm:$0xff]
    %v2168 = vld [vmem:[#allocation3 + $0x160] sm:$0xff]
    %v2169 = vld [vmem:[#allocation3 + $0x168] sm:$0xff]
    %v2170 = vld [vmem:[#allocation3 + $0x170] sm:$0xff]
    %v2171 = vld [vmem:[#allocation3 + $0x178] sm:$0xff]
    %v2172 = vld [vmem:[#allocation3 + $0x180] sm:$0xff]
    %v2173 = vld [vmem:[#allocation3 + $0x188] sm:$0xff]
    %v2174 = vld [vmem:[#allocation3 + $0x190] sm:$0xff]
    %v2175 = vld [vmem:[#allocation3 + $0x198] sm:$0xff]
    %v2176 = vld [vmem:[#allocation3 + $0x1a0] sm:$0xff]
    %v2177 = vld [vmem:[#allocation3 + $0x1a8] sm:$0xff]
    %v2178 = vld [vmem:[#allocation3 + $0x1b0] sm:$0xff]
    %v2179 = vld [vmem:[#allocation3 + $0x1b8] sm:$0xff]
    %v2180 = vld [vmem:[#allocation3 + $0x1c0] sm:$0xff]
    %v2181 = vld [vmem:[#allocation3 + $0x1c8] sm:$0xff]
    %v2182 = vld [vmem:[#allocation3 + $0x1d0] sm:$0xff]
    %v2183 = vld [vmem:[#allocation3 + $0x1d8] sm:$0xff]
    %v2184 = vld [vmem:[#allocation3 + $0x1e0] sm:$0xff]
    %v2185 = vld [vmem:[#allocation3 + $0x1e8] sm:$0xff]
    %v2186 = vld [vmem:[#allocation3 + $0x1f0] sm:$0xff]
    %v2187 = vld [vmem:[#allocation3 + $0x1f8] sm:$0xff]
    %2188 = vmatprep.subr.mxu0 %v2125
    %2189 = vmatpush1.msra.mxu0 %v2124
    %2190 = vmatprep.subr.mxu0 %v2129
    %2191 = vmatpush1.msra.mxu0 %v2128
    %2192 = vmatprep.subr.mxu0 %v2133
    %2193 = vmatpush1.msra.mxu0 %v2132
    %2194 = vmatprep.subr.mxu0 %v2137
    %2195 = vmatpush1.msra.mxu0 %v2136
    %2196 = vmatprep.subr.mxu0 %v2141
    %2197 = vmatpush1.msra.mxu0 %v2140
    %2198 = vmatprep.subr.mxu0 %v2145
    %2199 = vmatpush1.msra.mxu0 %v2144
    %2200 = vmatprep.subr.mxu0 %v2149
    %2201 = vmatpush1.msra.mxu0 %v2148
    %2202 = vmatprep.subr.mxu0 %v2153
    %2203 = vmatpush1.msra.mxu0 %v2152
    %2204 = vmatprep.subr.mxu0 %v2157
    %2205 = vmatpush1.msra.mxu0 %v2156
    %2206 = vmatprep.subr.mxu0 %v2161
    %2207 = vmatpush1.msra.mxu0 %v2160
    %2208 = vmatprep.subr.mxu0 %v2165
    %2209 = vmatpush1.msra.mxu0 %v2164
    %2210 = vmatprep.subr.mxu0 %v2169
    %2211 = vmatpush1.msra.mxu0 %v2168
    %2212 = vmatprep.subr.mxu0 %v2173
    %2213 = vmatpush1.msra.mxu0 %v2172
    %2214 = vmatprep.subr.mxu0 %v2177
    %2215 = vmatpush1.msra.mxu0 %v2176
    %2216 = vmatprep.subr.mxu0 %v2181
    %2217 = vmatpush1.msra.mxu0 %v2180
    %2218 = vmatprep.subr.mxu0 %v2185
    %2219 = vmatpush1.msra.mxu0 %v2184
    %2220 = vmatprep.subr.mxu0 0.0
    %2221 = vmatpush1.msra.mxu0 0.0
    %2222 = vmatprep.subr.mxu0 0.0
    %2223 = vmatpush1.msra.mxu0 0.0
    %2224 = vmatprep.subr.mxu0 0.0
    %2225 = vmatpush1.msra.mxu0 0.0
    %2226 = vmatprep.subr.mxu0 0.0
    %2227 = vmatpush1.msra.mxu0 0.0
    %2228 = vmatprep.subr.mxu0 0.0
    %2229 = vmatpush1.msra.mxu0 0.0
    %2230 = vmatprep.subr.mxu0 0.0
    %2231 = vmatpush1.msra.mxu0 0.0
    %2232 = vmatprep.subr.mxu0 0.0
    %2233 = vmatpush1.msra.mxu0 0.0
    %2234 = vmatprep.subr.mxu0 0.0
    %2235 = vmatpush1.msra.mxu0 0.0
    %2236 = vmatprep.subr.mxu0 0.0
    %2237 = vmatpush1.msra.mxu0 0.0
    %2238 = vmatprep.subr.mxu0 0.0
    %2239 = vmatpush1.msra.mxu0 0.0
    %2240 = vmatprep.subr.mxu0 0.0
    %2241 = vmatpush1.msra.mxu0 0.0
    %2242 = vmatprep.subr.mxu0 0.0
    %2243 = vmatpush1.msra.mxu0 0.0
    %2244 = vmatprep.subr.mxu0 0.0
    %2245 = vmatpush1.msra.mxu0 0.0
    %2246 = vmatprep.subr.mxu0 0.0
    %2247 = vmatpush1.msra.mxu0 0.0
    %2248 = vmatprep.subr.mxu0 0.0
    %2249 = vmatpush1.msra.mxu0 0.0
    %2250 = vmatprep.subr.mxu0 0.0
    %2251 = vmatpush1.msra.mxu0 0.0
    %2252 = vmatprep.mubr.f32.mxu0 0.0
    %2253 = vmatmul.mubr.f32.gmra.mrb[0].mxu0 %v2116
    %v2254 = vpop.f32.mrb[0].mxu0
    %v2255 = vadd.f32 0.0, %v2254
    %v2256 = vpop.f32.mrb[0].mxu0
    %v2257 = vadd.f32 0.0, %v2256
    %2258 = vdwg.mxu0
    %2259 = vmatprep.subr.mxu0 %v2127
    %2260 = vmatpush1.msra.mxu0 %v2126
    %2261 = vmatprep.subr.mxu0 %v2131
    %2262 = vmatpush1.msra.mxu0 %v2130
    %2263 = vmatprep.subr.mxu0 %v2135
    %2264 = vmatpush1.msra.mxu0 %v2134
    %2265 = vmatprep.subr.mxu0 %v2139
    %2266 = vmatpush1.msra.mxu0 %v2138
    %2267 = vmatprep.subr.mxu0 %v2143
    %2268 = vmatpush1.msra.mxu0 %v2142
    %2269 = vmatprep.subr.mxu0 %v2147
    %2270 = vmatpush1.msra.mxu0 %v2146
    %2271 = vmatprep.subr.mxu0 %v2151
    %2272 = vmatpush1.msra.mxu0 %v2150
    %2273 = vmatprep.subr.mxu0 %v2155
    %2274 = vmatpush1.msra.mxu0 %v2154
    %2275 = vmatprep.subr.mxu0 %v2159
    %2276 = vmatpush1.msra.mxu0 %v2158
    %2277 = vmatprep.subr.mxu0 %v2163
    %2278 = vmatpush1.msra.mxu0 %v2162
    %2279 = vmatprep.subr.mxu0 %v2167
    %2280 = vmatpush1.msra.mxu0 %v2166
    %2281 = vmatprep.subr.mxu0 %v2171
    %2282 = vmatpush1.msra.mxu0 %v2170
    %2283 = vmatprep.subr.mxu0 %v2175
    %2284 = vmatpush1.msra.mxu0 %v2174
    %2285 = vmatprep.subr.mxu0 %v2179
    %2286 = vmatpush1.msra.mxu0 %v2178
    %2287 = vmatprep.subr.mxu0 %v2183
    %2288 = vmatpush1.msra.mxu0 %v2182
    %2289 = vmatprep.subr.mxu0 %v2187
    %2290 = vmatpush1.msra.mxu0 %v2186
    %2291 = vmatprep.subr.mxu0 0.0
    %2292 = vmatpush1.msra.mxu0 0.0
    %2293 = vmatprep.subr.mxu0 0.0
    %2294 = vmatpush1.msra.mxu0 0.0
    %2295 = vmatprep.subr.mxu0 0.0
    %2296 = vmatpush1.msra.mxu0 0.0
    %2297 = vmatprep.subr.mxu0 0.0
    %2298 = vmatpush1.msra.mxu0 0.0
    %2299 = vmatprep.subr.mxu0 0.0
    %2300 = vmatpush1.msra.mxu0 0.0
    %2301 = vmatprep.subr.mxu0 0.0
    %2302 = vmatpush1.msra.mxu0 0.0
    %2303 = vmatprep.subr.mxu0 0.0
    %2304 = vmatpush1.msra.mxu0 0.0
    %2305 = vmatprep.subr.mxu0 0.0
    %2306 = vmatpush1.msra.mxu0 0.0
    %2307 = vmatprep.subr.mxu0 0.0
    %2308 = vmatpush1.msra.mxu0 0.0
    %2309 = vmatprep.subr.mxu0 0.0
    %2310 = vmatpush1.msra.mxu0 0.0
    %2311 = vmatprep.subr.mxu0 0.0
    %2312 = vmatpush1.msra.mxu0 0.0
    %2313 = vmatprep.subr.mxu0 0.0
    %2314 = vmatpush1.msra.mxu0 0.0
    %2315 = vmatprep.subr.mxu0 0.0
    %2316 = vmatpush1.msra.mxu0 0.0
    %2317 = vmatprep.subr.mxu0 0.0
    %2318 = vmatpush1.msra.mxu0 0.0
    %2319 = vmatprep.subr.mxu0 0.0
    %2320 = vmatpush1.msra.mxu0 0.0
    %2321 = vmatprep.subr.mxu0 0.0
    %2322 = vmatpush1.msra.mxu0 0.0
    %2323 = vmatprep.mubr.f32.mxu0 0.0
    %2324 = vmatmul.mubr.f32.gmra.mrb[0].mxu0 %v2116
    %v2325 = vpop.f32.mrb[0].mxu0
    %v2326 = vadd.f32 0.0, %v2325
    %v2327 = vpop.f32.mrb[0].mxu0
    %v2328 = vadd.f32 0.0, %v2327
    %2329 = vdwg.mxu0
    %v2330 = vadd.f32 %v2120, %v2255
    %v2331 = vadd.f32 %v2121, %v2257
    %v2332 = vadd.f32 %v2122, %v2326
    %v2333 = vadd.f32 %v2123, %v2328
    %v2334 = vmul.f32 %v2330, 0.5
    %v2335 = vtanh.pop %v2334
    %v2336 = vmul.f32 %v2335, 0.5
    %v2337 = vadd.f32 %v2336, 0.5
    %v2338 = vmul.f32 %v2331, 0.5
    %v2339 = vtanh.pop %v2338
    %v2340 = vmul.f32 %v2339, 0.5
    %v2341 = vadd.f32 %v2340, 0.5
    %v2342 = vtanh.pop %v2332
    %v2343 = vmul.f32 %v2333, 0.5
    %v2344 = vtanh.pop %v2343
    %v2345 = vmul.f32 %v2344, 0.5
    %v2346 = vadd.f32 %v2345, 0.5
    %v2347 = vmul.f32 %v2341, %v2114
    %v2348 = vmul.f32 %v2337, %v2342
    %v2349 = vadd.f32 %v2347, %v2348
    %v2350 = vtanh.pop %v2349
    %v2351 = vmul.f32 %v2346, %v2350
    %s2352 = scalar_lea.vmem [#allocation6], 12
    %2353 = vst.msk [vmem:[%s2352] sm:$0x3] %vm942, %v2351
    %s2354 = scalar_lea.vmem [#allocation2], 224
    %v2355 = vld [vmem:[%s2354] sm:$0xff]
    %v2356 = vld [vmem:[%s2354 + $0x8] sm:$0xff]
    %v2357 = vld [vmem:[%s2354 + $0x10] sm:$0xff]
    %v2358 = vld [vmem:[%s2354 + $0x18] sm:$0xff]
    %v2359 = vld [vmem:[#allocation3] sm:$0xff]
    %v2360 = vld [vmem:[#allocation3 + $0x8] sm:$0xff]
    %v2361 = vld [vmem:[#allocation3 + $0x10] sm:$0xff]
    %v2362 = vld [vmem:[#allocation3 + $0x18] sm:$0xff]
    %v2363 = vld [vmem:[#allocation3 + $0x20] sm:$0xff]
    %v2364 = vld [vmem:[#allocation3 + $0x28] sm:$0xff]
    %v2365 = vld [vmem:[#allocation3 + $0x30] sm:$0xff]
    %v2366 = vld [vmem:[#allocation3 + $0x38] sm:$0xff]
    %v2367 = vld [vmem:[#allocation3 + $0x40] sm:$0xff]
    %v2368 = vld [vmem:[#allocation3 + $0x48] sm:$0xff]
    %v2369 = vld [vmem:[#allocation3 + $0x50] sm:$0xff]
    %v2370 = vld [vmem:[#allocation3 + $0x58] sm:$0xff]
    %v2371 = vld [vmem:[#allocation3 + $0x60] sm:$0xff]
    %v2372 = vld [vmem:[#allocation3 + $0x68] sm:$0xff]
    %v2373 = vld [vmem:[#allocation3 + $0x70] sm:$0xff]
    %v2374 = vld [vmem:[#allocation3 + $0x78] sm:$0xff]
    %v2375 = vld [vmem:[#allocation3 + $0x80] sm:$0xff]
    %v2376 = vld [vmem:[#allocation3 + $0x88] sm:$0xff]
    %v2377 = vld [vmem:[#allocation3 + $0x90] sm:$0xff]
    %v2378 = vld [vmem:[#allocation3 + $0x98] sm:$0xff]
    %v2379 = vld [vmem:[#allocation3 + $0xa0] sm:$0xff]
    %v2380 = vld [vmem:[#allocation3 + $0xa8] sm:$0xff]
    %v2381 = vld [vmem:[#allocation3 + $0xb0] sm:$0xff]
    %v2382 = vld [vmem:[#allocation3 + $0xb8] sm:$0xff]
    %v2383 = vld [vmem:[#allocation3 + $0xc0] sm:$0xff]
    %v2384 = vld [vmem:[#allocation3 + $0xc8] sm:$0xff]
    %v2385 = vld [vmem:[#allocation3 + $0xd0] sm:$0xff]
    %v2386 = vld [vmem:[#allocation3 + $0xd8] sm:$0xff]
    %v2387 = vld [vmem:[#allocation3 + $0xe0] sm:$0xff]
    %v2388 = vld [vmem:[#allocation3 + $0xe8] sm:$0xff]
    %v2389 = vld [vmem:[#allocation3 + $0xf0] sm:$0xff]
    %v2390 = vld [vmem:[#allocation3 + $0xf8] sm:$0xff]
    %v2391 = vld [vmem:[#allocation3 + $0x100] sm:$0xff]
    %v2392 = vld [vmem:[#allocation3 + $0x108] sm:$0xff]
    %v2393 = vld [vmem:[#allocation3 + $0x110] sm:$0xff]
    %v2394 = vld [vmem:[#allocation3 + $0x118] sm:$0xff]
    %v2395 = vld [vmem:[#allocation3 + $0x120] sm:$0xff]
    %v2396 = vld [vmem:[#allocation3 + $0x128] sm:$0xff]
    %v2397 = vld [vmem:[#allocation3 + $0x130] sm:$0xff]
    %v2398 = vld [vmem:[#allocation3 + $0x138] sm:$0xff]
    %v2399 = vld [vmem:[#allocation3 + $0x140] sm:$0xff]
    %v2400 = vld [vmem:[#allocation3 + $0x148] sm:$0xff]
    %v2401 = vld [vmem:[#allocation3 + $0x150] sm:$0xff]
    %v2402 = vld [vmem:[#allocation3 + $0x158] sm:$0xff]
    %v2403 = vld [vmem:[#allocation3 + $0x160] sm:$0xff]
    %v2404 = vld [vmem:[#allocation3 + $0x168] sm:$0xff]
    %v2405 = vld [vmem:[#allocation3 + $0x170] sm:$0xff]
    %v2406 = vld [vmem:[#allocation3 + $0x178] sm:$0xff]
    %v2407 = vld [vmem:[#allocation3 + $0x180] sm:$0xff]
    %v2408 = vld [vmem:[#allocation3 + $0x188] sm:$0xff]
    %v2409 = vld [vmem:[#allocation3 + $0x190] sm:$0xff]
    %v2410 = vld [vmem:[#allocation3 + $0x198] sm:$0xff]
    %v2411 = vld [vmem:[#allocation3 + $0x1a0] sm:$0xff]
    %v2412 = vld [vmem:[#allocation3 + $0x1a8] sm:$0xff]
    %v2413 = vld [vmem:[#allocation3 + $0x1b0] sm:$0xff]
    %v2414 = vld [vmem:[#allocation3 + $0x1b8] sm:$0xff]
    %v2415 = vld [vmem:[#allocation3 + $0x1c0] sm:$0xff]
    %v2416 = vld [vmem:[#allocation3 + $0x1c8] sm:$0xff]
    %v2417 = vld [vmem:[#allocation3 + $0x1d0] sm:$0xff]
    %v2418 = vld [vmem:[#allocation3 + $0x1d8] sm:$0xff]
    %v2419 = vld [vmem:[#allocation3 + $0x1e0] sm:$0xff]
    %v2420 = vld [vmem:[#allocation3 + $0x1e8] sm:$0xff]
    %v2421 = vld [vmem:[#allocation3 + $0x1f0] sm:$0xff]
    %v2422 = vld [vmem:[#allocation3 + $0x1f8] sm:$0xff]
    %2423 = vmatprep.subr.mxu0 %v2360
    %2424 = vmatpush1.msra.mxu0 %v2359
    %2425 = vmatprep.subr.mxu0 %v2364
    %2426 = vmatpush1.msra.mxu0 %v2363
    %2427 = vmatprep.subr.mxu0 %v2368
    %2428 = vmatpush1.msra.mxu0 %v2367
    %2429 = vmatprep.subr.mxu0 %v2372
    %2430 = vmatpush1.msra.mxu0 %v2371
    %2431 = vmatprep.subr.mxu0 %v2376
    %2432 = vmatpush1.msra.mxu0 %v2375
    %2433 = vmatprep.subr.mxu0 %v2380
    %2434 = vmatpush1.msra.mxu0 %v2379
    %2435 = vmatprep.subr.mxu0 %v2384
    %2436 = vmatpush1.msra.mxu0 %v2383
    %2437 = vmatprep.subr.mxu0 %v2388
    %2438 = vmatpush1.msra.mxu0 %v2387
    %2439 = vmatprep.subr.mxu0 %v2392
    %2440 = vmatpush1.msra.mxu0 %v2391
    %2441 = vmatprep.subr.mxu0 %v2396
    %2442 = vmatpush1.msra.mxu0 %v2395
    %2443 = vmatprep.subr.mxu0 %v2400
    %2444 = vmatpush1.msra.mxu0 %v2399
    %2445 = vmatprep.subr.mxu0 %v2404
    %2446 = vmatpush1.msra.mxu0 %v2403
    %2447 = vmatprep.subr.mxu0 %v2408
    %2448 = vmatpush1.msra.mxu0 %v2407
    %2449 = vmatprep.subr.mxu0 %v2412
    %2450 = vmatpush1.msra.mxu0 %v2411
    %2451 = vmatprep.subr.mxu0 %v2416
    %2452 = vmatpush1.msra.mxu0 %v2415
    %2453 = vmatprep.subr.mxu0 %v2420
    %2454 = vmatpush1.msra.mxu0 %v2419
    %2455 = vmatprep.subr.mxu0 0.0
    %2456 = vmatpush1.msra.mxu0 0.0
    %2457 = vmatprep.subr.mxu0 0.0
    %2458 = vmatpush1.msra.mxu0 0.0
    %2459 = vmatprep.subr.mxu0 0.0
    %2460 = vmatpush1.msra.mxu0 0.0
    %2461 = vmatprep.subr.mxu0 0.0
    %2462 = vmatpush1.msra.mxu0 0.0
    %2463 = vmatprep.subr.mxu0 0.0
    %2464 = vmatpush1.msra.mxu0 0.0
    %2465 = vmatprep.subr.mxu0 0.0
    %2466 = vmatpush1.msra.mxu0 0.0
    %2467 = vmatprep.subr.mxu0 0.0
    %2468 = vmatpush1.msra.mxu0 0.0
    %2469 = vmatprep.subr.mxu0 0.0
    %2470 = vmatpush1.msra.mxu0 0.0
    %2471 = vmatprep.subr.mxu0 0.0
    %2472 = vmatpush1.msra.mxu0 0.0
    %2473 = vmatprep.subr.mxu0 0.0
    %2474 = vmatpush1.msra.mxu0 0.0
    %2475 = vmatprep.subr.mxu0 0.0
    %2476 = vmatpush1.msra.mxu0 0.0
    %2477 = vmatprep.subr.mxu0 0.0
    %2478 = vmatpush1.msra.mxu0 0.0
    %2479 = vmatprep.subr.mxu0 0.0
    %2480 = vmatpush1.msra.mxu0 0.0
    %2481 = vmatprep.subr.mxu0 0.0
    %2482 = vmatpush1.msra.mxu0 0.0
    %2483 = vmatprep.subr.mxu0 0.0
    %2484 = vmatpush1.msra.mxu0 0.0
    %2485 = vmatprep.subr.mxu0 0.0
    %2486 = vmatpush1.msra.mxu0 0.0
    %2487 = vmatprep.mubr.f32.mxu0 0.0
    %2488 = vmatmul.mubr.f32.gmra.mrb[0].mxu0 %v2351
    %v2489 = vpop.f32.mrb[0].mxu0
    %v2490 = vadd.f32 0.0, %v2489
    %v2491 = vpop.f32.mrb[0].mxu0
    %v2492 = vadd.f32 0.0, %v2491
    %2493 = vdwg.mxu0
    %2494 = vmatprep.subr.mxu0 %v2362
    %2495 = vmatpush1.msra.mxu0 %v2361
    %2496 = vmatprep.subr.mxu0 %v2366
    %2497 = vmatpush1.msra.mxu0 %v2365
    %2498 = vmatprep.subr.mxu0 %v2370
    %2499 = vmatpush1.msra.mxu0 %v2369
    %2500 = vmatprep.subr.mxu0 %v2374
    %2501 = vmatpush1.msra.mxu0 %v2373
    %2502 = vmatprep.subr.mxu0 %v2378
    %2503 = vmatpush1.msra.mxu0 %v2377
    %2504 = vmatprep.subr.mxu0 %v2382
    %2505 = vmatpush1.msra.mxu0 %v2381
    %2506 = vmatprep.subr.mxu0 %v2386
    %2507 = vmatpush1.msra.mxu0 %v2385
    %2508 = vmatprep.subr.mxu0 %v2390
    %2509 = vmatpush1.msra.mxu0 %v2389
    %2510 = vmatprep.subr.mxu0 %v2394
    %2511 = vmatpush1.msra.mxu0 %v2393
    %2512 = vmatprep.subr.mxu0 %v2398
    %2513 = vmatpush1.msra.mxu0 %v2397
    %2514 = vmatprep.subr.mxu0 %v2402
    %2515 = vmatpush1.msra.mxu0 %v2401
    %2516 = vmatprep.subr.mxu0 %v2406
    %2517 = vmatpush1.msra.mxu0 %v2405
    %2518 = vmatprep.subr.mxu0 %v2410
    %2519 = vmatpush1.msra.mxu0 %v2409
    %2520 = vmatprep.subr.mxu0 %v2414
    %2521 = vmatpush1.msra.mxu0 %v2413
    %2522 = vmatprep.subr.mxu0 %v2418
    %2523 = vmatpush1.msra.mxu0 %v2417
    %2524 = vmatprep.subr.mxu0 %v2422
    %2525 = vmatpush1.msra.mxu0 %v2421
    %2526 = vmatprep.subr.mxu0 0.0
    %2527 = vmatpush1.msra.mxu0 0.0
    %2528 = vmatprep.subr.mxu0 0.0
    %2529 = vmatpush1.msra.mxu0 0.0
    %2530 = vmatprep.subr.mxu0 0.0
    %2531 = vmatpush1.msra.mxu0 0.0
    %2532 = vmatprep.subr.mxu0 0.0
    %2533 = vmatpush1.msra.mxu0 0.0
    %2534 = vmatprep.subr.mxu0 0.0
    %2535 = vmatpush1.msra.mxu0 0.0
    %2536 = vmatprep.subr.mxu0 0.0
    %2537 = vmatpush1.msra.mxu0 0.0
    %2538 = vmatprep.subr.mxu0 0.0
    %2539 = vmatpush1.msra.mxu0 0.0
    %2540 = vmatprep.subr.mxu0 0.0
    %2541 = vmatpush1.msra.mxu0 0.0
    %2542 = vmatprep.subr.mxu0 0.0
    %2543 = vmatpush1.msra.mxu0 0.0
    %2544 = vmatprep.subr.mxu0 0.0
    %2545 = vmatpush1.msra.mxu0 0.0
    %2546 = vmatprep.subr.mxu0 0.0
    %2547 = vmatpush1.msra.mxu0 0.0
    %2548 = vmatprep.subr.mxu0 0.0
    %2549 = vmatpush1.msra.mxu0 0.0
    %2550 = vmatprep.subr.mxu0 0.0
    %2551 = vmatpush1.msra.mxu0 0.0
    %2552 = vmatprep.subr.mxu0 0.0
    %2553 = vmatpush1.msra.mxu0 0.0
    %2554 = vmatprep.subr.mxu0 0.0
    %2555 = vmatpush1.msra.mxu0 0.0
    %2556 = vmatprep.subr.mxu0 0.0
    %2557 = vmatpush1.msra.mxu0 0.0
    %2558 = vmatprep.mubr.f32.mxu0 0.0
    %2559 = vmatmul.mubr.f32.gmra.mrb[0].mxu0 %v2351
    %v2560 = vpop.f32.mrb[0].mxu0
    %v2561 = vadd.f32 0.0, %v2560
    %v2562 = vpop.f32.mrb[0].mxu0
    %v2563 = vadd.f32 0.0, %v2562
    %2564 = vdwg.mxu0
    %v2565 = vadd.f32 %v2355, %v2490
    %v2566 = vadd.f32 %v2356, %v2492
    %v2567 = vadd.f32 %v2357, %v2561
    %v2568 = vadd.f32 %v2358, %v2563
    %v2569 = vmul.f32 %v2565, 0.5
    %v2570 = vtanh.pop %v2569
    %v2571 = vmul.f32 %v2570, 0.5
    %v2572 = vadd.f32 %v2571, 0.5
    %v2573 = vmul.f32 %v2566, 0.5
    %v2574 = vtanh.pop %v2573
    %v2575 = vmul.f32 %v2574, 0.5
    %v2576 = vadd.f32 %v2575, 0.5
    %v2577 = vtanh.pop %v2567
    %v2578 = vmul.f32 %v2568, 0.5
    %v2579 = vtanh.pop %v2578
    %v2580 = vmul.f32 %v2579, 0.5
    %v2581 = vadd.f32 %v2580, 0.5
    %v2582 = vmul.f32 %v2576, %v2349
    %v2583 = vmul.f32 %v2572, %v2577
    %v2584 = vadd.f32 %v2582, %v2583
    %v2585 = vtanh.pop %v2584
    %v2586 = vmul.f32 %v2581, %v2585
    %s2587 = scalar_lea.vmem [#allocation6], 14
    %2588 = vst.msk [vmem:[%s2587] sm:$0x3] %vm942, %v2586
    %2589 = vst.msk [vmem:[#allocation7] sm:$0x3] %vm942, %v2586
    %2590 = vst.msk [vmem:[#allocation9] sm:$0x3] %vm942, %v2584
    // Predicated region
    $region34: #{_encoder_lstm.1} parent=1 // pred_check
      _
    $region35: #{_encoder_lstm.1} parent=1 // pred_check_branch
      %2592 = sbr.rel (0) target = $region37
    $region36: #{_encoder_lstm.1} parent=1 // pred_region
      %s2594 = ssub.s32 256, 256
      %2595 = vsyncadd [#allocation5], %s2594
      %s2596 = sshll.u32 [#allocation6], 4
      %s2597 = int_to_ptr.vmem [resolvable:$true] %s2596
      %2602 = dma.vmem_to_hbm [thread:$0]  %s2597, 256, %s7, [#allocation5], 32, 32, 2
    $region37: #{_encoder_lstm.1} parent=1 // pred_fallthru
      _
    // Predicated region
    $region38: #{_encoder_lstm.1} parent=1 // pred_check
      _
    $region39: #{_encoder_lstm.1} parent=1 // pred_check_branch
      %2604 = sbr.rel (0) target = $region41
    $region40: #{_encoder_lstm.1} parent=1 // pred_region
      %s2606 = ssub.s32 32, 32
      %2607 = vsyncadd [#allocation8], %s2606
      %s2609 = sshll.u32 [#allocation7], 4
      %s2610 = int_to_ptr.vmem [resolvable:$true] %s2609
      %2612 = dma.vmem_to_hbm [thread:$0]  %s2610, 32, %s8, [#allocation8]
    $region41: #{_encoder_lstm.1} parent=1 // pred_fallthru
      _
    // Predicated region
    $region42: #{_encoder_lstm.1} parent=1 // pred_check
      _
    $region43: #{_encoder_lstm.1} parent=1 // pred_check_branch
      %2614 = sbr.rel (0) target = $region45
    $region44: #{_encoder_lstm.1} parent=1 // pred_region
      %s2616 = ssub.s32 32, 32
      %2617 = vsyncadd [#allocation8], %s2616
      %s2619 = sshll.u32 [#allocation9], 4
      %s2620 = int_to_ptr.vmem [resolvable:$true] %s2619
      %2622 = dma.vmem_to_hbm [thread:$0]  %s2620, 32, %s9, [#allocation8]
    $region45: #{_encoder_lstm.1} parent=1 // pred_fallthru
      _
    // Predicated region
    $region46: #{_encoder_lstm.1} parent=1 // pred_check
      _
    $region47: #{_encoder_lstm.1} parent=1 // pred_check_branch
      %2624 = sbr.rel (0) target = $region49
    $region48: #{_encoder_lstm.1} parent=1 // pred_region
      %2625 = dma.done [#allocation5], 256
    $region49: #{_encoder_lstm.1} parent=1 // pred_fallthru
      _
    // Predicated region
    $region50: #{_encoder_lstm.1} parent=1 // pred_check
      _
    $region51: #{_encoder_lstm.1} parent=1 // pred_check_branch
      %2627 = sbr.rel (0) target = $region53
    $region52: #{_encoder_lstm.1} parent=1 // pred_region
      %2628 = dma.done [#allocation8], 32
    $region53: #{_encoder_lstm.1} parent=1 // pred_fallthru
      _
    // Predicated region
    $region54: #{_encoder_lstm.1} parent=1 // pred_check
      _
    $region55: #{_encoder_lstm.1} parent=1 // pred_check_branch
      %2630 = sbr.rel (0) target = $region57
    $region56: #{_encoder_lstm.1} parent=1 // pred_region
      %2631 = dma.done [#allocation8], 32
    $region57: #{_encoder_lstm.1} parent=1 // pred_fallthru
      _
    %2632 = vsyncpa [#allocation4], 1
    %2633 = vsyncpa [#allocation5], 1
    %2634 = vsyncpa [#allocation8], 1

</llo_original>
